<compile_context>
chip_gen: v7x
topology: tpu7x:2x2x1
jax: 0.10.0
libtpu: 0.0.40
codegen_flags: <defaults>
</compile_context>

<pallas_src>
import jax
import jax.numpy as jnp
from jax.experimental import pallas as pl
from jax.experimental.pallas import tpu as pltpu


# ---------------- Fused Pallas kernel ----------------

def unet_fused_kernel(xe_ref, w1_ref, w2_ref, pk_ref, o_ref, xa_ref, up_ref, ybuf_ref):
    """LeakyReLU -> Conv(4,s2,p3,d2) -> ReLU -> ConvT(4,s2,p1) -> BatchNorm, lane-dense out."""
    C = w1_ref.shape[1]                  # w1_ref: (16*C, C)
    O = w2_ref.shape[2]                  # w2_ref: (4, 4*C, O)
    Hd = up_ref.shape[0] - 2
    Wd = up_ref.shape[1] - 2
    P = Hd * Wd
    f32 = jnp.float32
    bf16 = jnp.bfloat16

    # ---- downrelu: LeakyReLU(0.2) once, on the un-expanded (Hd+3, Wd+3, C) bf16 tile ----
    xv = xe_ref[...]
    xa_ref[...] = jnp.where(xv >= 0, xv, 0.2 * xv)

    # ---- downconv: Conv2d(C, C, k=4, s=2, p=3, dilation=2).
    # All 16 taps of the stride-2 / dilation-2 kernel live on the even-parity grid of the
    # padded input (= xe). They are unit-stride (Hd, Wd, C) windows of the VMEM tile,
    # lane-concatenated into one (P, 16*C) im2col tile and fed to the MXU in a SINGLE dot
    # with K = 16*C (f32 accumulation). ----
    taps = []
    for kh in range(4):
        for kw in range(4):
            taps.append(xa_ref[kh:kh + Hd, kw:kw + Wd, :].reshape(P, C))
    xcat = jnp.concatenate(taps, axis=1)                         # (P, 16*C) bf16
    b1 = pk_ref[0:1, 0:C]
    d = jnp.dot(xcat, w1_ref[...], preferred_element_type=f32) + b1
    u = jnp.maximum(d, 0.0)                                      # uprelu (ReLU), (P, C) f32

    # ---- stage u (+ 1-pixel zero halo) for the 4-phase ConvTranspose; zero ONLY the halo ----
    zrow = jnp.zeros((1, Wd + 2, C), bf16)
    up_ref[0:1, :, :] = zrow
    up_ref[Hd + 1:Hd + 2, :, :] = zrow
    zcol = jnp.zeros((Hd, 1, C), bf16)
    up_ref[1:1 + Hd, 0:1, :] = zcol
    up_ref[1:1 + Hd, Wd + 1:Wd + 2, :] = zcol
    up_ref[1:1 + Hd, 1:1 + Wd, :] = u.reshape(Hd, Wd, C).astype(bf16)

    # ---- upconv: ConvTranspose2d(C, O, k=4, s=2, p=1) via 4-phase (sub-pixel) decomposition.
    # Per output parity phase (r, s): one K=4*C MXU dot of the 4 lane-concatenated 2x2 taps
    # against the pre-packed phase weight. Pre-BN results are staged to a VMEM scratch so
    # only the (1, O) running sum stays live. ----
    b2 = pk_ref[1:2, 0:O]
    s1 = jnp.zeros((1, O), f32)
    for r in range(2):
        for s in range(2):
            ph = 2 * r + s
            ptaps = []
            for dh in range(2):
                for dw in range(2):
                    ptaps.append(
                        up_ref[r + dh:r + dh + Hd, s + dw:s + dw + Wd, :].reshape(P, C))
            ucat = jnp.concatenate(ptaps, axis=1)                # (P, 4*C) bf16
            y = jnp.dot(ucat, w2_ref[ph], preferred_element_type=f32) + b2
            ybuf_ref[ph * P:(ph + 1) * P, :] = y                 # phase-major rows
            s1 = s1 + jnp.sum(y, axis=0, keepdims=True)

    # ---- upnorm: BatchNorm2d, training mode (biased batch stats over all 4*P positions).
    # Centered two-pass variance (numerically stable, no E[x^2]-E[x]^2 cancellation). ----
    inv_n = 1.0 / float(4 * P)
    mean = s1 * inv_n
    yc = ybuf_ref[...] - mean                                    # (4*P, O) f32
    var = jnp.sum(yc * yc, axis=0, keepdims=True) * inv_n
    scale = pk_ref[2:3, 0:O] * jax.lax.rsqrt(var + 1e-5)         # gamma / sqrt(var + eps)
    bn = yc * scale + pk_ref[3:4, 0:O]                           # (4*P, O)

    # ---- lane-dense output: channels on sublanes, phase-major flattened spatial on lanes.
    # Single small un-padded transpose (no pad-to-128, no concat, no masked narrow stores). ----
    o_ref[...] = jnp.transpose(bn)                               # (O, 4*P)


# ---------------- Parameter init (deterministic, synthetic) ----------------

def init_params(key, input_nc, outer_nc):
    C, O = input_nc, outer_nc
    ks = jax.random.split(key, 6)
    fan1 = C * 4 * 4
    fan2 = C * 4 * 4
    w1 = jax.random.uniform(ks[0], (C, C, 4, 4), jnp.float32, -1.0, 1.0) / jnp.sqrt(fan1)
    b1 = jax.random.uniform(ks[1], (C,), jnp.float32, -1.0, 1.0) / jnp.sqrt(fan1)
    w2 = jax.random.uniform(ks[2], (C, O, 4, 4), jnp.float32, -1.0, 1.0) / jnp.sqrt(fan2)
    b2 = jax.random.uniform(ks[3], (O,), jnp.float32, -1.0, 1.0) / jnp.sqrt(fan2)
    gamma = 1.0 + 0.1 * jax.random.normal(ks[4], (O,), jnp.float32)
    beta = 0.1 * jax.random.normal(ks[5], (O,), jnp.float32)
    return dict(w1=w1, b1=b1, w2=w2, b2=b2, gamma=gamma, beta=beta)


# ---------------- Forward (thin glue + one pallas_call) ----------------

def unet_block_forward(x, params):
    # x: (1, C, H, W) float32, NCHW (PyTorch convention).
    N, C, H, W = x.shape
    assert N == 1, "skip-concat path of this module requires batch == 1"
    if H % 2 != 0 or W % 2 != 0:
        # TODO(synk): F.upsample(..., mode='bilinear') resize branch (odd H/W) not implemented
        raise NotImplementedError("bilinear resize branch (odd H/W) not implemented")
    O = int(params["gamma"].shape[0])
    C2 = C // 2
    Hd, Wd = H // 2, W // 2

    # The stride-2 / dilation-2 down conv only ever reads even-parity rows/cols of the
    # zero-padded input, so only that (Hd+3, Wd+3, C) sub-grid is shipped to the kernel,
    # in bf16 (halves the HBM bytes of the largest operand; MXU taps are bf16 anyway).
    xhwc = jnp.transpose(x[0], (1, 2, 0))                        # (H, W, C)
    xe = jnp.pad(xhwc, ((3, 3), (3, 3), (0, 0)))[::2, ::2, :].astype(jnp.bfloat16)

    # Down-conv weight packed as one (16*C, C) matrix: row (kh*4+kw)*C + cin -> w1[cout,cin,kh,kw],
    # matching the in-kernel im2col column order (one K=16*C dot).
    w1p = jnp.transpose(params["w1"], (2, 3, 1, 0)).reshape(16 * C, C).astype(jnp.bfloat16)

    # Up-conv weight packed per output parity phase as (4, 4*C, O): for phase (r, s) the
    # 2x2 sub-kernel taps (dh, dw) use kernel indices kh=(3-r)-2dh, kw=(3-s)-2dw, concatenated
    # along K in (dh, dw) order -- matching the in-kernel tap concatenation (one K=4*C dot/phase).
    w2t = jnp.transpose(params["w2"], (2, 3, 0, 1))              # (4, 4, Cin, O)
    blocks = []
    for r in range(2):
        for s in range(2):
            tb = [w2t[(3 - r) - 2 * dh, (3 - s) - 2 * dw]
                  for dh in range(2) for dw in range(2)]
            blocks.append(jnp.concatenate(tb, axis=0))           # (4*C, O)
    w2p = jnp.stack(blocks, axis=0).astype(jnp.bfloat16)         # (4, 4*C, O)

    # b1 / b2 / gamma / beta packed into one small f32 VMEM operand (one DMA instead of four).
    Cm = max(C, O)
    pk = jnp.zeros((4, Cm), jnp.float32)
    pk = pk.at[0, :C].set(params["b1"]).at[1, :O].set(params["b2"])
    pk = pk.at[2, :O].set(params["gamma"]).at[3, :O].set(params["beta"])

    vmem = pl.BlockSpec(memory_space=pltpu.MemorySpace.VMEM)
    out_pm = pl.pallas_call(
        unet_fused_kernel,
        out_shape=jax.ShapeDtypeStruct((O, 4 * Hd * Wd), jnp.float32),
        in_specs=[vmem] * 4,
        out_specs=vmem,
        scratch_shapes=[pltpu.VMEM((Hd + 3, Wd + 3, C), jnp.bfloat16),   # LeakyReLU'd input tile
                        pltpu.VMEM((Hd + 2, Wd + 2, C), jnp.bfloat16),   # u + 1-pixel zero halo
                        pltpu.VMEM((4 * Hd * Wd, O), jnp.float32)],      # pre-BN phase outputs
    )(xe, w1p, w2p, pk)
    # TODO(synk): for realistic UNet sizes add a spatial row-block grid (conv+stats pass with
    # pl.when init/finalize, BN-affine apply pass), dimension_semantics=("parallel",) so v7x can
    # use both TensorCores, K/N tiles of 256 on v6e/v7x vs 128 on v5e, and an explicit
    # vmem_limit_bytes budget (v7x: 64 MiB physical). A single untiled call suffices here.

    # Undo the phase-major lane ordering: (ch, (r, s, a, b)) -> (ch, 2a+r, 2b+s) == CHW,
    # then append the skip channels (already NCHW -> no kernel traffic for a pure copy).
    out = out_pm.reshape(O, 2, 2, Hd, Wd)
    out = jnp.transpose(out, (0, 3, 1, 4, 2)).reshape(O, H, W)
    out = jnp.concatenate([out, x[0, :C2]], axis=0)              # cat([x_latter, x[0,:C//2]], 1)
    return out[None]


# ---------------- Pure-JAX reference (for self-check) ----------------

def reference(x, params):
    C = x.shape[1]
    y = jnp.where(x >= 0, x, 0.2 * x)
    d = jax.lax.conv_general_dilated(
        y, params["w1"], window_strides=(2, 2), padding=((3, 3), (3, 3)),
        rhs_dilation=(2, 2), dimension_numbers=("NCHW", "OIHW", "NCHW"),
    ) + params["b1"][None, :, None, None]
    u = jnp.maximum(d, 0.0)
    t = jax.lax.conv_general_dilated(
        u, params["w2"][:, :, ::-1, ::-1], window_strides=(1, 1),
        padding=((2, 2), (2, 2)), lhs_dilation=(2, 2),
        dimension_numbers=("NCHW", "IOHW", "NCHW"),
    ) + params["b2"][None, :, None, None]
    mean = t.mean(axis=(0, 2, 3), keepdims=True)
    var = ((t - mean) ** 2).mean(axis=(0, 2, 3), keepdims=True)
    bn = (params["gamma"][None, :, None, None] * (t - mean) / jnp.sqrt(var + 1e-5)
          + params["beta"][None, :, None, None])
    skip = x[0, :C // 2][None]
    return jnp.concatenate([bn, skip], axis=1)


if __name__ == "__main__":
    key = jax.random.PRNGKey(0)
    kx, kp = jax.random.split(key)

    # inner_nc == input_nc == 8 (module shape constraint), outer_nc == 8, batch == 1
    B, C, H, W = 1, 8, 16, 16
    outer_nc = 8

    x = jax.random.normal(kx, (B, C, H, W), jnp.float32)
    params = init_params(kp, C, outer_nc)

    fwd = jax.jit(unet_block_forward)
    out = fwd(x, params)
    jax.block_until_ready(out)

    ref = reference(x, params)
    assert out.shape == ref.shape == (1, outer_nc + C // 2, H, W), (out.shape, ref.shape)
    max_err = float(jnp.max(jnp.abs(out - ref)))
    # Error budget: bf16 quantization of inputs/weights through two conv layers, amplified by
    # the BN 1/std(y) rescaling (~10x here). Centered variance keeps the BN stats themselves
    # accurate; f32 accumulation throughout.
    assert max_err < 5e-2, f"max abs err {max_err}"

    print("KERNEL_OK")
</pallas_src>

<mosaic_0001>
module attributes {stable_mosaic.version = 11 : i64} {
  func.func @unet_fused_kernel(%arg0: memref<11x11x8xbf16, #tpu.memory_space<vmem>>, %arg1: memref<128x8xbf16, #tpu.memory_space<vmem>>, %arg2: memref<4x32x8xbf16, #tpu.memory_space<vmem>>, %arg3: memref<4x8xf32, #tpu.memory_space<vmem>>, %arg4: memref<8x256xf32, #tpu.memory_space<vmem>>, %arg5: memref<11x11x8xbf16, #tpu.memory_space<vmem>>, %arg6: memref<10x10x8xbf16, #tpu.memory_space<vmem>>, %arg7: memref<256x8xf32, #tpu.memory_space<vmem>>) attributes {dimension_semantics = [], scalar_prefetch = 0 : i64, scratch_operands = 3 : i64, tpu.core_type = #tpu.core_type<tc>} {
    %c0 = arith.constant 0 : index
    %c0_0 = arith.constant 0 : index
    %c0_1 = arith.constant 0 : index
    %0 = vector.load %arg0[%c0, %c0_0, %c0_1] : memref<11x11x8xbf16, #tpu.memory_space<vmem>>, vector<11x11x8xbf16>
    %cst = arith.constant 0.000000e+00 : bf16
    %1 = vector.broadcast %cst : bf16 to vector<11x11x8xbf16>
    %2 = arith.cmpf oge, %0, %1 : vector<11x11x8xbf16>
    %cst_2 = arith.constant 2.001950e-01 : bf16
    %3 = vector.broadcast %cst_2 : bf16 to vector<11x11x8xbf16>
    %4 = arith.mulf %3, %0 : vector<11x11x8xbf16>
    %5 = arith.select %2, %0, %4 : vector<11x11x8xi1>, vector<11x11x8xbf16>
    %c0_3 = arith.constant 0 : index
    %c0_4 = arith.constant 0 : index
    %c0_5 = arith.constant 0 : index
    %6 = vector.load %arg5[%c0_3, %c0_4, %c0_5] : memref<11x11x8xbf16, #tpu.memory_space<vmem>>, vector<11x11x8xbf16>
    tpu.vector_store %arg5[%c0_3, %c0_4, %c0_5], %5 {strides = array<i32>} : memref<11x11x8xbf16, #tpu.memory_space<vmem>>, vector<11x11x8xbf16>,
    %c0_6 = arith.constant 0 : index
    %c0_7 = arith.constant 0 : index
    %c0_8 = arith.constant 0 : index
    %7 = vector.load %arg5[%c0_6, %c0_7, %c0_8] : memref<11x11x8xbf16, #tpu.memory_space<vmem>>, vector<8x8x8xbf16>
    %8 = vector.shape_cast %7 : vector<8x8x8xbf16> to vector<64x8xbf16>
    %c0_9 = arith.constant 0 : index
    %c1 = arith.constant 1 : index
    %c0_10 = arith.constant 0 : index
    %9 = vector.load %arg5[%c0_9, %c1, %c0_10] : memref<11x11x8xbf16, #tpu.memory_space<vmem>>, vector<8x8x8xbf16>
    %10 = vector.shape_cast %9 : vector<8x8x8xbf16> to vector<64x8xbf16>
    %c0_11 = arith.constant 0 : index
    %c2 = arith.constant 2 : index
    %c0_12 = arith.constant 0 : index
    %11 = vector.load %arg5[%c0_11, %c2, %c0_12] : memref<11x11x8xbf16, #tpu.memory_space<vmem>>, vector<8x8x8xbf16>
    %12 = vector.shape_cast %11 : vector<8x8x8xbf16> to vector<64x8xbf16>
    %c0_13 = arith.constant 0 : index
    %c3 = arith.constant 3 : index
    %c0_14 = arith.constant 0 : index
    %13 = vector.load %arg5[%c0_13, %c3, %c0_14] : memref<11x11x8xbf16, #tpu.memory_space<vmem>>, vector<8x8x8xbf16>
    %14 = vector.shape_cast %13 : vector<8x8x8xbf16> to vector<64x8xbf16>
    %c1_15 = arith.constant 1 : index
    %c0_16 = arith.constant 0 : index
    %c0_17 = arith.constant 0 : index
    %15 = vector.load %arg5[%c1_15, %c0_16, %c0_17] : memref<11x11x8xbf16, #tpu.memory_space<vmem>>, vector<8x8x8xbf16>
    %16 = vector.shape_cast %15 : vector<8x8x8xbf16> to vector<64x8xbf16>
    %c1_18 = arith.constant 1 : index
    %c1_19 = arith.constant 1 : index
    %c0_20 = arith.constant 0 : index
    %17 = vector.load %arg5[%c1_18, %c1_19, %c0_20] : memref<11x11x8xbf16, #tpu.memory_space<vmem>>, vector<8x8x8xbf16>
    %18 = vector.shape_cast %17 : vector<8x8x8xbf16> to vector<64x8xbf16>
    %c1_21 = arith.constant 1 : index
    %c2_22 = arith.constant 2 : index
    %c0_23 = arith.constant 0 : index
    %19 = vector.load %arg5[%c1_21, %c2_22, %c0_23] : memref<11x11x8xbf16, #tpu.memory_space<vmem>>, vector<8x8x8xbf16>
    %20 = vector.shape_cast %19 : vector<8x8x8xbf16> to vector<64x8xbf16>
    %c1_24 = arith.constant 1 : index
    %c3_25 = arith.constant 3 : index
    %c0_26 = arith.constant 0 : index
    %21 = vector.load %arg5[%c1_24, %c3_25, %c0_26] : memref<11x11x8xbf16, #tpu.memory_space<vmem>>, vector<8x8x8xbf16>
    %22 = vector.shape_cast %21 : vector<8x8x8xbf16> to vector<64x8xbf16>
    %c2_27 = arith.constant 2 : index
    %c0_28 = arith.constant 0 : index
    %c0_29 = arith.constant 0 : index
    %23 = vector.load %arg5[%c2_27, %c0_28, %c0_29] : memref<11x11x8xbf16, #tpu.memory_space<vmem>>, vector<8x8x8xbf16>
    %24 = vector.shape_cast %23 : vector<8x8x8xbf16> to vector<64x8xbf16>
    %c2_30 = arith.constant 2 : index
    %c1_31 = arith.constant 1 : index
    %c0_32 = arith.constant 0 : index
    %25 = vector.load %arg5[%c2_30, %c1_31, %c0_32] : memref<11x11x8xbf16, #tpu.memory_space<vmem>>, vector<8x8x8xbf16>
    %26 = vector.shape_cast %25 : vector<8x8x8xbf16> to vector<64x8xbf16>
    %c2_33 = arith.constant 2 : index
    %c2_34 = arith.constant 2 : index
    %c0_35 = arith.constant 0 : index
    %27 = vector.load %arg5[%c2_33, %c2_34, %c0_35] : memref<11x11x8xbf16, #tpu.memory_space<vmem>>, vector<8x8x8xbf16>
    %28 = vector.shape_cast %27 : vector<8x8x8xbf16> to vector<64x8xbf16>
    %c2_36 = arith.constant 2 : index
    %c3_37 = arith.constant 3 : index
    %c0_38 = arith.constant 0 : index
    %29 = vector.load %arg5[%c2_36, %c3_37, %c0_38] : memref<11x11x8xbf16, #tpu.memory_space<vmem>>, vector<8x8x8xbf16>
    %30 = vector.shape_cast %29 : vector<8x8x8xbf16> to vector<64x8xbf16>
    %c3_39 = arith.constant 3 : index
    %c0_40 = arith.constant 0 : index
    %c0_41 = arith.constant 0 : index
    %31 = vector.load %arg5[%c3_39, %c0_40, %c0_41] : memref<11x11x8xbf16, #tpu.memory_space<vmem>>, vector<8x8x8xbf16>
    %32 = vector.shape_cast %31 : vector<8x8x8xbf16> to vector<64x8xbf16>
    %c3_42 = arith.constant 3 : index
    %c1_43 = arith.constant 1 : index
    %c0_44 = arith.constant 0 : index
    %33 = vector.load %arg5[%c3_42, %c1_43, %c0_44] : memref<11x11x8xbf16, #tpu.memory_space<vmem>>, vector<8x8x8xbf16>
    %34 = vector.shape_cast %33 : vector<8x8x8xbf16> to vector<64x8xbf16>
    %c3_45 = arith.constant 3 : index
    %c2_46 = arith.constant 2 : index
    %c0_47 = arith.constant 0 : index
    %35 = vector.load %arg5[%c3_45, %c2_46, %c0_47] : memref<11x11x8xbf16, #tpu.memory_space<vmem>>, vector<8x8x8xbf16>
    %36 = vector.shape_cast %35 : vector<8x8x8xbf16> to vector<64x8xbf16>
    %c3_48 = arith.constant 3 : index
    %c3_49 = arith.constant 3 : index
    %c0_50 = arith.constant 0 : index
    %37 = vector.load %arg5[%c3_48, %c3_49, %c0_50] : memref<11x11x8xbf16, #tpu.memory_space<vmem>>, vector<8x8x8xbf16>
    %38 = vector.shape_cast %37 : vector<8x8x8xbf16> to vector<64x8xbf16>
    %39 = tpu.concatenate %8, %10, %12, %14, %16, %18, %20, %22, %24, %26, %28, %30, %32, %34, %36, %38 in 1 : vector<64x8xbf16>, vector<64x8xbf16>, vector<64x8xbf16>, vector<64x8xbf16>, vector<64x8xbf16>, vector<64x8xbf16>, vector<64x8xbf16>, vector<64x8xbf16>, vector<64x8xbf16>, vector<64x8xbf16>, vector<64x8xbf16>, vector<64x8xbf16>, vector<64x8xbf16>, vector<64x8xbf16>, vector<64x8xbf16>, vector<64x8xbf16> -> vector<64x128xbf16>
    %c0_51 = arith.constant 0 : index
    %c0_52 = arith.constant 0 : index
    %40 = vector.load %arg3[%c0_51, %c0_52] : memref<4x8xf32, #tpu.memory_space<vmem>>, vector<1x8xf32>
    %c0_53 = arith.constant 0 : index
    %c0_54 = arith.constant 0 : index
    %41 = vector.load %arg1[%c0_53, %c0_54] : memref<128x8xbf16, #tpu.memory_space<vmem>>, vector<128x8xbf16>
    %cst_55 = arith.constant dense<0.000000e+00> : vector<64x8xf32>
    %42 = tpu.matmul %39, %41, %cst_55 {dimension_numbers = #tpu.dot_dimension_numbers<[1], [0], [0], [1], [0, 0, 1, 1], [], []>} : vector<64x128xbf16>, vector<128x8xbf16>, vector<64x8xf32> -> vector<64x8xf32>
    %43 = vector.broadcast %40 : vector<1x8xf32> to vector<64x8xf32>
    %44 = arith.addf %42, %43 : vector<64x8xf32>
    %cst_56 = arith.constant 0.000000e+00 : f32
    %45 = vector.broadcast %cst_56 : f32 to vector<64x8xf32>
    %46 = arith.maximumf %44, %45 : vector<64x8xf32>
    %cst_57 = arith.constant 0.000000e+00 : bf16
    %47 = vector.broadcast %cst_57 : bf16 to vector<1x10x8xbf16>
    %c0_58 = arith.constant 0 : index
    %c0_59 = arith.constant 0 : index
    %c0_60 = arith.constant 0 : index
    %48 = vector.load %arg6[%c0_58, %c0_59, %c0_60] : memref<10x10x8xbf16, #tpu.memory_space<vmem>>, vector<1x10x8xbf16>
    tpu.vector_store %arg6[%c0_58, %c0_59, %c0_60], %47 {strides = array<i32>} : memref<10x10x8xbf16, #tpu.memory_space<vmem>>, vector<1x10x8xbf16>,
    %c9 = arith.constant 9 : index
    %c0_61 = arith.constant 0 : index
    %c0_62 = arith.constant 0 : index
    %49 = vector.load %arg6[%c9, %c0_61, %c0_62] : memref<10x10x8xbf16, #tpu.memory_space<vmem>>, vector<1x10x8xbf16>
    tpu.vector_store %arg6[%c9, %c0_61, %c0_62], %47 {strides = array<i32>} : memref<10x10x8xbf16, #tpu.memory_space<vmem>>, vector<1x10x8xbf16>,
    %cst_63 = arith.constant 0.000000e+00 : bf16
    %50 = vector.broadcast %cst_63 : bf16 to vector<8x1x8xbf16>
    %c1_64 = arith.constant 1 : index
    %c0_65 = arith.constant 0 : index
    %c0_66 = arith.constant 0 : index
    %51 = vector.load %arg6[%c1_64, %c0_65, %c0_66] : memref<10x10x8xbf16, #tpu.memory_space<vmem>>, vector<8x1x8xbf16>
    tpu.vector_store %arg6[%c1_64, %c0_65, %c0_66], %50 {strides = array<i32>} : memref<10x10x8xbf16, #tpu.memory_space<vmem>>, vector<8x1x8xbf16>,
    %c1_67 = arith.constant 1 : index
    %c9_68 = arith.constant 9 : index
    %c0_69 = arith.constant 0 : index
    %52 = vector.load %arg6[%c1_67, %c9_68, %c0_69] : memref<10x10x8xbf16, #tpu.memory_space<vmem>>, vector<8x1x8xbf16>
    tpu.vector_store %arg6[%c1_67, %c9_68, %c0_69], %50 {strides = array<i32>} : memref<10x10x8xbf16, #tpu.memory_space<vmem>>, vector<8x1x8xbf16>,
    %53 = vector.shape_cast %46 : vector<64x8xf32> to vector<8x8x8xf32>
    %54 = arith.truncf %53 : vector<8x8x8xf32> to vector<8x8x8xbf16>
    %c1_70 = arith.constant 1 : index
    %c1_71 = arith.constant 1 : index
    %c0_72 = arith.constant 0 : index
    %55 = vector.load %arg6[%c1_70, %c1_71, %c0_72] : memref<10x10x8xbf16, #tpu.memory_space<vmem>>, vector<8x8x8xbf16>
    tpu.vector_store %arg6[%c1_70, %c1_71, %c0_72], %54 {strides = array<i32>} : memref<10x10x8xbf16, #tpu.memory_space<vmem>>, vector<8x8x8xbf16>,
    %c1_73 = arith.constant 1 : index
    %c0_74 = arith.constant 0 : index
    %56 = vector.load %arg3[%c1_73, %c0_74] : memref<4x8xf32, #tpu.memory_space<vmem>>, vector<1x8xf32>
    %cst_75 = arith.constant 0.000000e+00 : f32
    %57 = vector.broadcast %cst_75 : f32 to vector<1x8xf32>
    %c0_76 = arith.constant 0 : index
    %c0_77 = arith.constant 0 : index
    %c0_78 = arith.constant 0 : index
    %58 = vector.load %arg6[%c0_76, %c0_77, %c0_78] : memref<10x10x8xbf16, #tpu.memory_space<vmem>>, vector<8x8x8xbf16>
    %59 = vector.shape_cast %58 : vector<8x8x8xbf16> to vector<64x8xbf16>
    %c0_79 = arith.constant 0 : index
    %c1_80 = arith.constant 1 : index
    %c0_81 = arith.constant 0 : index
    %60 = vector.load %arg6[%c0_79, %c1_80, %c0_81] : memref<10x10x8xbf16, #tpu.memory_space<vmem>>, vector<8x8x8xbf16>
    %61 = vector.shape_cast %60 : vector<8x8x8xbf16> to vector<64x8xbf16>
    %c1_82 = arith.constant 1 : index
    %c0_83 = arith.constant 0 : index
    %c0_84 = arith.constant 0 : index
    %62 = vector.load %arg6[%c1_82, %c0_83, %c0_84] : memref<10x10x8xbf16, #tpu.memory_space<vmem>>, vector<8x8x8xbf16>
    %63 = vector.shape_cast %62 : vector<8x8x8xbf16> to vector<64x8xbf16>
    %c1_85 = arith.constant 1 : index
    %c1_86 = arith.constant 1 : index
    %c0_87 = arith.constant 0 : index
    %64 = vector.load %arg6[%c1_85, %c1_86, %c0_87] : memref<10x10x8xbf16, #tpu.memory_space<vmem>>, vector<8x8x8xbf16>
    %65 = vector.shape_cast %64 : vector<8x8x8xbf16> to vector<64x8xbf16>
    %66 = tpu.concatenate %59, %61, %63, %65 in 1 : vector<64x8xbf16>, vector<64x8xbf16>, vector<64x8xbf16>, vector<64x8xbf16> -> vector<64x32xbf16>
    %c0_88 = arith.constant 0 : index
    %c0_89 = arith.constant 0 : index
    %c0_90 = arith.constant 0 : index
    %67 = vector.load %arg2[%c0_88, %c0_89, %c0_90] : memref<4x32x8xbf16, #tpu.memory_space<vmem>>, vector<1x32x8xbf16>
    %68 = vector.shape_cast %67 : vector<1x32x8xbf16> to vector<32x8xbf16>
    %cst_91 = arith.constant dense<0.000000e+00> : vector<64x8xf32>
    %69 = tpu.matmul %66, %68, %cst_91 {dimension_numbers = #tpu.dot_dimension_numbers<[1], [0], [0], [1], [0, 0, 1, 1], [], []>} : vector<64x32xbf16>, vector<32x8xbf16>, vector<64x8xf32> -> vector<64x8xf32>
    %70 = vector.broadcast %56 : vector<1x8xf32> to vector<64x8xf32>
    %71 = arith.addf %69, %70 : vector<64x8xf32>
    %c0_92 = arith.constant 0 : index
    %c0_93 = arith.constant 0 : index
    %72 = vector.load %arg7[%c0_92, %c0_93] : memref<256x8xf32, #tpu.memory_space<vmem>>, vector<64x8xf32>
    tpu.vector_store %arg7[%c0_92, %c0_93], %71 {strides = array<i32>} : memref<256x8xf32, #tpu.memory_space<vmem>>, vector<64x8xf32>,
    %cst_94 = arith.constant dense<0.000000e+00> : vector<8xf32>
    %73 = vector.multi_reduction <add>, %71, %cst_94 [0] : vector<64x8xf32> to vector<8xf32>
    %74 = vector.shape_cast %73 : vector<8xf32> to vector<1x8xf32>
    %75 = arith.addf %57, %74 : vector<1x8xf32>
    %c0_95 = arith.constant 0 : index
    %c1_96 = arith.constant 1 : index
    %c0_97 = arith.constant 0 : index
    %76 = vector.load %arg6[%c0_95, %c1_96, %c0_97] : memref<10x10x8xbf16, #tpu.memory_space<vmem>>, vector<8x8x8xbf16>
    %77 = vector.shape_cast %76 : vector<8x8x8xbf16> to vector<64x8xbf16>
    %c0_98 = arith.constant 0 : index
    %c2_99 = arith.constant 2 : index
    %c0_100 = arith.constant 0 : index
    %78 = vector.load %arg6[%c0_98, %c2_99, %c0_100] : memref<10x10x8xbf16, #tpu.memory_space<vmem>>, vector<8x8x8xbf16>
    %79 = vector.shape_cast %78 : vector<8x8x8xbf16> to vector<64x8xbf16>
    %c1_101 = arith.constant 1 : index
    %c1_102 = arith.constant 1 : index
    %c0_103 = arith.constant 0 : index
    %80 = vector.load %arg6[%c1_101, %c1_102, %c0_103] : memref<10x10x8xbf16, #tpu.memory_space<vmem>>, vector<8x8x8xbf16>
    %81 = vector.shape_cast %80 : vector<8x8x8xbf16> to vector<64x8xbf16>
    %c1_104 = arith.constant 1 : index
    %c2_105 = arith.constant 2 : index
    %c0_106 = arith.constant 0 : index
    %82 = vector.load %arg6[%c1_104, %c2_105, %c0_106] : memref<10x10x8xbf16, #tpu.memory_space<vmem>>, vector<8x8x8xbf16>
    %83 = vector.shape_cast %82 : vector<8x8x8xbf16> to vector<64x8xbf16>
    %84 = tpu.concatenate %77, %79, %81, %83 in 1 : vector<64x8xbf16>, vector<64x8xbf16>, vector<64x8xbf16>, vector<64x8xbf16> -> vector<64x32xbf16>
    %c1_107 = arith.constant 1 : index
    %c0_108 = arith.constant 0 : index
    %c0_109 = arith.constant 0 : index
    %85 = vector.load %arg2[%c1_107, %c0_108, %c0_109] : memref<4x32x8xbf16, #tpu.memory_space<vmem>>, vector<1x32x8xbf16>
    %86 = vector.shape_cast %85 : vector<1x32x8xbf16> to vector<32x8xbf16>
    %cst_110 = arith.constant dense<0.000000e+00> : vector<64x8xf32>
    %87 = tpu.matmul %84, %86, %cst_110 {dimension_numbers = #tpu.dot_dimension_numbers<[1], [0], [0], [1], [0, 0, 1, 1], [], []>} : vector<64x32xbf16>, vector<32x8xbf16>, vector<64x8xf32> -> vector<64x8xf32>
    %88 = vector.broadcast %56 : vector<1x8xf32> to vector<64x8xf32>
    %89 = arith.addf %87, %88 : vector<64x8xf32>
    %c64 = arith.constant 64 : index
    %c0_111 = arith.constant 0 : index
    %90 = vector.load %arg7[%c64, %c0_111] : memref<256x8xf32, #tpu.memory_space<vmem>>, vector<64x8xf32>
    tpu.vector_store %arg7[%c64, %c0_111], %89 {strides = array<i32>} : memref<256x8xf32, #tpu.memory_space<vmem>>, vector<64x8xf32>,
    %cst_112 = arith.constant dense<0.000000e+00> : vector<8xf32>
    %91 = vector.multi_reduction <add>, %89, %cst_112 [0] : vector<64x8xf32> to vector<8xf32>
    %92 = vector.shape_cast %91 : vector<8xf32> to vector<1x8xf32>
    %93 = arith.addf %75, %92 : vector<1x8xf32>
    %c1_113 = arith.constant 1 : index
    %c0_114 = arith.constant 0 : index
    %c0_115 = arith.constant 0 : index
    %94 = vector.load %arg6[%c1_113, %c0_114, %c0_115] : memref<10x10x8xbf16, #tpu.memory_space<vmem>>, vector<8x8x8xbf16>
    %95 = vector.shape_cast %94 : vector<8x8x8xbf16> to vector<64x8xbf16>
    %c1_116 = arith.constant 1 : index
    %c1_117 = arith.constant 1 : index
    %c0_118 = arith.constant 0 : index
    %96 = vector.load %arg6[%c1_116, %c1_117, %c0_118] : memref<10x10x8xbf16, #tpu.memory_space<vmem>>, vector<8x8x8xbf16>
    %97 = vector.shape_cast %96 : vector<8x8x8xbf16> to vector<64x8xbf16>
    %c2_119 = arith.constant 2 : index
    %c0_120 = arith.constant 0 : index
    %c0_121 = arith.constant 0 : index
    %98 = vector.load %arg6[%c2_119, %c0_120, %c0_121] : memref<10x10x8xbf16, #tpu.memory_space<vmem>>, vector<8x8x8xbf16>
    %99 = vector.shape_cast %98 : vector<8x8x8xbf16> to vector<64x8xbf16>
    %c2_122 = arith.constant 2 : index
    %c1_123 = arith.constant 1 : index
    %c0_124 = arith.constant 0 : index
    %100 = vector.load %arg6[%c2_122, %c1_123, %c0_124] : memref<10x10x8xbf16, #tpu.memory_space<vmem>>, vector<8x8x8xbf16>
    %101 = vector.shape_cast %100 : vector<8x8x8xbf16> to vector<64x8xbf16>
    %102 = tpu.concatenate %95, %97, %99, %101 in 1 : vector<64x8xbf16>, vector<64x8xbf16>, vector<64x8xbf16>, vector<64x8xbf16> -> vector<64x32xbf16>
    %c2_125 = arith.constant 2 : index
    %c0_126 = arith.constant 0 : index
    %c0_127 = arith.constant 0 : index
    %103 = vector.load %arg2[%c2_125, %c0_126, %c0_127] : memref<4x32x8xbf16, #tpu.memory_space<vmem>>, vector<1x32x8xbf16>
    %104 = vector.shape_cast %103 : vector<1x32x8xbf16> to vector<32x8xbf16>
    %cst_128 = arith.constant dense<0.000000e+00> : vector<64x8xf32>
    %105 = tpu.matmul %102, %104, %cst_128 {dimension_numbers = #tpu.dot_dimension_numbers<[1], [0], [0], [1], [0, 0, 1, 1], [], []>} : vector<64x32xbf16>, vector<32x8xbf16>, vector<64x8xf32> -> vector<64x8xf32>
    %106 = vector.broadcast %56 : vector<1x8xf32> to vector<64x8xf32>
    %107 = arith.addf %105, %106 : vector<64x8xf32>
    %c128 = arith.constant 128 : index
    %c0_129 = arith.constant 0 : index
    %108 = vector.load %arg7[%c128, %c0_129] : memref<256x8xf32, #tpu.memory_space<vmem>>, vector<64x8xf32>
    tpu.vector_store %arg7[%c128, %c0_129], %107 {strides = array<i32>} : memref<256x8xf32, #tpu.memory_space<vmem>>, vector<64x8xf32>,
    %cst_130 = arith.constant dense<0.000000e+00> : vector<8xf32>
    %109 = vector.multi_reduction <add>, %107, %cst_130 [0] : vector<64x8xf32> to vector<8xf32>
    %110 = vector.shape_cast %109 : vector<8xf32> to vector<1x8xf32>
    %111 = arith.addf %93, %110 : vector<1x8xf32>
    %c1_131 = arith.constant 1 : index
    %c1_132 = arith.constant 1 : index
    %c0_133 = arith.constant 0 : index
    %112 = vector.load %arg6[%c1_131, %c1_132, %c0_133] : memref<10x10x8xbf16, #tpu.memory_space<vmem>>, vector<8x8x8xbf16>
    %113 = vector.shape_cast %112 : vector<8x8x8xbf16> to vector<64x8xbf16>
    %c1_134 = arith.constant 1 : index
    %c2_135 = arith.constant 2 : index
    %c0_136 = arith.constant 0 : index
    %114 = vector.load %arg6[%c1_134, %c2_135, %c0_136] : memref<10x10x8xbf16, #tpu.memory_space<vmem>>, vector<8x8x8xbf16>
    %115 = vector.shape_cast %114 : vector<8x8x8xbf16> to vector<64x8xbf16>
    %c2_137 = arith.constant 2 : index
    %c1_138 = arith.constant 1 : index
    %c0_139 = arith.constant 0 : index
    %116 = vector.load %arg6[%c2_137, %c1_138, %c0_139] : memref<10x10x8xbf16, #tpu.memory_space<vmem>>, vector<8x8x8xbf16>
    %117 = vector.shape_cast %116 : vector<8x8x8xbf16> to vector<64x8xbf16>
    %c2_140 = arith.constant 2 : index
    %c2_141 = arith.constant 2 : index
    %c0_142 = arith.constant 0 : index
    %118 = vector.load %arg6[%c2_140, %c2_141, %c0_142] : memref<10x10x8xbf16, #tpu.memory_space<vmem>>, vector<8x8x8xbf16>
    %119 = vector.shape_cast %118 : vector<8x8x8xbf16> to vector<64x8xbf16>
    %120 = tpu.concatenate %113, %115, %117, %119 in 1 : vector<64x8xbf16>, vector<64x8xbf16>, vector<64x8xbf16>, vector<64x8xbf16> -> vector<64x32xbf16>
    %c3_143 = arith.constant 3 : index
    %c0_144 = arith.constant 0 : index
    %c0_145 = arith.constant 0 : index
    %121 = vector.load %arg2[%c3_143, %c0_144, %c0_145] : memref<4x32x8xbf16, #tpu.memory_space<vmem>>, vector<1x32x8xbf16>
    %122 = vector.shape_cast %121 : vector<1x32x8xbf16> to vector<32x8xbf16>
    %cst_146 = arith.constant dense<0.000000e+00> : vector<64x8xf32>
    %123 = tpu.matmul %120, %122, %cst_146 {dimension_numbers = #tpu.dot_dimension_numbers<[1], [0], [0], [1], [0, 0, 1, 1], [], []>} : vector<64x32xbf16>, vector<32x8xbf16>, vector<64x8xf32> -> vector<64x8xf32>
    %124 = vector.broadcast %56 : vector<1x8xf32> to vector<64x8xf32>
    %125 = arith.addf %123, %124 : vector<64x8xf32>
    %c192 = arith.constant 192 : index
    %c0_147 = arith.constant 0 : index
    %126 = vector.load %arg7[%c192, %c0_147] : memref<256x8xf32, #tpu.memory_space<vmem>>, vector<64x8xf32>
    tpu.vector_store %arg7[%c192, %c0_147], %125 {strides = array<i32>} : memref<256x8xf32, #tpu.memory_space<vmem>>, vector<64x8xf32>,
    %cst_148 = arith.constant dense<0.000000e+00> : vector<8xf32>
    %127 = vector.multi_reduction <add>, %125, %cst_148 [0] : vector<64x8xf32> to vector<8xf32>
    %128 = vector.shape_cast %127 : vector<8xf32> to vector<1x8xf32>
    %129 = arith.addf %111, %128 : vector<1x8xf32>
    %cst_149 = arith.constant 3.906250e-03 : f32
    %130 = vector.broadcast %cst_149 : f32 to vector<1x8xf32>
    %131 = arith.mulf %129, %130 : vector<1x8xf32>
    %c0_150 = arith.constant 0 : index
    %c0_151 = arith.constant 0 : index
    %132 = vector.load %arg7[%c0_150, %c0_151] : memref<256x8xf32, #tpu.memory_space<vmem>>, vector<256x8xf32>
    %133 = vector.broadcast %131 : vector<1x8xf32> to vector<256x8xf32>
    %134 = arith.subf %132, %133 : vector<256x8xf32>
    %135 = arith.mulf %134, %134 : vector<256x8xf32>
    %cst_152 = arith.constant dense<0.000000e+00> : vector<8xf32>
    %136 = vector.multi_reduction <add>, %135, %cst_152 [0] : vector<256x8xf32> to vector<8xf32>
    %137 = vector.shape_cast %136 : vector<8xf32> to vector<1x8xf32>
    %cst_153 = arith.constant 3.906250e-03 : f32
    %138 = vector.broadcast %cst_153 : f32 to vector<1x8xf32>
    %139 = arith.mulf %137, %138 : vector<1x8xf32>
    %c2_154 = arith.constant 2 : index
    %c0_155 = arith.constant 0 : index
    %140 = vector.load %arg3[%c2_154, %c0_155] : memref<4x8xf32, #tpu.memory_space<vmem>>, vector<1x8xf32>
    %cst_156 = arith.constant 9.99999974E-6 : f32
    %141 = vector.broadcast %cst_156 : f32 to vector<1x8xf32>
    %142 = arith.addf %139, %141 : vector<1x8xf32>
    %143 = math.rsqrt %142 : vector<1x8xf32>
    %144 = arith.mulf %140, %143 : vector<1x8xf32>
    %145 = vector.broadcast %144 : vector<1x8xf32> to vector<256x8xf32>
    %146 = arith.mulf %134, %145 : vector<256x8xf32>
    %c3_157 = arith.constant 3 : index
    %c0_158 = arith.constant 0 : index
    %147 = vector.load %arg3[%c3_157, %c0_158] : memref<4x8xf32, #tpu.memory_space<vmem>>, vector<1x8xf32>
    %148 = vector.broadcast %147 : vector<1x8xf32> to vector<256x8xf32>
    %149 = arith.addf %146, %148 : vector<256x8xf32>
    %150 = tpu.transpose %149, [1, 0] : vector<256x8xf32> -> vector<8x256xf32>
    %c0_159 = arith.constant 0 : index
    %c0_160 = arith.constant 0 : index
    %151 = vector.load %arg4[%c0_159, %c0_160] : memref<8x256xf32, #tpu.memory_space<vmem>>, vector<8x256xf32>
    tpu.vector_store %arg4[%c0_159, %c0_160], %150 {strides = array<i32>} : memref<8x256xf32, #tpu.memory_space<vmem>>, vector<8x256xf32>,
    return
  }
}

</mosaic_0001>

<llo_original>
// kernel: unet_block_forward.1
$region0: #{unet_block_forward.1}
  #allocation0 [shape = 'u32[]', space=smem, size = 0x4, offset = 0x4, fixed_abs, tag = 'smem constant byte address 0x4 - core index']
  #allocation1 [shape = 'u32[144,128]{1,0:T(1,128)}', space=vmem, size = 0x12000, scoped, tag = 'internal scratch']
  #allocation2 [shape = 'bf16[11,11,8]{2,1,0:T(8,128)(2,1)}', space=vmem, size = 0xb000, scoped, tag = 'scratch operand']
  #allocation3 [shape = 'bf16[10,10,8]{2,1,0:T(8,128)(2,1)}', space=vmem, size = 0xa000, scoped, tag = 'scratch operand']
  #allocation4 [shape = 'f32[256,8]{1,0:T(8,128)}', space=vmem, size = 0x20000, scoped, tag = 'scratch operand']
  %s0 = inlined_call_operand.vmem [shape: bf16[11,11,8], index: 0, kind: input, shape index: {}]
  %s1 = inlined_call_operand.vmem [shape: bf16[128,8], index: 1, kind: input, shape index: {}]
  %s2 = inlined_call_operand.vmem [shape: bf16[4,32,8], index: 2, kind: input, shape index: {}]
  %s3 = inlined_call_operand.vmem [shape: f32[4,8], index: 3, kind: input, shape index: {}]
  %s4 = inlined_call_operand.vmem [shape: f32[8,256], index: 4, kind: output, shape index: {}]
  %s5 = sld [smem:[#allocation0]]
  $region26: #{unet_block_forward.1} parent=0
    _
  %s7 = ssub.s32 1, %s5
  %s8 = scalar_select 0, %s7, %s5
  // Predicated region
  $region2: #{unet_block_forward.1} parent=0 // pred_check
    _
  $region3: #{unet_block_forward.1} parent=0 // pred_check_branch
    %10 = sbr.rel (0) target = $region5
  $region4: #{unet_block_forward.1} parent=0 // pred_region
    _
  $region5: #{unet_block_forward.1} parent=0 // pred_fallthru
    _
  // Predicated region
  $region6: #{unet_block_forward.1} parent=0 // pred_check
    _
  $region7: #{unet_block_forward.1} parent=0 // pred_check_branch
    %12 = sbr.rel (0) target = $region9
  $region8: #{unet_block_forward.1} parent=0 // pred_region
    _
  $region9: #{unet_block_forward.1} parent=0 // pred_fallthru
    _
  // Predicated region
  $region10: #{unet_block_forward.1} parent=0 // pred_check
    _
  $region11: #{unet_block_forward.1} parent=0 // pred_check_branch
    %14 = sbr.rel (0) target = $region13
  $region12: #{unet_block_forward.1} parent=0 // pred_region
    _
  $region13: #{unet_block_forward.1} parent=0 // pred_fallthru
    _
  // Predicated region
  $region14: #{unet_block_forward.1} parent=0 // pred_check
    _
  $region15: #{unet_block_forward.1} parent=0 // pred_check_branch
    %16 = sbr.rel (0) target = $region17
  $region16: #{unet_block_forward.1} parent=0 // pred_region
    _
  $region17: #{unet_block_forward.1} parent=0 // pred_fallthru
    _
  %v19 = vld [vmem:[%s0] sm:$0xf]
  %v20 = vld [vmem:[%s0 + $0x4] sm:$0x3]
  %v21 = vld [vmem:[%s0 + $0x8] sm:$0xf]
  %v22 = vld [vmem:[%s0 + $0xc] sm:$0x3]
  %v23 = vld [vmem:[%s0 + $0x10] sm:$0xf]
  %v24 = vld [vmem:[%s0 + $0x14] sm:$0x3]
  %v25 = vld [vmem:[%s0 + $0x18] sm:$0xf]
  %v26 = vld [vmem:[%s0 + $0x1c] sm:$0x3]
  %v27 = vld [vmem:[%s0 + $0x20] sm:$0xf]
  %v28 = vld [vmem:[%s0 + $0x24] sm:$0x3]
  %v29 = vld [vmem:[%s0 + $0x28] sm:$0xf]
  %v30 = vld [vmem:[%s0 + $0x2c] sm:$0x3]
  %v31 = vld [vmem:[%s0 + $0x30] sm:$0xf]
  %v32 = vld [vmem:[%s0 + $0x34] sm:$0x3]
  %v33 = vld [vmem:[%s0 + $0x38] sm:$0xf]
  %v34 = vld [vmem:[%s0 + $0x3c] sm:$0x3]
  %v35 = vld [vmem:[%s0 + $0x40] sm:$0xf]
  %v36 = vld [vmem:[%s0 + $0x44] sm:$0x3]
  %v37 = vld [vmem:[%s0 + $0x48] sm:$0xf]
  %v38 = vld [vmem:[%s0 + $0x4c] sm:$0x3]
  %v39 = vld [vmem:[%s0 + $0x50] sm:$0xf]
  %v40 = vld [vmem:[%s0 + $0x54] sm:$0x3]
  %vm41 = vcmp.ge.bf16.partialorder %v19, 0
  %vm42 = vcmp.ge.bf16.partialorder %v20, 0
  %vm43 = vcmp.ge.bf16.partialorder %v21, 0
  %vm44 = vcmp.ge.bf16.partialorder %v22, 0
  %vm45 = vcmp.ge.bf16.partialorder %v23, 0
  %vm46 = vcmp.ge.bf16.partialorder %v24, 0
  %vm47 = vcmp.ge.bf16.partialorder %v25, 0
  %vm48 = vcmp.ge.bf16.partialorder %v26, 0
  %vm49 = vcmp.ge.bf16.partialorder %v27, 0
  %vm50 = vcmp.ge.bf16.partialorder %v28, 0
  %vm51 = vcmp.ge.bf16.partialorder %v29, 0
  %vm52 = vcmp.ge.bf16.partialorder %v30, 0
  %vm53 = vcmp.ge.bf16.partialorder %v31, 0
  %vm54 = vcmp.ge.bf16.partialorder %v32, 0
  %vm55 = vcmp.ge.bf16.partialorder %v33, 0
  %vm56 = vcmp.ge.bf16.partialorder %v34, 0
  %vm57 = vcmp.ge.bf16.partialorder %v35, 0
  %vm58 = vcmp.ge.bf16.partialorder %v36, 0
  %vm59 = vcmp.ge.bf16.partialorder %v37, 0
  %vm60 = vcmp.ge.bf16.partialorder %v38, 0
  %vm61 = vcmp.ge.bf16.partialorder %v39, 0
  %vm62 = vcmp.ge.bf16.partialorder %v40, 0
  %v63 = vmul.bf16 %v19, 1045249613
  %v64 = vmul.bf16 %v20, 1045249613
  %v65 = vmul.bf16 %v21, 1045249613
  %v66 = vmul.bf16 %v22, 1045249613
  %v67 = vmul.bf16 %v23, 1045249613
  %v68 = vmul.bf16 %v24, 1045249613
  %v69 = vmul.bf16 %v25, 1045249613
  %v70 = vmul.bf16 %v26, 1045249613
  %v71 = vmul.bf16 %v27, 1045249613
  %v72 = vmul.bf16 %v28, 1045249613
  %v73 = vmul.bf16 %v29, 1045249613
  %v74 = vmul.bf16 %v30, 1045249613
  %v75 = vmul.bf16 %v31, 1045249613
  %v76 = vmul.bf16 %v32, 1045249613
  %v77 = vmul.bf16 %v33, 1045249613
  %v78 = vmul.bf16 %v34, 1045249613
  %v79 = vmul.bf16 %v35, 1045249613
  %v80 = vmul.bf16 %v36, 1045249613
  %v81 = vmul.bf16 %v37, 1045249613
  %v82 = vmul.bf16 %v38, 1045249613
  %v83 = vmul.bf16 %v39, 1045249613
  %v84 = vmul.bf16 %v40, 1045249613
  %v85 = vsel %vm41, %v19, %v63
  %v86 = vsel %vm42, %v20, %v64
  %v87 = vsel %vm43, %v21, %v65
  %v88 = vsel %vm44, %v22, %v66
  %v89 = vsel %vm45, %v23, %v67
  %v90 = vsel %vm46, %v24, %v68
  %v91 = vsel %vm47, %v25, %v69
  %v92 = vsel %vm48, %v26, %v70
  %v93 = vsel %vm49, %v27, %v71
  %v94 = vsel %vm50, %v28, %v72
  %v95 = vsel %vm51, %v29, %v73
  %v96 = vsel %vm52, %v30, %v74
  %v97 = vsel %vm53, %v31, %v75
  %v98 = vsel %vm54, %v32, %v76
  %v99 = vsel %vm55, %v33, %v77
  %v100 = vsel %vm56, %v34, %v78
  %v101 = vsel %vm57, %v35, %v79
  %v102 = vsel %vm58, %v36, %v80
  %v103 = vsel %vm59, %v37, %v81
  %v104 = vsel %vm60, %v38, %v82
  %v105 = vsel %vm61, %v39, %v83
  %v106 = vsel %vm62, %v40, %v84
  %vm107 = vcmask 60416
  %108 = vst.msk [vmem:[#allocation2] sm:$0xf] %vm107, %v85
  %vm109 = vcmask 58368
  %vm110 = vsmask.f32 1280
  %vm111 = vmand %vm109, %vm110
  %v112 = vld [vmem:[#allocation2 + $0x4] sm:$0x3]
  %v113 = vsel %vm111, %v86, %v112
  %114 = vst [vmem:[#allocation2 + $0x4] sm:$0x3] %v113
  %115 = vst.msk [vmem:[#allocation2 + $0x8] sm:$0xf] %vm107, %v87
  %v116 = vld [vmem:[#allocation2 + $0xc] sm:$0x3]
  %v117 = vsel %vm111, %v88, %v116
  %118 = vst [vmem:[#allocation2 + $0xc] sm:$0x3] %v117
  %119 = vst.msk [vmem:[#allocation2 + $0x10] sm:$0xf] %vm107, %v89
  %v120 = vld [vmem:[#allocation2 + $0x14] sm:$0x3]
  %v121 = vsel %vm111, %v90, %v120
  %122 = vst [vmem:[#allocation2 + $0x14] sm:$0x3] %v121
  %123 = vst.msk [vmem:[#allocation2 + $0x18] sm:$0xf] %vm107, %v91
  %v124 = vld [vmem:[#allocation2 + $0x1c] sm:$0x3]
  %v125 = vsel %vm111, %v92, %v124
  %126 = vst [vmem:[#allocation2 + $0x1c] sm:$0x3] %v125
  %127 = vst.msk [vmem:[#allocation2 + $0x20] sm:$0xf] %vm107, %v93
  %v128 = vld [vmem:[#allocation2 + $0x24] sm:$0x3]
  %v129 = vsel %vm111, %v94, %v128
  %130 = vst [vmem:[#allocation2 + $0x24] sm:$0x3] %v129
  %131 = vst.msk [vmem:[#allocation2 + $0x28] sm:$0xf] %vm107, %v95
  %v132 = vld [vmem:[#allocation2 + $0x2c] sm:$0x3]
  %v133 = vsel %vm111, %v96, %v132
  %134 = vst [vmem:[#allocation2 + $0x2c] sm:$0x3] %v133
  %135 = vst.msk [vmem:[#allocation2 + $0x30] sm:$0xf] %vm107, %v97
  %v136 = vld [vmem:[#allocation2 + $0x34] sm:$0x3]
  %v137 = vsel %vm111, %v98, %v136
  %138 = vst [vmem:[#allocation2 + $0x34] sm:$0x3] %v137
  %139 = vst.msk [vmem:[#allocation2 + $0x38] sm:$0xf] %vm107, %v99
  %v140 = vld [vmem:[#allocation2 + $0x3c] sm:$0x3]
  %v141 = vsel %vm111, %v100, %v140
  %142 = vst [vmem:[#allocation2 + $0x3c] sm:$0x3] %v141
  %143 = vst.msk [vmem:[#allocation2 + $0x40] sm:$0xf] %vm107, %v101
  %v144 = vld [vmem:[#allocation2 + $0x44] sm:$0x3]
  %v145 = vsel %vm111, %v102, %v144
  %146 = vst [vmem:[#allocation2 + $0x44] sm:$0x3] %v145
  %147 = vst.msk [vmem:[#allocation2 + $0x48] sm:$0xf] %vm107, %v103
  %v148 = vld [vmem:[#allocation2 + $0x4c] sm:$0x3]
  %v149 = vsel %vm111, %v104, %v148
  %150 = vst [vmem:[#allocation2 + $0x4c] sm:$0x3] %v149
  %151 = vst.msk [vmem:[#allocation2 + $0x50] sm:$0xf] %vm107, %v105
  %v152 = vld [vmem:[#allocation2 + $0x54] sm:$0x3]
  %v153 = vsel %vm111, %v106, %v152
  %154 = vst [vmem:[#allocation2 + $0x54] sm:$0x3] %v153
  %v155 = vld [vmem:[#allocation2] sm:$0xf]
  %v156 = vld [vmem:[#allocation2 + $0x8] sm:$0xf]
  %v157 = vld [vmem:[#allocation2 + $0x10] sm:$0xf]
  %v158 = vld [vmem:[#allocation2 + $0x18] sm:$0xf]
  %v159 = vld [vmem:[#allocation2 + $0x20] sm:$0xf]
  %v160 = vld [vmem:[#allocation2 + $0x28] sm:$0xf]
  %v161 = vld [vmem:[#allocation2 + $0x30] sm:$0xf]
  %v162 = vld [vmem:[#allocation2 + $0x38] sm:$0xf]
  %v163 = vld [vmem:[#allocation2 + $0x4] sm:$0x1]
  %v164 = vld [vmem:[#allocation2 + $0xc] sm:$0x1]
  %v165 = vld [vmem:[#allocation2 + $0x14] sm:$0x1]
  %v166 = vld [vmem:[#allocation2 + $0x1c] sm:$0x1]
  %v167 = vld [vmem:[#allocation2 + $0x24] sm:$0x1]
  %v168 = vld [vmem:[#allocation2 + $0x2c] sm:$0x1]
  %v169 = vld [vmem:[#allocation2 + $0x34] sm:$0x1]
  %v170 = vld [vmem:[#allocation2 + $0x3c] sm:$0x1]
  %vm171 = vsmask.f32 3328
  %vm172 = vsmask.f32 7440
  %vm173 = vmor %vm171, %vm172
  %v175 = vshrl.u32 %v155, 16
  %v177 = vrot.slane %v175, 4
  %v178 = vshll.u32 %v155, 16
  %v180 = vrot.slane %v178, 5
  %v181 = vor.u32 %v177, %v180
  %v182 = vrot.slane %v181, 4
  %v184 = vshll.u32 %v163, 16
  %v186 = vrot.slane %v184, 5
  %v187 = vsel %vm173, %v182, %v186
  %v189 = vshrl.u32 %v156, 16
  %v191 = vrot.slane %v189, 4
  %v192 = vshll.u32 %v156, 16
  %v194 = vrot.slane %v192, 5
  %v195 = vor.u32 %v191, %v194
  %v196 = vrot.slane %v195, 4
  %v198 = vshll.u32 %v164, 16
  %v200 = vrot.slane %v198, 5
  %v201 = vsel %vm173, %v196, %v200
  %v203 = vshrl.u32 %v157, 16
  %v205 = vrot.slane %v203, 4
  %v206 = vshll.u32 %v157, 16
  %v208 = vrot.slane %v206, 5
  %v209 = vor.u32 %v205, %v208
  %v210 = vrot.slane %v209, 4
  %v212 = vshll.u32 %v165, 16
  %v214 = vrot.slane %v212, 5
  %v215 = vsel %vm173, %v210, %v214
  %v217 = vshrl.u32 %v158, 16
  %v219 = vrot.slane %v217, 4
  %v220 = vshll.u32 %v158, 16
  %v222 = vrot.slane %v220, 5
  %v223 = vor.u32 %v219, %v222
  %v224 = vrot.slane %v223, 4
  %v226 = vshll.u32 %v166, 16
  %v228 = vrot.slane %v226, 5
  %v229 = vsel %vm173, %v224, %v228
  %v231 = vshrl.u32 %v159, 16
  %v233 = vrot.slane %v231, 4
  %v234 = vshll.u32 %v159, 16
  %v236 = vrot.slane %v234, 5
  %v237 = vor.u32 %v233, %v236
  %v238 = vrot.slane %v237, 4
  %v240 = vshll.u32 %v167, 16
  %v242 = vrot.slane %v240, 5
  %v243 = vsel %vm173, %v238, %v242
  %v245 = vshrl.u32 %v160, 16
  %v247 = vrot.slane %v245, 4
  %v248 = vshll.u32 %v160, 16
  %v250 = vrot.slane %v248, 5
  %v251 = vor.u32 %v247, %v250
  %v252 = vrot.slane %v251, 4
  %v254 = vshll.u32 %v168, 16
  %v256 = vrot.slane %v254, 5
  %v257 = vsel %vm173, %v252, %v256
  %v259 = vshrl.u32 %v161, 16
  %v261 = vrot.slane %v259, 4
  %v262 = vshll.u32 %v161, 16
  %v264 = vrot.slane %v262, 5
  %v265 = vor.u32 %v261, %v264
  %v266 = vrot.slane %v265, 4
  %v268 = vshll.u32 %v169, 16
  %v270 = vrot.slane %v268, 5
  %v271 = vsel %vm173, %v266, %v270
  %v273 = vshrl.u32 %v162, 16
  %v275 = vrot.slane %v273, 4
  %v276 = vshll.u32 %v162, 16
  %v278 = vrot.slane %v276, 5
  %v279 = vor.u32 %v275, %v278
  %v280 = vrot.slane %v279, 4
  %v282 = vshll.u32 %v170, 16
  %v284 = vrot.slane %v282, 5
  %v285 = vsel %vm173, %v280, %v284
  %v286 = vld [vmem:[#allocation2] sm:$0xe]
  %v287 = vld [vmem:[#allocation2 + $0x8] sm:$0xe]
  %v288 = vld [vmem:[#allocation2 + $0x10] sm:$0xe]
  %v289 = vld [vmem:[#allocation2 + $0x18] sm:$0xe]
  %v290 = vld [vmem:[#allocation2 + $0x20] sm:$0xe]
  %v291 = vld [vmem:[#allocation2 + $0x28] sm:$0xe]
  %v292 = vld [vmem:[#allocation2 + $0x30] sm:$0xe]
  %v293 = vld [vmem:[#allocation2 + $0x38] sm:$0xe]
  %vm310 = vcmask 1042432
  %vm311 = vcmask 1046532
  %vm312 = vmor %vm310, %vm311
  %v313 = vrot.slane %v286, 5
  %v314 = vrot.slane %v313, 4
  %v315 = vrot.slane %v163, 5
  %v316 = vsel %vm312, %v314, %v315
  %v317 = vrot.slane %v287, 5
  %v318 = vrot.slane %v317, 4
  %v319 = vrot.slane %v164, 5
  %v320 = vsel %vm312, %v318, %v319
  %v321 = vrot.slane %v288, 5
  %v322 = vrot.slane %v321, 4
  %v323 = vrot.slane %v165, 5
  %v324 = vsel %vm312, %v322, %v323
  %v325 = vrot.slane %v289, 5
  %v326 = vrot.slane %v325, 4
  %v327 = vrot.slane %v166, 5
  %v328 = vsel %vm312, %v326, %v327
  %v329 = vrot.slane %v290, 5
  %v330 = vrot.slane %v329, 4
  %v331 = vrot.slane %v167, 5
  %v332 = vsel %vm312, %v330, %v331
  %v333 = vrot.slane %v291, 5
  %v334 = vrot.slane %v333, 4
  %v335 = vrot.slane %v168, 5
  %v336 = vsel %vm312, %v334, %v335
  %v337 = vrot.slane %v292, 5
  %v338 = vrot.slane %v337, 4
  %v339 = vrot.slane %v169, 5
  %v340 = vsel %vm312, %v338, %v339
  %v341 = vrot.slane %v293, 5
  %v342 = vrot.slane %v341, 4
  %v343 = vrot.slane %v170, 5
  %v344 = vsel %vm312, %v342, %v343
  %v345 = vld [vmem:[#allocation2 + $0x4] sm:$0x3]
  %v346 = vld [vmem:[#allocation2 + $0xc] sm:$0x3]
  %v347 = vld [vmem:[#allocation2 + $0x14] sm:$0x3]
  %v348 = vld [vmem:[#allocation2 + $0x1c] sm:$0x3]
  %v349 = vld [vmem:[#allocation2 + $0x24] sm:$0x3]
  %v350 = vld [vmem:[#allocation2 + $0x2c] sm:$0x3]
  %v351 = vld [vmem:[#allocation2 + $0x34] sm:$0x3]
  %v352 = vld [vmem:[#allocation2 + $0x3c] sm:$0x3]
  %vm353 = vsmask.f32 2304
  %vm354 = vsmask.f32 6416
  %vm355 = vmor %vm353, %vm354
  %v357 = vshrl.u32 %v286, 16
  %v359 = vrot.slane %v357, 5
  %v360 = vshll.u32 %v286, 16
  %v362 = vrot.slane %v360, 6
  %v363 = vor.u32 %v359, %v362
  %v364 = vrot.slane %v363, 4
  %v366 = vshrl.u32 %v345, 16
  %v368 = vrot.slane %v366, 5
  %v369 = vshll.u32 %v345, 16
  %v371 = vrot.slane %v369, 6
  %v372 = vor.u32 %v368, %v371
  %v373 = vsel %vm355, %v364, %v372
  %v375 = vshrl.u32 %v287, 16
  %v377 = vrot.slane %v375, 5
  %v378 = vshll.u32 %v287, 16
  %v380 = vrot.slane %v378, 6
  %v381 = vor.u32 %v377, %v380
  %v382 = vrot.slane %v381, 4
  %v384 = vshrl.u32 %v346, 16
  %v386 = vrot.slane %v384, 5
  %v387 = vshll.u32 %v346, 16
  %v389 = vrot.slane %v387, 6
  %v390 = vor.u32 %v386, %v389
  %v391 = vsel %vm355, %v382, %v390
  %v393 = vshrl.u32 %v288, 16
  %v395 = vrot.slane %v393, 5
  %v396 = vshll.u32 %v288, 16
  %v398 = vrot.slane %v396, 6
  %v399 = vor.u32 %v395, %v398
  %v400 = vrot.slane %v399, 4
  %v402 = vshrl.u32 %v347, 16
  %v404 = vrot.slane %v402, 5
  %v405 = vshll.u32 %v347, 16
  %v407 = vrot.slane %v405, 6
  %v408 = vor.u32 %v404, %v407
  %v409 = vsel %vm355, %v400, %v408
  %v411 = vshrl.u32 %v289, 16
  %v413 = vrot.slane %v411, 5
  %v414 = vshll.u32 %v289, 16
  %v416 = vrot.slane %v414, 6
  %v417 = vor.u32 %v413, %v416
  %v418 = vrot.slane %v417, 4
  %v420 = vshrl.u32 %v348, 16
  %v422 = vrot.slane %v420, 5
  %v423 = vshll.u32 %v348, 16
  %v425 = vrot.slane %v423, 6
  %v426 = vor.u32 %v422, %v425
  %v427 = vsel %vm355, %v418, %v426
  %v429 = vshrl.u32 %v290, 16
  %v431 = vrot.slane %v429, 5
  %v432 = vshll.u32 %v290, 16
  %v434 = vrot.slane %v432, 6
  %v435 = vor.u32 %v431, %v434
  %v436 = vrot.slane %v435, 4
  %v438 = vshrl.u32 %v349, 16
  %v440 = vrot.slane %v438, 5
  %v441 = vshll.u32 %v349, 16
  %v443 = vrot.slane %v441, 6
  %v444 = vor.u32 %v440, %v443
  %v445 = vsel %vm355, %v436, %v444
  %v447 = vshrl.u32 %v291, 16
  %v449 = vrot.slane %v447, 5
  %v450 = vshll.u32 %v291, 16
  %v452 = vrot.slane %v450, 6
  %v453 = vor.u32 %v449, %v452
  %v454 = vrot.slane %v453, 4
  %v456 = vshrl.u32 %v350, 16
  %v458 = vrot.slane %v456, 5
  %v459 = vshll.u32 %v350, 16
  %v461 = vrot.slane %v459, 6
  %v462 = vor.u32 %v458, %v461
  %v463 = vsel %vm355, %v454, %v462
  %v465 = vshrl.u32 %v292, 16
  %v467 = vrot.slane %v465, 5
  %v468 = vshll.u32 %v292, 16
  %v470 = vrot.slane %v468, 6
  %v471 = vor.u32 %v467, %v470
  %v472 = vrot.slane %v471, 4
  %v474 = vshrl.u32 %v351, 16
  %v476 = vrot.slane %v474, 5
  %v477 = vshll.u32 %v351, 16
  %v479 = vrot.slane %v477, 6
  %v480 = vor.u32 %v476, %v479
  %v481 = vsel %vm355, %v472, %v480
  %v483 = vshrl.u32 %v293, 16
  %v485 = vrot.slane %v483, 5
  %v486 = vshll.u32 %v293, 16
  %v488 = vrot.slane %v486, 6
  %v489 = vor.u32 %v485, %v488
  %v490 = vrot.slane %v489, 4
  %v492 = vshrl.u32 %v352, 16
  %v494 = vrot.slane %v492, 5
  %v495 = vshll.u32 %v352, 16
  %v497 = vrot.slane %v495, 6
  %v498 = vor.u32 %v494, %v497
  %v499 = vsel %vm355, %v490, %v498
  %s500 = scalar_lea.vmem [#allocation2], 8
  %v501 = vld [vmem:[%s500] sm:$0xf]
  %v502 = vld [vmem:[%s500 + $0x8] sm:$0xf]
  %v503 = vld [vmem:[%s500 + $0x10] sm:$0xf]
  %v504 = vld [vmem:[%s500 + $0x18] sm:$0xf]
  %v505 = vld [vmem:[%s500 + $0x20] sm:$0xf]
  %v506 = vld [vmem:[%s500 + $0x28] sm:$0xf]
  %v507 = vld [vmem:[%s500 + $0x30] sm:$0xf]
  %v508 = vld [vmem:[%s500 + $0x38] sm:$0xf]
  %v509 = vld [vmem:[%s500 + $0x4] sm:$0x1]
  %v510 = vld [vmem:[%s500 + $0xc] sm:$0x1]
  %v511 = vld [vmem:[%s500 + $0x14] sm:$0x1]
  %v512 = vld [vmem:[%s500 + $0x1c] sm:$0x1]
  %v513 = vld [vmem:[%s500 + $0x24] sm:$0x1]
  %v514 = vld [vmem:[%s500 + $0x2c] sm:$0x1]
  %v515 = vld [vmem:[%s500 + $0x34] sm:$0x1]
  %v516 = vld [vmem:[%s500 + $0x3c] sm:$0x1]
  %v518 = vshrl.u32 %v501, 16
  %v520 = vrot.slane %v518, 4
  %v521 = vshll.u32 %v501, 16
  %v523 = vrot.slane %v521, 5
  %v524 = vor.u32 %v520, %v523
  %v525 = vrot.slane %v524, 4
  %v527 = vshll.u32 %v509, 16
  %v529 = vrot.slane %v527, 5
  %v530 = vsel %vm173, %v525, %v529
  %v532 = vshrl.u32 %v502, 16
  %v534 = vrot.slane %v532, 4
  %v535 = vshll.u32 %v502, 16
  %v537 = vrot.slane %v535, 5
  %v538 = vor.u32 %v534, %v537
  %v539 = vrot.slane %v538, 4
  %v541 = vshll.u32 %v510, 16
  %v543 = vrot.slane %v541, 5
  %v544 = vsel %vm173, %v539, %v543
  %v546 = vshrl.u32 %v503, 16
  %v548 = vrot.slane %v546, 4
  %v549 = vshll.u32 %v503, 16
  %v551 = vrot.slane %v549, 5
  %v552 = vor.u32 %v548, %v551
  %v553 = vrot.slane %v552, 4
  %v555 = vshll.u32 %v511, 16
  %v557 = vrot.slane %v555, 5
  %v558 = vsel %vm173, %v553, %v557
  %v560 = vshrl.u32 %v504, 16
  %v562 = vrot.slane %v560, 4
  %v563 = vshll.u32 %v504, 16
  %v565 = vrot.slane %v563, 5
  %v566 = vor.u32 %v562, %v565
  %v567 = vrot.slane %v566, 4
  %v569 = vshll.u32 %v512, 16
  %v571 = vrot.slane %v569, 5
  %v572 = vsel %vm173, %v567, %v571
  %v574 = vshrl.u32 %v505, 16
  %v576 = vrot.slane %v574, 4
  %v577 = vshll.u32 %v505, 16
  %v579 = vrot.slane %v577, 5
  %v580 = vor.u32 %v576, %v579
  %v581 = vrot.slane %v580, 4
  %v583 = vshll.u32 %v513, 16
  %v585 = vrot.slane %v583, 5
  %v586 = vsel %vm173, %v581, %v585
  %v588 = vshrl.u32 %v506, 16
  %v590 = vrot.slane %v588, 4
  %v591 = vshll.u32 %v506, 16
  %v593 = vrot.slane %v591, 5
  %v594 = vor.u32 %v590, %v593
  %v595 = vrot.slane %v594, 4
  %v597 = vshll.u32 %v514, 16
  %v599 = vrot.slane %v597, 5
  %v600 = vsel %vm173, %v595, %v599
  %v602 = vshrl.u32 %v507, 16
  %v604 = vrot.slane %v602, 4
  %v605 = vshll.u32 %v507, 16
  %v607 = vrot.slane %v605, 5
  %v608 = vor.u32 %v604, %v607
  %v609 = vrot.slane %v608, 4
  %v611 = vshll.u32 %v515, 16
  %v613 = vrot.slane %v611, 5
  %v614 = vsel %vm173, %v609, %v613
  %v616 = vshrl.u32 %v508, 16
  %v618 = vrot.slane %v616, 4
  %v619 = vshll.u32 %v508, 16
  %v621 = vrot.slane %v619, 5
  %v622 = vor.u32 %v618, %v621
  %v623 = vrot.slane %v622, 4
  %v625 = vshll.u32 %v516, 16
  %v627 = vrot.slane %v625, 5
  %v628 = vsel %vm173, %v623, %v627
  %v629 = vld [vmem:[%s500] sm:$0xe]
  %v630 = vld [vmem:[%s500 + $0x8] sm:$0xe]
  %v631 = vld [vmem:[%s500 + $0x10] sm:$0xe]
  %v632 = vld [vmem:[%s500 + $0x18] sm:$0xe]
  %v633 = vld [vmem:[%s500 + $0x20] sm:$0xe]
  %v634 = vld [vmem:[%s500 + $0x28] sm:$0xe]
  %v635 = vld [vmem:[%s500 + $0x30] sm:$0xe]
  %v636 = vld [vmem:[%s500 + $0x38] sm:$0xe]
  %v653 = vrot.slane %v629, 5
  %v654 = vrot.slane %v653, 4
  %v655 = vrot.slane %v509, 5
  %v656 = vsel %vm312, %v654, %v655
  %v657 = vrot.slane %v630, 5
  %v658 = vrot.slane %v657, 4
  %v659 = vrot.slane %v510, 5
  %v660 = vsel %vm312, %v658, %v659
  %v661 = vrot.slane %v631, 5
  %v662 = vrot.slane %v661, 4
  %v663 = vrot.slane %v511, 5
  %v664 = vsel %vm312, %v662, %v663
  %v665 = vrot.slane %v632, 5
  %v666 = vrot.slane %v665, 4
  %v667 = vrot.slane %v512, 5
  %v668 = vsel %vm312, %v666, %v667
  %v669 = vrot.slane %v633, 5
  %v670 = vrot.slane %v669, 4
  %v671 = vrot.slane %v513, 5
  %v672 = vsel %vm312, %v670, %v671
  %v673 = vrot.slane %v634, 5
  %v674 = vrot.slane %v673, 4
  %v675 = vrot.slane %v514, 5
  %v676 = vsel %vm312, %v674, %v675
  %v677 = vrot.slane %v635, 5
  %v678 = vrot.slane %v677, 4
  %v679 = vrot.slane %v515, 5
  %v680 = vsel %vm312, %v678, %v679
  %v681 = vrot.slane %v636, 5
  %v682 = vrot.slane %v681, 4
  %v683 = vrot.slane %v516, 5
  %v684 = vsel %vm312, %v682, %v683
  %v685 = vld [vmem:[%s500 + $0x4] sm:$0x3]
  %v686 = vld [vmem:[%s500 + $0xc] sm:$0x3]
  %v687 = vld [vmem:[%s500 + $0x14] sm:$0x3]
  %v688 = vld [vmem:[%s500 + $0x1c] sm:$0x3]
  %v689 = vld [vmem:[%s500 + $0x24] sm:$0x3]
  %v690 = vld [vmem:[%s500 + $0x2c] sm:$0x3]
  %v691 = vld [vmem:[%s500 + $0x34] sm:$0x3]
  %v692 = vld [vmem:[%s500 + $0x3c] sm:$0x3]
  %v694 = vshrl.u32 %v629, 16
  %v696 = vrot.slane %v694, 5
  %v697 = vshll.u32 %v629, 16
  %v699 = vrot.slane %v697, 6
  %v700 = vor.u32 %v696, %v699
  %v701 = vrot.slane %v700, 4
  %v703 = vshrl.u32 %v685, 16
  %v705 = vrot.slane %v703, 5
  %v706 = vshll.u32 %v685, 16
  %v708 = vrot.slane %v706, 6
  %v709 = vor.u32 %v705, %v708
  %v710 = vsel %vm355, %v701, %v709
  %v712 = vshrl.u32 %v630, 16
  %v714 = vrot.slane %v712, 5
  %v715 = vshll.u32 %v630, 16
  %v717 = vrot.slane %v715, 6
  %v718 = vor.u32 %v714, %v717
  %v719 = vrot.slane %v718, 4
  %v721 = vshrl.u32 %v686, 16
  %v723 = vrot.slane %v721, 5
  %v724 = vshll.u32 %v686, 16
  %v726 = vrot.slane %v724, 6
  %v727 = vor.u32 %v723, %v726
  %v728 = vsel %vm355, %v719, %v727
  %v730 = vshrl.u32 %v631, 16
  %v732 = vrot.slane %v730, 5
  %v733 = vshll.u32 %v631, 16
  %v735 = vrot.slane %v733, 6
  %v736 = vor.u32 %v732, %v735
  %v737 = vrot.slane %v736, 4
  %v739 = vshrl.u32 %v687, 16
  %v741 = vrot.slane %v739, 5
  %v742 = vshll.u32 %v687, 16
  %v744 = vrot.slane %v742, 6
  %v745 = vor.u32 %v741, %v744
  %v746 = vsel %vm355, %v737, %v745
  %v748 = vshrl.u32 %v632, 16
  %v750 = vrot.slane %v748, 5
  %v751 = vshll.u32 %v632, 16
  %v753 = vrot.slane %v751, 6
  %v754 = vor.u32 %v750, %v753
  %v755 = vrot.slane %v754, 4
  %v757 = vshrl.u32 %v688, 16
  %v759 = vrot.slane %v757, 5
  %v760 = vshll.u32 %v688, 16
  %v762 = vrot.slane %v760, 6
  %v763 = vor.u32 %v759, %v762
  %v764 = vsel %vm355, %v755, %v763
  %v766 = vshrl.u32 %v633, 16
  %v768 = vrot.slane %v766, 5
  %v769 = vshll.u32 %v633, 16
  %v771 = vrot.slane %v769, 6
  %v772 = vor.u32 %v768, %v771
  %v773 = vrot.slane %v772, 4
  %v775 = vshrl.u32 %v689, 16
  %v777 = vrot.slane %v775, 5
  %v778 = vshll.u32 %v689, 16
  %v780 = vrot.slane %v778, 6
  %v781 = vor.u32 %v777, %v780
  %v782 = vsel %vm355, %v773, %v781
  %v784 = vshrl.u32 %v634, 16
  %v786 = vrot.slane %v784, 5
  %v787 = vshll.u32 %v634, 16
  %v789 = vrot.slane %v787, 6
  %v790 = vor.u32 %v786, %v789
  %v791 = vrot.slane %v790, 4
  %v793 = vshrl.u32 %v690, 16
  %v795 = vrot.slane %v793, 5
  %v796 = vshll.u32 %v690, 16
  %v798 = vrot.slane %v796, 6
  %v799 = vor.u32 %v795, %v798
  %v800 = vsel %vm355, %v791, %v799
  %v802 = vshrl.u32 %v635, 16
  %v804 = vrot.slane %v802, 5
  %v805 = vshll.u32 %v635, 16
  %v807 = vrot.slane %v805, 6
  %v808 = vor.u32 %v804, %v807
  %v809 = vrot.slane %v808, 4
  %v811 = vshrl.u32 %v691, 16
  %v813 = vrot.slane %v811, 5
  %v814 = vshll.u32 %v691, 16
  %v816 = vrot.slane %v814, 6
  %v817 = vor.u32 %v813, %v816
  %v818 = vsel %vm355, %v809, %v817
  %v820 = vshrl.u32 %v636, 16
  %v822 = vrot.slane %v820, 5
  %v823 = vshll.u32 %v636, 16
  %v825 = vrot.slane %v823, 6
  %v826 = vor.u32 %v822, %v825
  %v827 = vrot.slane %v826, 4
  %v829 = vshrl.u32 %v692, 16
  %v831 = vrot.slane %v829, 5
  %v832 = vshll.u32 %v692, 16
  %v834 = vrot.slane %v832, 6
  %v835 = vor.u32 %v831, %v834
  %v836 = vsel %vm355, %v827, %v835
  %s837 = scalar_lea.vmem [#allocation2], 16
  %v838 = vld [vmem:[%s837] sm:$0xf]
  %v839 = vld [vmem:[%s837 + $0x8] sm:$0xf]
  %v840 = vld [vmem:[%s837 + $0x10] sm:$0xf]
  %v841 = vld [vmem:[%s837 + $0x18] sm:$0xf]
  %v842 = vld [vmem:[%s837 + $0x20] sm:$0xf]
  %v843 = vld [vmem:[%s837 + $0x28] sm:$0xf]
  %v844 = vld [vmem:[%s837 + $0x30] sm:$0xf]
  %v845 = vld [vmem:[%s837 + $0x38] sm:$0xf]
  %v846 = vld [vmem:[%s837 + $0x4] sm:$0x1]
  %v847 = vld [vmem:[%s837 + $0xc] sm:$0x1]
  %v848 = vld [vmem:[%s837 + $0x14] sm:$0x1]
  %v849 = vld [vmem:[%s837 + $0x1c] sm:$0x1]
  %v850 = vld [vmem:[%s837 + $0x24] sm:$0x1]
  %v851 = vld [vmem:[%s837 + $0x2c] sm:$0x1]
  %v852 = vld [vmem:[%s837 + $0x34] sm:$0x1]
  %v853 = vld [vmem:[%s837 + $0x3c] sm:$0x1]
  %v855 = vshrl.u32 %v838, 16
  %v857 = vrot.slane %v855, 4
  %v858 = vshll.u32 %v838, 16
  %v860 = vrot.slane %v858, 5
  %v861 = vor.u32 %v857, %v860
  %v862 = vrot.slane %v861, 4
  %v864 = vshll.u32 %v846, 16
  %v866 = vrot.slane %v864, 5
  %v867 = vsel %vm173, %v862, %v866
  %v869 = vshrl.u32 %v839, 16
  %v871 = vrot.slane %v869, 4
  %v872 = vshll.u32 %v839, 16
  %v874 = vrot.slane %v872, 5
  %v875 = vor.u32 %v871, %v874
  %v876 = vrot.slane %v875, 4
  %v878 = vshll.u32 %v847, 16
  %v880 = vrot.slane %v878, 5
  %v881 = vsel %vm173, %v876, %v880
  %v883 = vshrl.u32 %v840, 16
  %v885 = vrot.slane %v883, 4
  %v886 = vshll.u32 %v840, 16
  %v888 = vrot.slane %v886, 5
  %v889 = vor.u32 %v885, %v888
  %v890 = vrot.slane %v889, 4
  %v892 = vshll.u32 %v848, 16
  %v894 = vrot.slane %v892, 5
  %v895 = vsel %vm173, %v890, %v894
  %v897 = vshrl.u32 %v841, 16
  %v899 = vrot.slane %v897, 4
  %v900 = vshll.u32 %v841, 16
  %v902 = vrot.slane %v900, 5
  %v903 = vor.u32 %v899, %v902
  %v904 = vrot.slane %v903, 4
  %v906 = vshll.u32 %v849, 16
  %v908 = vrot.slane %v906, 5
  %v909 = vsel %vm173, %v904, %v908
  %v911 = vshrl.u32 %v842, 16
  %v913 = vrot.slane %v911, 4
  %v914 = vshll.u32 %v842, 16
  %v916 = vrot.slane %v914, 5
  %v917 = vor.u32 %v913, %v916
  %v918 = vrot.slane %v917, 4
  %v920 = vshll.u32 %v850, 16
  %v922 = vrot.slane %v920, 5
  %v923 = vsel %vm173, %v918, %v922
  %v925 = vshrl.u32 %v843, 16
  %v927 = vrot.slane %v925, 4
  %v928 = vshll.u32 %v843, 16
  %v930 = vrot.slane %v928, 5
  %v931 = vor.u32 %v927, %v930
  %v932 = vrot.slane %v931, 4
  %v934 = vshll.u32 %v851, 16
  %v936 = vrot.slane %v934, 5
  %v937 = vsel %vm173, %v932, %v936
  %v939 = vshrl.u32 %v844, 16
  %v941 = vrot.slane %v939, 4
  %v942 = vshll.u32 %v844, 16
  %v944 = vrot.slane %v942, 5
  %v945 = vor.u32 %v941, %v944
  %v946 = vrot.slane %v945, 4
  %v948 = vshll.u32 %v852, 16
  %v950 = vrot.slane %v948, 5
  %v951 = vsel %vm173, %v946, %v950
  %v953 = vshrl.u32 %v845, 16
  %v955 = vrot.slane %v953, 4
  %v956 = vshll.u32 %v845, 16
  %v958 = vrot.slane %v956, 5
  %v959 = vor.u32 %v955, %v958
  %v960 = vrot.slane %v959, 4
  %v962 = vshll.u32 %v853, 16
  %v964 = vrot.slane %v962, 5
  %v965 = vsel %vm173, %v960, %v964
  %v966 = vld [vmem:[%s837] sm:$0xe]
  %v967 = vld [vmem:[%s837 + $0x8] sm:$0xe]
  %v968 = vld [vmem:[%s837 + $0x10] sm:$0xe]
  %v969 = vld [vmem:[%s837 + $0x18] sm:$0xe]
  %v970 = vld [vmem:[%s837 + $0x20] sm:$0xe]
  %v971 = vld [vmem:[%s837 + $0x28] sm:$0xe]
  %v972 = vld [vmem:[%s837 + $0x30] sm:$0xe]
  %v973 = vld [vmem:[%s837 + $0x38] sm:$0xe]
  %v990 = vrot.slane %v966, 5
  %v991 = vrot.slane %v990, 4
  %v992 = vrot.slane %v846, 5
  %v993 = vsel %vm312, %v991, %v992
  %v994 = vrot.slane %v967, 5
  %v995 = vrot.slane %v994, 4
  %v996 = vrot.slane %v847, 5
  %v997 = vsel %vm312, %v995, %v996
  %v998 = vrot.slane %v968, 5
  %v999 = vrot.slane %v998, 4
  %v1000 = vrot.slane %v848, 5
  %v1001 = vsel %vm312, %v999, %v1000
  %v1002 = vrot.slane %v969, 5
  %v1003 = vrot.slane %v1002, 4
  %v1004 = vrot.slane %v849, 5
  %v1005 = vsel %vm312, %v1003, %v1004
  %v1006 = vrot.slane %v970, 5
  %v1007 = vrot.slane %v1006, 4
  %v1008 = vrot.slane %v850, 5
  %v1009 = vsel %vm312, %v1007, %v1008
  %v1010 = vrot.slane %v971, 5
  %v1011 = vrot.slane %v1010, 4
  %v1012 = vrot.slane %v851, 5
  %v1013 = vsel %vm312, %v1011, %v1012
  %v1014 = vrot.slane %v972, 5
  %v1015 = vrot.slane %v1014, 4
  %v1016 = vrot.slane %v852, 5
  %v1017 = vsel %vm312, %v1015, %v1016
  %v1018 = vrot.slane %v973, 5
  %v1019 = vrot.slane %v1018, 4
  %v1020 = vrot.slane %v853, 5
  %v1021 = vsel %vm312, %v1019, %v1020
  %v1022 = vld [vmem:[%s837 + $0x4] sm:$0x3]
  %v1023 = vld [vmem:[%s837 + $0xc] sm:$0x3]
  %v1024 = vld [vmem:[%s837 + $0x14] sm:$0x3]
  %v1025 = vld [vmem:[%s837 + $0x1c] sm:$0x3]
  %v1026 = vld [vmem:[%s837 + $0x24] sm:$0x3]
  %v1027 = vld [vmem:[%s837 + $0x2c] sm:$0x3]
  %v1028 = vld [vmem:[%s837 + $0x34] sm:$0x3]
  %v1029 = vld [vmem:[%s837 + $0x3c] sm:$0x3]
  %v1031 = vshrl.u32 %v966, 16
  %v1033 = vrot.slane %v1031, 5
  %v1034 = vshll.u32 %v966, 16
  %v1036 = vrot.slane %v1034, 6
  %v1037 = vor.u32 %v1033, %v1036
  %v1038 = vrot.slane %v1037, 4
  %v1040 = vshrl.u32 %v1022, 16
  %v1042 = vrot.slane %v1040, 5
  %v1043 = vshll.u32 %v1022, 16
  %v1045 = vrot.slane %v1043, 6
  %v1046 = vor.u32 %v1042, %v1045
  %v1047 = vsel %vm355, %v1038, %v1046
  %v1049 = vshrl.u32 %v967, 16
  %v1051 = vrot.slane %v1049, 5
  %v1052 = vshll.u32 %v967, 16
  %v1054 = vrot.slane %v1052, 6
  %v1055 = vor.u32 %v1051, %v1054
  %v1056 = vrot.slane %v1055, 4
  %v1058 = vshrl.u32 %v1023, 16
  %v1060 = vrot.slane %v1058, 5
  %v1061 = vshll.u32 %v1023, 16
  %v1063 = vrot.slane %v1061, 6
  %v1064 = vor.u32 %v1060, %v1063
  %v1065 = vsel %vm355, %v1056, %v1064
  %v1067 = vshrl.u32 %v968, 16
  %v1069 = vrot.slane %v1067, 5
  %v1070 = vshll.u32 %v968, 16
  %v1072 = vrot.slane %v1070, 6
  %v1073 = vor.u32 %v1069, %v1072
  %v1074 = vrot.slane %v1073, 4
  %v1076 = vshrl.u32 %v1024, 16
  %v1078 = vrot.slane %v1076, 5
  %v1079 = vshll.u32 %v1024, 16
  %v1081 = vrot.slane %v1079, 6
  %v1082 = vor.u32 %v1078, %v1081
  %v1083 = vsel %vm355, %v1074, %v1082
  %v1085 = vshrl.u32 %v969, 16
  %v1087 = vrot.slane %v1085, 5
  %v1088 = vshll.u32 %v969, 16
  %v1090 = vrot.slane %v1088, 6
  %v1091 = vor.u32 %v1087, %v1090
  %v1092 = vrot.slane %v1091, 4
  %v1094 = vshrl.u32 %v1025, 16
  %v1096 = vrot.slane %v1094, 5
  %v1097 = vshll.u32 %v1025, 16
  %v1099 = vrot.slane %v1097, 6
  %v1100 = vor.u32 %v1096, %v1099
  %v1101 = vsel %vm355, %v1092, %v1100
  %v1103 = vshrl.u32 %v970, 16
  %v1105 = vrot.slane %v1103, 5
  %v1106 = vshll.u32 %v970, 16
  %v1108 = vrot.slane %v1106, 6
  %v1109 = vor.u32 %v1105, %v1108
  %v1110 = vrot.slane %v1109, 4
  %v1112 = vshrl.u32 %v1026, 16
  %v1114 = vrot.slane %v1112, 5
  %v1115 = vshll.u32 %v1026, 16
  %v1117 = vrot.slane %v1115, 6
  %v1118 = vor.u32 %v1114, %v1117
  %v1119 = vsel %vm355, %v1110, %v1118
  %v1121 = vshrl.u32 %v971, 16
  %v1123 = vrot.slane %v1121, 5
  %v1124 = vshll.u32 %v971, 16
  %v1126 = vrot.slane %v1124, 6
  %v1127 = vor.u32 %v1123, %v1126
  %v1128 = vrot.slane %v1127, 4
  %v1130 = vshrl.u32 %v1027, 16
  %v1132 = vrot.slane %v1130, 5
  %v1133 = vshll.u32 %v1027, 16
  %v1135 = vrot.slane %v1133, 6
  %v1136 = vor.u32 %v1132, %v1135
  %v1137 = vsel %vm355, %v1128, %v1136
  %v1139 = vshrl.u32 %v972, 16
  %v1141 = vrot.slane %v1139, 5
  %v1142 = vshll.u32 %v972, 16
  %v1144 = vrot.slane %v1142, 6
  %v1145 = vor.u32 %v1141, %v1144
  %v1146 = vrot.slane %v1145, 4
  %v1148 = vshrl.u32 %v1028, 16
  %v1150 = vrot.slane %v1148, 5
  %v1151 = vshll.u32 %v1028, 16
  %v1153 = vrot.slane %v1151, 6
  %v1154 = vor.u32 %v1150, %v1153
  %v1155 = vsel %vm355, %v1146, %v1154
  %v1157 = vshrl.u32 %v973, 16
  %v1159 = vrot.slane %v1157, 5
  %v1160 = vshll.u32 %v973, 16
  %v1162 = vrot.slane %v1160, 6
  %v1163 = vor.u32 %v1159, %v1162
  %v1164 = vrot.slane %v1163, 4
  %v1166 = vshrl.u32 %v1029, 16
  %v1168 = vrot.slane %v1166, 5
  %v1169 = vshll.u32 %v1029, 16
  %v1171 = vrot.slane %v1169, 6
  %v1172 = vor.u32 %v1168, %v1171
  %v1173 = vsel %vm355, %v1164, %v1172
  %s1174 = scalar_lea.vmem [#allocation2], 24
  %v1175 = vld [vmem:[%s1174] sm:$0xf]
  %v1176 = vld [vmem:[%s1174 + $0x8] sm:$0xf]
  %v1177 = vld [vmem:[%s1174 + $0x10] sm:$0xf]
  %v1178 = vld [vmem:[%s1174 + $0x18] sm:$0xf]
  %v1179 = vld [vmem:[%s1174 + $0x20] sm:$0xf]
  %v1180 = vld [vmem:[%s1174 + $0x28] sm:$0xf]
  %v1181 = vld [vmem:[%s1174 + $0x30] sm:$0xf]
  %v1182 = vld [vmem:[%s1174 + $0x38] sm:$0xf]
  %v1183 = vld [vmem:[%s1174 + $0x4] sm:$0x1]
  %v1184 = vld [vmem:[%s1174 + $0xc] sm:$0x1]
  %v1185 = vld [vmem:[%s1174 + $0x14] sm:$0x1]
  %v1186 = vld [vmem:[%s1174 + $0x1c] sm:$0x1]
  %v1187 = vld [vmem:[%s1174 + $0x24] sm:$0x1]
  %v1188 = vld [vmem:[%s1174 + $0x2c] sm:$0x1]
  %v1189 = vld [vmem:[%s1174 + $0x34] sm:$0x1]
  %v1190 = vld [vmem:[%s1174 + $0x3c] sm:$0x1]
  %v1192 = vshrl.u32 %v1175, 16
  %v1194 = vrot.slane %v1192, 4
  %v1195 = vshll.u32 %v1175, 16
  %v1197 = vrot.slane %v1195, 5
  %v1198 = vor.u32 %v1194, %v1197
  %v1199 = vrot.slane %v1198, 4
  %v1201 = vshll.u32 %v1183, 16
  %v1203 = vrot.slane %v1201, 5
  %v1204 = vsel %vm173, %v1199, %v1203
  %v1206 = vshrl.u32 %v1176, 16
  %v1208 = vrot.slane %v1206, 4
  %v1209 = vshll.u32 %v1176, 16
  %v1211 = vrot.slane %v1209, 5
  %v1212 = vor.u32 %v1208, %v1211
  %v1213 = vrot.slane %v1212, 4
  %v1215 = vshll.u32 %v1184, 16
  %v1217 = vrot.slane %v1215, 5
  %v1218 = vsel %vm173, %v1213, %v1217
  %v1220 = vshrl.u32 %v1177, 16
  %v1222 = vrot.slane %v1220, 4
  %v1223 = vshll.u32 %v1177, 16
  %v1225 = vrot.slane %v1223, 5
  %v1226 = vor.u32 %v1222, %v1225
  %v1227 = vrot.slane %v1226, 4
  %v1229 = vshll.u32 %v1185, 16
  %v1231 = vrot.slane %v1229, 5
  %v1232 = vsel %vm173, %v1227, %v1231
  %v1234 = vshrl.u32 %v1178, 16
  %v1236 = vrot.slane %v1234, 4
  %v1237 = vshll.u32 %v1178, 16
  %v1239 = vrot.slane %v1237, 5
  %v1240 = vor.u32 %v1236, %v1239
  %v1241 = vrot.slane %v1240, 4
  %v1243 = vshll.u32 %v1186, 16
  %v1245 = vrot.slane %v1243, 5
  %v1246 = vsel %vm173, %v1241, %v1245
  %v1248 = vshrl.u32 %v1179, 16
  %v1250 = vrot.slane %v1248, 4
  %v1251 = vshll.u32 %v1179, 16
  %v1253 = vrot.slane %v1251, 5
  %v1254 = vor.u32 %v1250, %v1253
  %v1255 = vrot.slane %v1254, 4
  %v1257 = vshll.u32 %v1187, 16
  %v1259 = vrot.slane %v1257, 5
  %v1260 = vsel %vm173, %v1255, %v1259
  %v1262 = vshrl.u32 %v1180, 16
  %v1264 = vrot.slane %v1262, 4
  %v1265 = vshll.u32 %v1180, 16
  %v1267 = vrot.slane %v1265, 5
  %v1268 = vor.u32 %v1264, %v1267
  %v1269 = vrot.slane %v1268, 4
  %v1271 = vshll.u32 %v1188, 16
  %v1273 = vrot.slane %v1271, 5
  %v1274 = vsel %vm173, %v1269, %v1273
  %v1276 = vshrl.u32 %v1181, 16
  %v1278 = vrot.slane %v1276, 4
  %v1279 = vshll.u32 %v1181, 16
  %v1281 = vrot.slane %v1279, 5
  %v1282 = vor.u32 %v1278, %v1281
  %v1283 = vrot.slane %v1282, 4
  %v1285 = vshll.u32 %v1189, 16
  %v1287 = vrot.slane %v1285, 5
  %v1288 = vsel %vm173, %v1283, %v1287
  %v1290 = vshrl.u32 %v1182, 16
  %v1292 = vrot.slane %v1290, 4
  %v1293 = vshll.u32 %v1182, 16
  %v1295 = vrot.slane %v1293, 5
  %v1296 = vor.u32 %v1292, %v1295
  %v1297 = vrot.slane %v1296, 4
  %v1299 = vshll.u32 %v1190, 16
  %v1301 = vrot.slane %v1299, 5
  %v1302 = vsel %vm173, %v1297, %v1301
  %v1303 = vld [vmem:[%s1174] sm:$0xe]
  %v1304 = vld [vmem:[%s1174 + $0x8] sm:$0xe]
  %v1305 = vld [vmem:[%s1174 + $0x10] sm:$0xe]
  %v1306 = vld [vmem:[%s1174 + $0x18] sm:$0xe]
  %v1307 = vld [vmem:[%s1174 + $0x20] sm:$0xe]
  %v1308 = vld [vmem:[%s1174 + $0x28] sm:$0xe]
  %v1309 = vld [vmem:[%s1174 + $0x30] sm:$0xe]
  %v1310 = vld [vmem:[%s1174 + $0x38] sm:$0xe]
  %v1327 = vrot.slane %v1303, 5
  %v1328 = vrot.slane %v1327, 4
  %v1329 = vrot.slane %v1183, 5
  %v1330 = vsel %vm312, %v1328, %v1329
  %v1331 = vrot.slane %v1304, 5
  %v1332 = vrot.slane %v1331, 4
  %v1333 = vrot.slane %v1184, 5
  %v1334 = vsel %vm312, %v1332, %v1333
  %v1335 = vrot.slane %v1305, 5
  %v1336 = vrot.slane %v1335, 4
  %v1337 = vrot.slane %v1185, 5
  %v1338 = vsel %vm312, %v1336, %v1337
  %v1339 = vrot.slane %v1306, 5
  %v1340 = vrot.slane %v1339, 4
  %v1341 = vrot.slane %v1186, 5
  %v1342 = vsel %vm312, %v1340, %v1341
  %v1343 = vrot.slane %v1307, 5
  %v1344 = vrot.slane %v1343, 4
  %v1345 = vrot.slane %v1187, 5
  %v1346 = vsel %vm312, %v1344, %v1345
  %v1347 = vrot.slane %v1308, 5
  %v1348 = vrot.slane %v1347, 4
  %v1349 = vrot.slane %v1188, 5
  %v1350 = vsel %vm312, %v1348, %v1349
  %v1351 = vrot.slane %v1309, 5
  %v1352 = vrot.slane %v1351, 4
  %v1353 = vrot.slane %v1189, 5
  %v1354 = vsel %vm312, %v1352, %v1353
  %v1355 = vrot.slane %v1310, 5
  %v1356 = vrot.slane %v1355, 4
  %v1357 = vrot.slane %v1190, 5
  %v1358 = vsel %vm312, %v1356, %v1357
  %v1359 = vld [vmem:[%s1174 + $0x4] sm:$0x3]
  %v1360 = vld [vmem:[%s1174 + $0xc] sm:$0x3]
  %v1361 = vld [vmem:[%s1174 + $0x14] sm:$0x3]
  %v1362 = vld [vmem:[%s1174 + $0x1c] sm:$0x3]
  %v1363 = vld [vmem:[%s1174 + $0x24] sm:$0x3]
  %v1364 = vld [vmem:[%s1174 + $0x2c] sm:$0x3]
  %v1365 = vld [vmem:[%s1174 + $0x34] sm:$0x3]
  %v1366 = vld [vmem:[%s1174 + $0x3c] sm:$0x3]
  %v1368 = vshrl.u32 %v1303, 16
  %v1370 = vrot.slane %v1368, 5
  %v1371 = vshll.u32 %v1303, 16
  %v1373 = vrot.slane %v1371, 6
  %v1374 = vor.u32 %v1370, %v1373
  %v1375 = vrot.slane %v1374, 4
  %v1377 = vshrl.u32 %v1359, 16
  %v1379 = vrot.slane %v1377, 5
  %v1380 = vshll.u32 %v1359, 16
  %v1382 = vrot.slane %v1380, 6
  %v1383 = vor.u32 %v1379, %v1382
  %v1384 = vsel %vm355, %v1375, %v1383
  %v1386 = vshrl.u32 %v1304, 16
  %v1388 = vrot.slane %v1386, 5
  %v1389 = vshll.u32 %v1304, 16
  %v1391 = vrot.slane %v1389, 6
  %v1392 = vor.u32 %v1388, %v1391
  %v1393 = vrot.slane %v1392, 4
  %v1395 = vshrl.u32 %v1360, 16
  %v1397 = vrot.slane %v1395, 5
  %v1398 = vshll.u32 %v1360, 16
  %v1400 = vrot.slane %v1398, 6
  %v1401 = vor.u32 %v1397, %v1400
  %v1402 = vsel %vm355, %v1393, %v1401
  %v1404 = vshrl.u32 %v1305, 16
  %v1406 = vrot.slane %v1404, 5
  %v1407 = vshll.u32 %v1305, 16
  %v1409 = vrot.slane %v1407, 6
  %v1410 = vor.u32 %v1406, %v1409
  %v1411 = vrot.slane %v1410, 4
  %v1413 = vshrl.u32 %v1361, 16
  %v1415 = vrot.slane %v1413, 5
  %v1416 = vshll.u32 %v1361, 16
  %v1418 = vrot.slane %v1416, 6
  %v1419 = vor.u32 %v1415, %v1418
  %v1420 = vsel %vm355, %v1411, %v1419
  %v1422 = vshrl.u32 %v1306, 16
  %v1424 = vrot.slane %v1422, 5
  %v1425 = vshll.u32 %v1306, 16
  %v1427 = vrot.slane %v1425, 6
  %v1428 = vor.u32 %v1424, %v1427
  %v1429 = vrot.slane %v1428, 4
  %v1431 = vshrl.u32 %v1362, 16
  %v1433 = vrot.slane %v1431, 5
  %v1434 = vshll.u32 %v1362, 16
  %v1436 = vrot.slane %v1434, 6
  %v1437 = vor.u32 %v1433, %v1436
  %v1438 = vsel %vm355, %v1429, %v1437
  %v1440 = vshrl.u32 %v1307, 16
  %v1442 = vrot.slane %v1440, 5
  %v1443 = vshll.u32 %v1307, 16
  %v1445 = vrot.slane %v1443, 6
  %v1446 = vor.u32 %v1442, %v1445
  %v1447 = vrot.slane %v1446, 4
  %v1449 = vshrl.u32 %v1363, 16
  %v1451 = vrot.slane %v1449, 5
  %v1452 = vshll.u32 %v1363, 16
  %v1454 = vrot.slane %v1452, 6
  %v1455 = vor.u32 %v1451, %v1454
  %v1456 = vsel %vm355, %v1447, %v1455
  %v1458 = vshrl.u32 %v1308, 16
  %v1460 = vrot.slane %v1458, 5
  %v1461 = vshll.u32 %v1308, 16
  %v1463 = vrot.slane %v1461, 6
  %v1464 = vor.u32 %v1460, %v1463
  %v1465 = vrot.slane %v1464, 4
  %v1467 = vshrl.u32 %v1364, 16
  %v1469 = vrot.slane %v1467, 5
  %v1470 = vshll.u32 %v1364, 16
  %v1472 = vrot.slane %v1470, 6
  %v1473 = vor.u32 %v1469, %v1472
  %v1474 = vsel %vm355, %v1465, %v1473
  %v1476 = vshrl.u32 %v1309, 16
  %v1478 = vrot.slane %v1476, 5
  %v1479 = vshll.u32 %v1309, 16
  %v1481 = vrot.slane %v1479, 6
  %v1482 = vor.u32 %v1478, %v1481
  %v1483 = vrot.slane %v1482, 4
  %v1485 = vshrl.u32 %v1365, 16
  %v1487 = vrot.slane %v1485, 5
  %v1488 = vshll.u32 %v1365, 16
  %v1490 = vrot.slane %v1488, 6
  %v1491 = vor.u32 %v1487, %v1490
  %v1492 = vsel %vm355, %v1483, %v1491
  %v1494 = vshrl.u32 %v1310, 16
  %v1496 = vrot.slane %v1494, 5
  %v1497 = vshll.u32 %v1310, 16
  %v1499 = vrot.slane %v1497, 6
  %v1500 = vor.u32 %v1496, %v1499
  %v1501 = vrot.slane %v1500, 4
  %v1503 = vshrl.u32 %v1366, 16
  %v1505 = vrot.slane %v1503, 5
  %v1506 = vshll.u32 %v1366, 16
  %v1508 = vrot.slane %v1506, 6
  %v1509 = vor.u32 %v1505, %v1508
  %v1510 = vsel %vm355, %v1501, %v1509
  %v1519 = vunpack.c.l.b16 %v155
  %v1520 = vunpack.c.l.b16 %v156
  %v1521 = vunpack.c.l.b16 %v157
  %v1522 = vunpack.c.l.b16 %v158
  %v1523 = vunpack.c.l.b16 %v159
  %v1524 = vunpack.c.l.b16 %v160
  %v1525 = vunpack.c.l.b16 %v161
  %v1526 = vunpack.c.l.b16 %v162
  %v1527 = vpack.c.b16 %v1520, %v1519
  %v1528 = vpack.c.b16 %v1522, %v1521
  %v1529 = vpack.c.b16 %v1524, %v1523
  %v1530 = vpack.c.b16 %v1526, %v1525
  %v1531 = vunpack.c.l.b16 %v187
  %v1532 = vunpack.c.l.b16 %v201
  %v1533 = vunpack.c.l.b16 %v215
  %v1534 = vunpack.c.l.b16 %v229
  %v1535 = vunpack.c.l.b16 %v243
  %v1536 = vunpack.c.l.b16 %v257
  %v1537 = vunpack.c.l.b16 %v271
  %v1538 = vunpack.c.l.b16 %v285
  %v1539 = vpack.c.b16 %v1532, %v1531
  %v1540 = vpack.c.b16 %v1534, %v1533
  %v1541 = vpack.c.b16 %v1536, %v1535
  %v1542 = vpack.c.b16 %v1538, %v1537
  %1543 = vrot.lane.b32.xlu0 %v1539, 8
  %v1544 = vpop.permute.xlu0 %1543
  %1545 = vrot.lane.b32.xlu0 %v1540, 8
  %v1546 = vpop.permute.xlu0 %1545
  %1547 = vrot.lane.b32.xlu0 %v1541, 8
  %v1548 = vpop.permute.xlu0 %1547
  %1549 = vrot.lane.b32.xlu0 %v1542, 8
  %v1550 = vpop.permute.xlu0 %1549
  %v1551 = vunpack.c.l.b16 %v316
  %v1552 = vunpack.c.l.b16 %v320
  %v1553 = vunpack.c.l.b16 %v324
  %v1554 = vunpack.c.l.b16 %v328
  %v1555 = vunpack.c.l.b16 %v332
  %v1556 = vunpack.c.l.b16 %v336
  %v1557 = vunpack.c.l.b16 %v340
  %v1558 = vunpack.c.l.b16 %v344
  %v1559 = vpack.c.b16 %v1552, %v1551
  %v1560 = vpack.c.b16 %v1554, %v1553
  %v1561 = vpack.c.b16 %v1556, %v1555
  %v1562 = vpack.c.b16 %v1558, %v1557
  %1563 = vrot.lane.b32.xlu0 %v1559, 16
  %v1564 = vpop.permute.xlu0 %1563
  %1565 = vrot.lane.b32.xlu0 %v1560, 16
  %v1566 = vpop.permute.xlu0 %1565
  %1567 = vrot.lane.b32.xlu0 %v1561, 16
  %v1568 = vpop.permute.xlu0 %1567
  %1569 = vrot.lane.b32.xlu0 %v1562, 16
  %v1570 = vpop.permute.xlu0 %1569
  %v1571 = vunpack.c.l.b16 %v373
  %v1572 = vunpack.c.l.b16 %v391
  %v1573 = vunpack.c.l.b16 %v409
  %v1574 = vunpack.c.l.b16 %v427
  %v1575 = vunpack.c.l.b16 %v445
  %v1576 = vunpack.c.l.b16 %v463
  %v1577 = vunpack.c.l.b16 %v481
  %v1578 = vunpack.c.l.b16 %v499
  %v1579 = vpack.c.b16 %v1572, %v1571
  %v1580 = vpack.c.b16 %v1574, %v1573
  %v1581 = vpack.c.b16 %v1576, %v1575
  %v1582 = vpack.c.b16 %v1578, %v1577
  %1583 = vrot.lane.b32.xlu0 %v1579, 24
  %v1584 = vpop.permute.xlu0 %1583
  %1585 = vrot.lane.b32.xlu0 %v1580, 24
  %v1586 = vpop.permute.xlu0 %1585
  %1587 = vrot.lane.b32.xlu0 %v1581, 24
  %v1588 = vpop.permute.xlu0 %1587
  %1589 = vrot.lane.b32.xlu0 %v1582, 24
  %v1590 = vpop.permute.xlu0 %1589
  %v1599 = vunpack.c.l.b16 %v501
  %v1600 = vunpack.c.l.b16 %v502
  %v1601 = vunpack.c.l.b16 %v503
  %v1602 = vunpack.c.l.b16 %v504
  %v1603 = vunpack.c.l.b16 %v505
  %v1604 = vunpack.c.l.b16 %v506
  %v1605 = vunpack.c.l.b16 %v507
  %v1606 = vunpack.c.l.b16 %v508
  %v1607 = vpack.c.b16 %v1600, %v1599
  %v1608 = vpack.c.b16 %v1602, %v1601
  %v1609 = vpack.c.b16 %v1604, %v1603
  %v1610 = vpack.c.b16 %v1606, %v1605
  %1611 = vrot.lane.b32.xlu0 %v1607, 32
  %v1612 = vpop.permute.xlu0 %1611
  %1613 = vrot.lane.b32.xlu0 %v1608, 32
  %v1614 = vpop.permute.xlu0 %1613
  %1615 = vrot.lane.b32.xlu0 %v1609, 32
  %v1616 = vpop.permute.xlu0 %1615
  %1617 = vrot.lane.b32.xlu0 %v1610, 32
  %v1618 = vpop.permute.xlu0 %1617
  %v1619 = vunpack.c.l.b16 %v530
  %v1620 = vunpack.c.l.b16 %v544
  %v1621 = vunpack.c.l.b16 %v558
  %v1622 = vunpack.c.l.b16 %v572
  %v1623 = vunpack.c.l.b16 %v586
  %v1624 = vunpack.c.l.b16 %v600
  %v1625 = vunpack.c.l.b16 %v614
  %v1626 = vunpack.c.l.b16 %v628
  %v1627 = vpack.c.b16 %v1620, %v1619
  %v1628 = vpack.c.b16 %v1622, %v1621
  %v1629 = vpack.c.b16 %v1624, %v1623
  %v1630 = vpack.c.b16 %v1626, %v1625
  %1631 = vrot.lane.b32.xlu0 %v1627, 40
  %v1632 = vpop.permute.xlu0 %1631
  %1633 = vrot.lane.b32.xlu0 %v1628, 40
  %v1634 = vpop.permute.xlu0 %1633
  %1635 = vrot.lane.b32.xlu0 %v1629, 40
  %v1636 = vpop.permute.xlu0 %1635
  %1637 = vrot.lane.b32.xlu0 %v1630, 40
  %v1638 = vpop.permute.xlu0 %1637
  %v1639 = vunpack.c.l.b16 %v656
  %v1640 = vunpack.c.l.b16 %v660
  %v1641 = vunpack.c.l.b16 %v664
  %v1642 = vunpack.c.l.b16 %v668
  %v1643 = vunpack.c.l.b16 %v672
  %v1644 = vunpack.c.l.b16 %v676
  %v1645 = vunpack.c.l.b16 %v680
  %v1646 = vunpack.c.l.b16 %v684
  %v1647 = vpack.c.b16 %v1640, %v1639
  %v1648 = vpack.c.b16 %v1642, %v1641
  %v1649 = vpack.c.b16 %v1644, %v1643
  %v1650 = vpack.c.b16 %v1646, %v1645
  %1651 = vrot.lane.b32.xlu0 %v1647, 48
  %v1652 = vpop.permute.xlu0 %1651
  %1653 = vrot.lane.b32.xlu0 %v1648, 48
  %v1654 = vpop.permute.xlu0 %1653
  %1655 = vrot.lane.b32.xlu0 %v1649, 48
  %v1656 = vpop.permute.xlu0 %1655
  %1657 = vrot.lane.b32.xlu0 %v1650, 48
  %v1658 = vpop.permute.xlu0 %1657
  %v1659 = vunpack.c.l.b16 %v710
  %v1660 = vunpack.c.l.b16 %v728
  %v1661 = vunpack.c.l.b16 %v746
  %v1662 = vunpack.c.l.b16 %v764
  %v1663 = vunpack.c.l.b16 %v782
  %v1664 = vunpack.c.l.b16 %v800
  %v1665 = vunpack.c.l.b16 %v818
  %v1666 = vunpack.c.l.b16 %v836
  %v1667 = vpack.c.b16 %v1660, %v1659
  %v1668 = vpack.c.b16 %v1662, %v1661
  %v1669 = vpack.c.b16 %v1664, %v1663
  %v1670 = vpack.c.b16 %v1666, %v1665
  %1671 = vrot.lane.b32.xlu0 %v1667, 56
  %v1672 = vpop.permute.xlu0 %1671
  %1673 = vrot.lane.b32.xlu0 %v1668, 56
  %v1674 = vpop.permute.xlu0 %1673
  %1675 = vrot.lane.b32.xlu0 %v1669, 56
  %v1676 = vpop.permute.xlu0 %1675
  %1677 = vrot.lane.b32.xlu0 %v1670, 56
  %v1678 = vpop.permute.xlu0 %1677
  %v1687 = vunpack.c.l.b16 %v838
  %v1688 = vunpack.c.l.b16 %v839
  %v1689 = vunpack.c.l.b16 %v840
  %v1690 = vunpack.c.l.b16 %v841
  %v1691 = vunpack.c.l.b16 %v842
  %v1692 = vunpack.c.l.b16 %v843
  %v1693 = vunpack.c.l.b16 %v844
  %v1694 = vunpack.c.l.b16 %v845
  %v1695 = vpack.c.b16 %v1688, %v1687
  %v1696 = vpack.c.b16 %v1690, %v1689
  %v1697 = vpack.c.b16 %v1692, %v1691
  %v1698 = vpack.c.b16 %v1694, %v1693
  %1699 = vrot.lane.b32.xlu0 %v1695, 64
  %v1700 = vpop.permute.xlu0 %1699
  %1701 = vrot.lane.b32.xlu0 %v1696, 64
  %v1702 = vpop.permute.xlu0 %1701
  %1703 = vrot.lane.b32.xlu0 %v1697, 64
  %v1704 = vpop.permute.xlu0 %1703
  %1705 = vrot.lane.b32.xlu0 %v1698, 64
  %v1706 = vpop.permute.xlu0 %1705
  %v1707 = vunpack.c.l.b16 %v867
  %v1708 = vunpack.c.l.b16 %v881
  %v1709 = vunpack.c.l.b16 %v895
  %v1710 = vunpack.c.l.b16 %v909
  %v1711 = vunpack.c.l.b16 %v923
  %v1712 = vunpack.c.l.b16 %v937
  %v1713 = vunpack.c.l.b16 %v951
  %v1714 = vunpack.c.l.b16 %v965
  %v1715 = vpack.c.b16 %v1708, %v1707
  %v1716 = vpack.c.b16 %v1710, %v1709
  %v1717 = vpack.c.b16 %v1712, %v1711
  %v1718 = vpack.c.b16 %v1714, %v1713
  %1719 = vrot.lane.b32.xlu0 %v1715, 72
  %v1720 = vpop.permute.xlu0 %1719
  %1721 = vrot.lane.b32.xlu0 %v1716, 72
  %v1722 = vpop.permute.xlu0 %1721
  %1723 = vrot.lane.b32.xlu0 %v1717, 72
  %v1724 = vpop.permute.xlu0 %1723
  %1725 = vrot.lane.b32.xlu0 %v1718, 72
  %v1726 = vpop.permute.xlu0 %1725
  %v1727 = vunpack.c.l.b16 %v993
  %v1728 = vunpack.c.l.b16 %v997
  %v1729 = vunpack.c.l.b16 %v1001
  %v1730 = vunpack.c.l.b16 %v1005
  %v1731 = vunpack.c.l.b16 %v1009
  %v1732 = vunpack.c.l.b16 %v1013
  %v1733 = vunpack.c.l.b16 %v1017
  %v1734 = vunpack.c.l.b16 %v1021
  %v1735 = vpack.c.b16 %v1728, %v1727
  %v1736 = vpack.c.b16 %v1730, %v1729
  %v1737 = vpack.c.b16 %v1732, %v1731
  %v1738 = vpack.c.b16 %v1734, %v1733
  %1739 = vrot.lane.b32.xlu0 %v1735, 80
  %v1740 = vpop.permute.xlu0 %1739
  %1741 = vrot.lane.b32.xlu0 %v1736, 80
  %v1742 = vpop.permute.xlu0 %1741
  %1743 = vrot.lane.b32.xlu0 %v1737, 80
  %v1744 = vpop.permute.xlu0 %1743
  %1745 = vrot.lane.b32.xlu0 %v1738, 80
  %v1746 = vpop.permute.xlu0 %1745
  %v1747 = vunpack.c.l.b16 %v1047
  %v1748 = vunpack.c.l.b16 %v1065
  %v1749 = vunpack.c.l.b16 %v1083
  %v1750 = vunpack.c.l.b16 %v1101
  %v1751 = vunpack.c.l.b16 %v1119
  %v1752 = vunpack.c.l.b16 %v1137
  %v1753 = vunpack.c.l.b16 %v1155
  %v1754 = vunpack.c.l.b16 %v1173
  %v1755 = vpack.c.b16 %v1748, %v1747
  %v1756 = vpack.c.b16 %v1750, %v1749
  %v1757 = vpack.c.b16 %v1752, %v1751
  %v1758 = vpack.c.b16 %v1754, %v1753
  %1759 = vrot.lane.b32.xlu0 %v1755, 88
  %v1760 = vpop.permute.xlu0 %1759
  %1761 = vrot.lane.b32.xlu0 %v1756, 88
  %v1762 = vpop.permute.xlu0 %1761
  %1763 = vrot.lane.b32.xlu0 %v1757, 88
  %v1764 = vpop.permute.xlu0 %1763
  %1765 = vrot.lane.b32.xlu0 %v1758, 88
  %v1766 = vpop.permute.xlu0 %1765
  %v1775 = vunpack.c.l.b16 %v1175
  %v1776 = vunpack.c.l.b16 %v1176
  %v1777 = vunpack.c.l.b16 %v1177
  %v1778 = vunpack.c.l.b16 %v1178
  %v1779 = vunpack.c.l.b16 %v1179
  %v1780 = vunpack.c.l.b16 %v1180
  %v1781 = vunpack.c.l.b16 %v1181
  %v1782 = vunpack.c.l.b16 %v1182
  %v1783 = vpack.c.b16 %v1776, %v1775
  %v1784 = vpack.c.b16 %v1778, %v1777
  %v1785 = vpack.c.b16 %v1780, %v1779
  %v1786 = vpack.c.b16 %v1782, %v1781
  %1787 = vrot.lane.b32.xlu0 %v1783, 96
  %v1788 = vpop.permute.xlu0 %1787
  %1789 = vrot.lane.b32.xlu0 %v1784, 96
  %v1790 = vpop.permute.xlu0 %1789
  %1791 = vrot.lane.b32.xlu0 %v1785, 96
  %v1792 = vpop.permute.xlu0 %1791
  %1793 = vrot.lane.b32.xlu0 %v1786, 96
  %v1794 = vpop.permute.xlu0 %1793
  %v1795 = vunpack.c.l.b16 %v1204
  %v1796 = vunpack.c.l.b16 %v1218
  %v1797 = vunpack.c.l.b16 %v1232
  %v1798 = vunpack.c.l.b16 %v1246
  %v1799 = vunpack.c.l.b16 %v1260
  %v1800 = vunpack.c.l.b16 %v1274
  %v1801 = vunpack.c.l.b16 %v1288
  %v1802 = vunpack.c.l.b16 %v1302
  %v1803 = vpack.c.b16 %v1796, %v1795
  %v1804 = vpack.c.b16 %v1798, %v1797
  %v1805 = vpack.c.b16 %v1800, %v1799
  %v1806 = vpack.c.b16 %v1802, %v1801
  %1807 = vrot.lane.b32.xlu0 %v1803, 104
  %v1808 = vpop.permute.xlu0 %1807
  %1809 = vrot.lane.b32.xlu0 %v1804, 104
  %v1810 = vpop.permute.xlu0 %1809
  %1811 = vrot.lane.b32.xlu0 %v1805, 104
  %v1812 = vpop.permute.xlu0 %1811
  %1813 = vrot.lane.b32.xlu0 %v1806, 104
  %v1814 = vpop.permute.xlu0 %1813
  %v1815 = vunpack.c.l.b16 %v1330
  %v1816 = vunpack.c.l.b16 %v1334
  %v1817 = vunpack.c.l.b16 %v1338
  %v1818 = vunpack.c.l.b16 %v1342
  %v1819 = vunpack.c.l.b16 %v1346
  %v1820 = vunpack.c.l.b16 %v1350
  %v1821 = vunpack.c.l.b16 %v1354
  %v1822 = vunpack.c.l.b16 %v1358
  %v1823 = vpack.c.b16 %v1816, %v1815
  %v1824 = vpack.c.b16 %v1818, %v1817
  %v1825 = vpack.c.b16 %v1820, %v1819
  %v1826 = vpack.c.b16 %v1822, %v1821
  %1827 = vrot.lane.b32.xlu0 %v1823, 112
  %v1828 = vpop.permute.xlu0 %1827
  %1829 = vrot.lane.b32.xlu0 %v1824, 112
  %v1830 = vpop.permute.xlu0 %1829
  %1831 = vrot.lane.b32.xlu0 %v1825, 112
  %v1832 = vpop.permute.xlu0 %1831
  %1833 = vrot.lane.b32.xlu0 %v1826, 112
  %v1834 = vpop.permute.xlu0 %1833
  %v1835 = vunpack.c.l.b16 %v1384
  %v1836 = vunpack.c.l.b16 %v1402
  %v1837 = vunpack.c.l.b16 %v1420
  %v1838 = vunpack.c.l.b16 %v1438
  %v1839 = vunpack.c.l.b16 %v1456
  %v1840 = vunpack.c.l.b16 %v1474
  %v1841 = vunpack.c.l.b16 %v1492
  %v1842 = vunpack.c.l.b16 %v1510
  %v1843 = vpack.c.b16 %v1836, %v1835
  %v1844 = vpack.c.b16 %v1838, %v1837
  %v1845 = vpack.c.b16 %v1840, %v1839
  %v1846 = vpack.c.b16 %v1842, %v1841
  %1847 = vrot.lane.b32.xlu0 %v1843, 120
  %v1848 = vpop.permute.xlu0 %1847
  %1849 = vrot.lane.b32.xlu0 %v1844, 120
  %v1850 = vpop.permute.xlu0 %1849
  %1851 = vrot.lane.b32.xlu0 %v1845, 120
  %v1852 = vpop.permute.xlu0 %1851
  %1853 = vrot.lane.b32.xlu0 %v1846, 120
  %v1854 = vpop.permute.xlu0 %1853
  %vm1855 = vcmask 64512
  %v1858 = vsel %vm1855, %v1527, %v1544
  %v1861 = vsel %vm1855, %v1528, %v1546
  %v1864 = vsel %vm1855, %v1529, %v1548
  %v1867 = vsel %vm1855, %v1530, %v1550
  %vm1868 = vcmask 130048
  %v1870 = vsel %vm1868, %v1858, %v1564
  %v1872 = vsel %vm1868, %v1861, %v1566
  %v1874 = vsel %vm1868, %v1864, %v1568
  %v1876 = vsel %vm1868, %v1867, %v1570
  %vm1877 = vcmask 195584
  %v1879 = vsel %vm1877, %v1870, %v1584
  %v1881 = vsel %vm1877, %v1872, %v1586
  %v1883 = vsel %vm1877, %v1874, %v1588
  %v1885 = vsel %vm1877, %v1876, %v1590
  %vm1886 = vcmask 261120
  %v1888 = vsel %vm1886, %v1879, %v1612
  %v1890 = vsel %vm1886, %v1881, %v1614
  %v1892 = vsel %vm1886, %v1883, %v1616
  %v1894 = vsel %vm1886, %v1885, %v1618
  %vm1895 = vcmask 326656
  %v1897 = vsel %vm1895, %v1888, %v1632
  %v1899 = vsel %vm1895, %v1890, %v1634
  %v1901 = vsel %vm1895, %v1892, %v1636
  %v1903 = vsel %vm1895, %v1894, %v1638
  %vm1904 = vcmask 392192
  %v1906 = vsel %vm1904, %v1897, %v1652
  %v1908 = vsel %vm1904, %v1899, %v1654
  %v1910 = vsel %vm1904, %v1901, %v1656
  %v1912 = vsel %vm1904, %v1903, %v1658
  %vm1913 = vcmask 457728
  %v1915 = vsel %vm1913, %v1906, %v1672
  %v1917 = vsel %vm1913, %v1908, %v1674
  %v1919 = vsel %vm1913, %v1910, %v1676
  %v1921 = vsel %vm1913, %v1912, %v1678
  %vm1922 = vcmask 523264
  %v1924 = vsel %vm1922, %v1915, %v1700
  %v1926 = vsel %vm1922, %v1917, %v1702
  %v1928 = vsel %vm1922, %v1919, %v1704
  %v1930 = vsel %vm1922, %v1921, %v1706
  %vm1931 = vcmask 588800
  %v1933 = vsel %vm1931, %v1924, %v1720
  %v1935 = vsel %vm1931, %v1926, %v1722
  %v1937 = vsel %vm1931, %v1928, %v1724
  %v1939 = vsel %vm1931, %v1930, %v1726
  %vm1940 = vcmask 654336
  %v1942 = vsel %vm1940, %v1933, %v1740
  %v1944 = vsel %vm1940, %v1935, %v1742
  %v1946 = vsel %vm1940, %v1937, %v1744
  %v1948 = vsel %vm1940, %v1939, %v1746
  %vm1949 = vcmask 719872
  %v1951 = vsel %vm1949, %v1942, %v1760
  %v1953 = vsel %vm1949, %v1944, %v1762
  %v1955 = vsel %vm1949, %v1946, %v1764
  %v1957 = vsel %vm1949, %v1948, %v1766
  %vm1958 = vcmask 785408
  %v1960 = vsel %vm1958, %v1951, %v1788
  %v1962 = vsel %vm1958, %v1953, %v1790
  %v1964 = vsel %vm1958, %v1955, %v1792
  %v1966 = vsel %vm1958, %v1957, %v1794
  %vm1967 = vcmask 850944
  %v1969 = vsel %vm1967, %v1960, %v1808
  %v1971 = vsel %vm1967, %v1962, %v1810
  %v1973 = vsel %vm1967, %v1964, %v1812
  %v1975 = vsel %vm1967, %v1966, %v1814
  %vm1976 = vcmask 916480
  %v1978 = vsel %vm1976, %v1969, %v1828
  %v1980 = vsel %vm1976, %v1971, %v1830
  %v1982 = vsel %vm1976, %v1973, %v1832
  %v1984 = vsel %vm1976, %v1975, %v1834
  %vm1985 = vcmask 982016
  %v1987 = vsel %vm1985, %v1978, %v1848
  %v1990 = vsel %vm1985, %v1980, %v1850
  %v1993 = vsel %vm1985, %v1982, %v1852
  %v1996 = vsel %vm1985, %v1984, %v1854
  %v1998 = vld [vmem:[%s3] sm:$0x1]
  %v1999 = vld [vmem:[%s1] sm:$0xf]
  %v2000 = vld [vmem:[%s1 + $0x4] sm:$0xf]
  %v2001 = vld [vmem:[%s1 + $0x8] sm:$0xf]
  %v2002 = vld [vmem:[%s1 + $0xc] sm:$0xf]
  %v2003 = vld [vmem:[%s1 + $0x10] sm:$0xf]
  %v2004 = vld [vmem:[%s1 + $0x14] sm:$0xf]
  %v2005 = vld [vmem:[%s1 + $0x18] sm:$0xf]
  %v2006 = vld [vmem:[%s1 + $0x1c] sm:$0xf]
  %v2007 = vld [vmem:[%s1 + $0x20] sm:$0xf]
  %v2008 = vld [vmem:[%s1 + $0x24] sm:$0xf]
  %v2009 = vld [vmem:[%s1 + $0x28] sm:$0xf]
  %v2010 = vld [vmem:[%s1 + $0x2c] sm:$0xf]
  %v2011 = vld [vmem:[%s1 + $0x30] sm:$0xf]
  %v2012 = vld [vmem:[%s1 + $0x34] sm:$0xf]
  %v2013 = vld [vmem:[%s1 + $0x38] sm:$0xf]
  %v2014 = vld [vmem:[%s1 + $0x3c] sm:$0xf]
  %v2015 = vlaneseq
  %v2016 = vshrl.u32 %v2015, 7
  %v2017 = vsub.s32 0, %v2016
  %v2018 = vrot.slane %v1998, %v2017
  %v2035 = vunpack.c.l.b16 %v1999
  %v2036 = vunpack.c.l.b16 %v2000
  %v2037 = vunpack.c.l.b16 %v2001
  %v2038 = vunpack.c.l.b16 %v2002
  %v2039 = vunpack.c.l.b16 %v2003
  %v2040 = vunpack.c.l.b16 %v2004
  %v2041 = vunpack.c.l.b16 %v2005
  %v2042 = vunpack.c.l.b16 %v2006
  %v2043 = vunpack.c.l.b16 %v2007
  %v2044 = vunpack.c.l.b16 %v2008
  %v2045 = vunpack.c.l.b16 %v2009
  %v2046 = vunpack.c.l.b16 %v2010
  %v2047 = vunpack.c.l.b16 %v2011
  %v2048 = vunpack.c.l.b16 %v2012
  %v2049 = vunpack.c.l.b16 %v2013
  %v2050 = vunpack.c.l.b16 %v2014
  %v2051 = vpack.c.b16 %v2036, %v2035
  %v2052 = vpack.c.b16 %v2038, %v2037
  %v2053 = vpack.c.b16 %v2040, %v2039
  %v2054 = vpack.c.b16 %v2042, %v2041
  %v2055 = vpack.c.b16 %v2044, %v2043
  %v2056 = vpack.c.b16 %v2046, %v2045
  %v2057 = vpack.c.b16 %v2048, %v2047
  %v2058 = vpack.c.b16 %v2050, %v2049
  %2067 = vmatprep.subr.bf16.mxu0 0
  %2068 = vmatpush1.bf16.msra.mxu0 %v2051
  %2069 = vmatprep.subr.bf16.mxu0 0
  %2070 = vmatpush1.bf16.msra.mxu0 %v2052
  %2071 = vmatprep.subr.bf16.mxu0 0
  %2072 = vmatpush1.bf16.msra.mxu0 %v2053
  %2073 = vmatprep.subr.bf16.mxu0 0
  %2074 = vmatpush1.bf16.msra.mxu0 %v2054
  %2075 = vmatprep.subr.bf16.mxu0 0
  %2076 = vmatpush1.bf16.msra.mxu0 %v2055
  %2077 = vmatprep.subr.bf16.mxu0 0
  %2078 = vmatpush1.bf16.msra.mxu0 %v2056
  %2079 = vmatprep.subr.bf16.mxu0 0
  %2080 = vmatpush1.bf16.msra.mxu0 %v2057
  %2081 = vmatprep.subr.bf16.mxu0 0
  %2082 = vmatpush1.bf16.msra.mxu0 %v2058
  %2083 = vmatprep.subr.bf16.mxu0 0
  %2084 = vmatpush1.bf16.msra.mxu0 0
  %2085 = vmatprep.subr.bf16.mxu0 0
  %2086 = vmatpush1.bf16.msra.mxu0 0
  %2087 = vmatprep.subr.bf16.mxu0 0
  %2088 = vmatpush1.bf16.msra.mxu0 0
  %2089 = vmatprep.subr.bf16.mxu0 0
  %2090 = vmatpush1.bf16.msra.mxu0 0
  %2091 = vmatprep.subr.bf16.mxu0 0
  %2092 = vmatpush1.bf16.msra.mxu0 0
  %2093 = vmatprep.subr.bf16.mxu0 0
  %2094 = vmatpush1.bf16.msra.mxu0 0
  %2095 = vmatprep.subr.bf16.mxu0 0
  %2096 = vmatpush1.bf16.msra.mxu0 0
  %2097 = vmatprep.subr.bf16.mxu0 0
  %2098 = vmatpush1.bf16.msra.mxu0 0
  %2099 = vmatprep.mubr.bf16.mxu0 0
  %2100 = vmatmul.mubr.bf16.gmra.mrb[0].mxu0 %v1987
  %v2101 = vpop.f32.mrb[0].mxu0
  %v2102 = vadd.f32 %v2018, %v2101
  %v2103 = vpop.f32.mrb[0].mxu0
  %v2104 = vpop.f32.mrb[0].mxu0
  %v2105 = vadd.f32 %v2018, %v2104
  %v2106 = vpop.f32.mrb[0].mxu0
  %2107 = vmatprep.mubr.bf16.mxu0 0
  %2108 = vmatmul.mubr.bf16.gmra.mrb[0].mxu0 %v1990
  %v2109 = vpop.f32.mrb[0].mxu0
  %v2110 = vadd.f32 %v2018, %v2109
  %v2111 = vpop.f32.mrb[0].mxu0
  %v2112 = vpop.f32.mrb[0].mxu0
  %v2113 = vadd.f32 %v2018, %v2112
  %v2114 = vpop.f32.mrb[0].mxu0
  %2115 = vmatprep.mubr.bf16.mxu0 0
  %2116 = vmatmul.mubr.bf16.gmra.mrb[0].mxu0 %v1993
  %v2117 = vpop.f32.mrb[0].mxu0
  %v2118 = vadd.f32 %v2018, %v2117
  %v2119 = vpop.f32.mrb[0].mxu0
  %v2120 = vpop.f32.mrb[0].mxu0
  %v2121 = vadd.f32 %v2018, %v2120
  %v2122 = vpop.f32.mrb[0].mxu0
  %2123 = vmatprep.mubr.bf16.mxu0 0
  %2124 = vmatmul.mubr.bf16.gmra.mrb[0].mxu0 %v1996
  %v2125 = vpop.f32.mrb[0].mxu0
  %v2126 = vadd.f32 %v2018, %v2125
  %v2127 = vpop.f32.mrb[0].mxu0
  %v2128 = vpop.f32.mrb[0].mxu0
  %v2129 = vadd.f32 %v2018, %v2128
  %v2130 = vpop.f32.mrb[0].mxu0
  %2131 = vdwg.mxu0
  %v2132 = vmax.f32 %v2102, 0.0
  %v2133 = vmax.f32 %v2105, 0.0
  %v2134 = vmax.f32 %v2110, 0.0
  %v2135 = vmax.f32 %v2113, 0.0
  %v2136 = vmax.f32 %v2118, 0.0
  %v2137 = vmax.f32 %v2121, 0.0
  %v2138 = vmax.f32 %v2126, 0.0
  %v2139 = vmax.f32 %v2129, 0.0
  %2140 = vst.msk [vmem:[#allocation3] sm:$0xf] %vm107, 0
  %vm2141 = vcmask 57344
  %2142 = vst.msk [vmem:[#allocation3 + $0x4] sm:$0x1] %vm2141, 0
  %s2143 = scalar_lea.vmem [#allocation3], 72
  %2144 = vst.msk [vmem:[%s2143] sm:$0xf] %vm107, 0
  %2145 = vst.msk [vmem:[%s2143 + $0x4] sm:$0x1] %vm2141, 0
  %s2146 = scalar_lea.vmem [#allocation3], 8
  %vm2147 = vcmask 57344
  %vm2148 = vsmask.f32 256
  %vm2149 = vmand %vm2147, %vm2148
  %v2150 = vld [vmem:[%s2146] sm:$0x1]
  %v2151 = vsel %vm2149, 0, %v2150
  %2152 = vst [vmem:[%s2146] sm:$0x1] %v2151
  %v2153 = vld [vmem:[%s2146 + $0x8] sm:$0x1]
  %v2154 = vsel %vm2149, 0, %v2153
  %2155 = vst [vmem:[%s2146 + $0x8] sm:$0x1] %v2154
  %v2156 = vld [vmem:[%s2146 + $0x10] sm:$0x1]
  %v2157 = vsel %vm2149, 0, %v2156
  %2158 = vst [vmem:[%s2146 + $0x10] sm:$0x1] %v2157
  %v2159 = vld [vmem:[%s2146 + $0x18] sm:$0x1]
  %v2160 = vsel %vm2149, 0, %v2159
  %2161 = vst [vmem:[%s2146 + $0x18] sm:$0x1] %v2160
  %v2162 = vld [vmem:[%s2146 + $0x20] sm:$0x1]
  %v2163 = vsel %vm2149, 0, %v2162
  %2164 = vst [vmem:[%s2146 + $0x20] sm:$0x1] %v2163
  %v2165 = vld [vmem:[%s2146 + $0x28] sm:$0x1]
  %v2166 = vsel %vm2149, 0, %v2165
  %2167 = vst [vmem:[%s2146 + $0x28] sm:$0x1] %v2166
  %v2168 = vld [vmem:[%s2146 + $0x30] sm:$0x1]
  %v2169 = vsel %vm2149, 0, %v2168
  %2170 = vst [vmem:[%s2146 + $0x30] sm:$0x1] %v2169
  %v2171 = vld [vmem:[%s2146 + $0x38] sm:$0x1]
  %v2172 = vsel %vm2149, 0, %v2171
  %2173 = vst [vmem:[%s2146 + $0x38] sm:$0x1] %v2172
  %vm2174 = vsmask.f32 7938
  %vm2175 = vmand %vm2147, %vm2174
  %v2176 = vld [vmem:[%s2146 + $0x4] sm:$0x1]
  %v2177 = vsel %vm2175, 0, %v2176
  %2178 = vst [vmem:[%s2146 + $0x4] sm:$0x1] %v2177
  %v2179 = vld [vmem:[%s2146 + $0xc] sm:$0x1]
  %v2180 = vsel %vm2175, 0, %v2179
  %2181 = vst [vmem:[%s2146 + $0xc] sm:$0x1] %v2180
  %v2182 = vld [vmem:[%s2146 + $0x14] sm:$0x1]
  %v2183 = vsel %vm2175, 0, %v2182
  %2184 = vst [vmem:[%s2146 + $0x14] sm:$0x1] %v2183
  %v2185 = vld [vmem:[%s2146 + $0x1c] sm:$0x1]
  %v2186 = vsel %vm2175, 0, %v2185
  %2187 = vst [vmem:[%s2146 + $0x1c] sm:$0x1] %v2186
  %v2188 = vld [vmem:[%s2146 + $0x24] sm:$0x1]
  %v2189 = vsel %vm2175, 0, %v2188
  %2190 = vst [vmem:[%s2146 + $0x24] sm:$0x1] %v2189
  %v2191 = vld [vmem:[%s2146 + $0x2c] sm:$0x1]
  %v2192 = vsel %vm2175, 0, %v2191
  %2193 = vst [vmem:[%s2146 + $0x2c] sm:$0x1] %v2192
  %v2194 = vld [vmem:[%s2146 + $0x34] sm:$0x1]
  %v2195 = vsel %vm2175, 0, %v2194
  %2196 = vst [vmem:[%s2146 + $0x34] sm:$0x1] %v2195
  %v2197 = vld [vmem:[%s2146 + $0x3c] sm:$0x1]
  %v2198 = vsel %vm2175, 0, %v2197
  %2199 = vst [vmem:[%s2146 + $0x3c] sm:$0x1] %v2198
  %v2200 = vpack.c.bf16 %v2132, %v2132
  %v2201 = vpack.c.bf16 %v2133, %v2133
  %v2202 = vpack.c.bf16 %v2134, %v2134
  %v2203 = vpack.c.bf16 %v2135, %v2135
  %v2204 = vpack.c.bf16 %v2136, %v2136
  %v2205 = vpack.c.bf16 %v2137, %v2137
  %v2206 = vpack.c.bf16 %v2138, %v2138
  %v2207 = vpack.c.bf16 %v2139, %v2139
  %v2216 = vunpack.c.l.b16 %v2200
  %v2217 = vunpack.c.l.b16 %v2201
  %v2218 = vunpack.c.l.b16 %v2202
  %v2219 = vunpack.c.l.b16 %v2203
  %v2220 = vunpack.c.l.b16 %v2204
  %v2221 = vunpack.c.l.b16 %v2205
  %v2222 = vunpack.c.l.b16 %v2206
  %v2223 = vunpack.c.l.b16 %v2207
  %v2224 = vpack.c.b16 %v2216, %v2216
  %v2225 = vpack.c.b16 %v2217, %v2217
  %v2226 = vpack.c.b16 %v2218, %v2218
  %v2227 = vpack.c.b16 %v2219, %v2219
  %v2228 = vpack.c.b16 %v2220, %v2220
  %v2229 = vpack.c.b16 %v2221, %v2221
  %v2230 = vpack.c.b16 %v2222, %v2222
  %v2231 = vpack.c.b16 %v2223, %v2223
  %v2233 = vshrl.u32 %v2224, 16
  %v2235 = vrot.slane %v2233, 7
  %v2236 = vshll.u32 %v2224, 16
  %v2238 = vor.u32 %v2235, %v2236
  %v2239 = vrot.slane %v2235, 4
  %v2241 = vshrl.u32 %v2225, 16
  %v2243 = vrot.slane %v2241, 7
  %v2244 = vshll.u32 %v2225, 16
  %v2246 = vor.u32 %v2243, %v2244
  %v2247 = vrot.slane %v2243, 4
  %v2249 = vshrl.u32 %v2226, 16
  %v2251 = vrot.slane %v2249, 7
  %v2252 = vshll.u32 %v2226, 16
  %v2254 = vor.u32 %v2251, %v2252
  %v2255 = vrot.slane %v2251, 4
  %v2257 = vshrl.u32 %v2227, 16
  %v2259 = vrot.slane %v2257, 7
  %v2260 = vshll.u32 %v2227, 16
  %v2262 = vor.u32 %v2259, %v2260
  %v2263 = vrot.slane %v2259, 4
  %v2265 = vshrl.u32 %v2228, 16
  %v2267 = vrot.slane %v2265, 7
  %v2268 = vshll.u32 %v2228, 16
  %v2270 = vor.u32 %v2267, %v2268
  %v2271 = vrot.slane %v2267, 4
  %v2273 = vshrl.u32 %v2229, 16
  %v2275 = vrot.slane %v2273, 7
  %v2276 = vshll.u32 %v2229, 16
  %v2278 = vor.u32 %v2275, %v2276
  %v2279 = vrot.slane %v2275, 4
  %v2281 = vshrl.u32 %v2230, 16
  %v2283 = vrot.slane %v2281, 7
  %v2284 = vshll.u32 %v2230, 16
  %v2286 = vor.u32 %v2283, %v2284
  %v2287 = vrot.slane %v2283, 4
  %v2289 = vshrl.u32 %v2231, 16
  %v2291 = vrot.slane %v2289, 7
  %v2292 = vshll.u32 %v2231, 16
  %v2294 = vor.u32 %v2291, %v2292
  %v2295 = vrot.slane %v2291, 4
  %vm2312 = vcmask 60416
  %vm2313 = vmand %vm2312, %vm2174
  %v2314 = vld [vmem:[%s2146] sm:$0xf]
  %v2315 = vsel %vm2313, %v2238, %v2314
  %2316 = vst [vmem:[%s2146] sm:$0xf] %v2315
  %v2317 = vld [vmem:[%s2146 + $0x4] sm:$0x1]
  %v2318 = vsel %vm2149, %v2239, %v2317
  %2319 = vst [vmem:[%s2146 + $0x4] sm:$0x1] %v2318
  %v2320 = vld [vmem:[%s2146 + $0x8] sm:$0xf]
  %v2321 = vsel %vm2313, %v2246, %v2320
  %2322 = vst [vmem:[%s2146 + $0x8] sm:$0xf] %v2321
  %v2323 = vld [vmem:[%s2146 + $0xc] sm:$0x1]
  %v2324 = vsel %vm2149, %v2247, %v2323
  %2325 = vst [vmem:[%s2146 + $0xc] sm:$0x1] %v2324
  %v2326 = vld [vmem:[%s2146 + $0x10] sm:$0xf]
  %v2327 = vsel %vm2313, %v2254, %v2326
  %2328 = vst [vmem:[%s2146 + $0x10] sm:$0xf] %v2327
  %v2329 = vld [vmem:[%s2146 + $0x14] sm:$0x1]
  %v2330 = vsel %vm2149, %v2255, %v2329
  %2331 = vst [vmem:[%s2146 + $0x14] sm:$0x1] %v2330
  %v2332 = vld [vmem:[%s2146 + $0x18] sm:$0xf]
  %v2333 = vsel %vm2313, %v2262, %v2332
  %2334 = vst [vmem:[%s2146 + $0x18] sm:$0xf] %v2333
  %v2335 = vld [vmem:[%s2146 + $0x1c] sm:$0x1]
  %v2336 = vsel %vm2149, %v2263, %v2335
  %2337 = vst [vmem:[%s2146 + $0x1c] sm:$0x1] %v2336
  %v2338 = vld [vmem:[%s2146 + $0x20] sm:$0xf]
  %v2339 = vsel %vm2313, %v2270, %v2338
  %2340 = vst [vmem:[%s2146 + $0x20] sm:$0xf] %v2339
  %v2341 = vld [vmem:[%s2146 + $0x24] sm:$0x1]
  %v2342 = vsel %vm2149, %v2271, %v2341
  %2343 = vst [vmem:[%s2146 + $0x24] sm:$0x1] %v2342
  %v2344 = vld [vmem:[%s2146 + $0x28] sm:$0xf]
  %v2345 = vsel %vm2313, %v2278, %v2344
  %2346 = vst [vmem:[%s2146 + $0x28] sm:$0xf] %v2345
  %v2347 = vld [vmem:[%s2146 + $0x2c] sm:$0x1]
  %v2348 = vsel %vm2149, %v2279, %v2347
  %2349 = vst [vmem:[%s2146 + $0x2c] sm:$0x1] %v2348
  %v2350 = vld [vmem:[%s2146 + $0x30] sm:$0xf]
  %v2351 = vsel %vm2313, %v2286, %v2350
  %2352 = vst [vmem:[%s2146 + $0x30] sm:$0xf] %v2351
  %v2353 = vld [vmem:[%s2146 + $0x34] sm:$0x1]
  %v2354 = vsel %vm2149, %v2287, %v2353
  %2355 = vst [vmem:[%s2146 + $0x34] sm:$0x1] %v2354
  %v2356 = vld [vmem:[%s2146 + $0x38] sm:$0xf]
  %v2357 = vsel %vm2313, %v2294, %v2356
  %2358 = vst [vmem:[%s2146 + $0x38] sm:$0xf] %v2357
  %v2359 = vld [vmem:[%s2146 + $0x3c] sm:$0x1]
  %v2360 = vsel %vm2149, %v2295, %v2359
  %2361 = vst [vmem:[%s2146 + $0x3c] sm:$0x1] %v2360
  %v2362 = vld [vmem:[%s3 + $0x1] sm:$0x1]
  %v2363 = vld [vmem:[#allocation3] sm:$0xf]
  %v2364 = vld [vmem:[#allocation3 + $0x8] sm:$0xf]
  %v2365 = vld [vmem:[#allocation3 + $0x10] sm:$0xf]
  %v2366 = vld [vmem:[#allocation3 + $0x18] sm:$0xf]
  %v2367 = vld [vmem:[#allocation3 + $0x20] sm:$0xf]
  %v2368 = vld [vmem:[#allocation3 + $0x28] sm:$0xf]
  %v2369 = vld [vmem:[#allocation3 + $0x30] sm:$0xf]
  %v2370 = vld [vmem:[#allocation3 + $0x38] sm:$0xf]
  %v2371 = vld [vmem:[#allocation3 + $0x4] sm:$0x1]
  %v2372 = vld [vmem:[#allocation3 + $0xc] sm:$0x1]
  %v2373 = vld [vmem:[#allocation3 + $0x14] sm:$0x1]
  %v2374 = vld [vmem:[#allocation3 + $0x1c] sm:$0x1]
  %v2375 = vld [vmem:[#allocation3 + $0x24] sm:$0x1]
  %v2376 = vld [vmem:[#allocation3 + $0x2c] sm:$0x1]
  %v2377 = vld [vmem:[#allocation3 + $0x34] sm:$0x1]
  %v2378 = vld [vmem:[#allocation3 + $0x3c] sm:$0x1]
  %v2380 = vshrl.u32 %v2363, 16
  %v2382 = vrot.slane %v2380, 4
  %v2383 = vshll.u32 %v2363, 16
  %v2385 = vrot.slane %v2383, 5
  %v2386 = vor.u32 %v2382, %v2385
  %v2387 = vrot.slane %v2386, 4
  %v2389 = vshll.u32 %v2371, 16
  %v2391 = vrot.slane %v2389, 5
  %v2392 = vsel %vm173, %v2387, %v2391
  %v2394 = vshrl.u32 %v2364, 16
  %v2396 = vrot.slane %v2394, 4
  %v2397 = vshll.u32 %v2364, 16
  %v2399 = vrot.slane %v2397, 5
  %v2400 = vor.u32 %v2396, %v2399
  %v2401 = vrot.slane %v2400, 4
  %v2403 = vshll.u32 %v2372, 16
  %v2405 = vrot.slane %v2403, 5
  %v2406 = vsel %vm173, %v2401, %v2405
  %v2408 = vshrl.u32 %v2365, 16
  %v2410 = vrot.slane %v2408, 4
  %v2411 = vshll.u32 %v2365, 16
  %v2413 = vrot.slane %v2411, 5
  %v2414 = vor.u32 %v2410, %v2413
  %v2415 = vrot.slane %v2414, 4
  %v2417 = vshll.u32 %v2373, 16
  %v2419 = vrot.slane %v2417, 5
  %v2420 = vsel %vm173, %v2415, %v2419
  %v2422 = vshrl.u32 %v2366, 16
  %v2424 = vrot.slane %v2422, 4
  %v2425 = vshll.u32 %v2366, 16
  %v2427 = vrot.slane %v2425, 5
  %v2428 = vor.u32 %v2424, %v2427
  %v2429 = vrot.slane %v2428, 4
  %v2431 = vshll.u32 %v2374, 16
  %v2433 = vrot.slane %v2431, 5
  %v2434 = vsel %vm173, %v2429, %v2433
  %v2436 = vshrl.u32 %v2367, 16
  %v2438 = vrot.slane %v2436, 4
  %v2439 = vshll.u32 %v2367, 16
  %v2441 = vrot.slane %v2439, 5
  %v2442 = vor.u32 %v2438, %v2441
  %v2443 = vrot.slane %v2442, 4
  %v2445 = vshll.u32 %v2375, 16
  %v2447 = vrot.slane %v2445, 5
  %v2448 = vsel %vm173, %v2443, %v2447
  %v2450 = vshrl.u32 %v2368, 16
  %v2452 = vrot.slane %v2450, 4
  %v2453 = vshll.u32 %v2368, 16
  %v2455 = vrot.slane %v2453, 5
  %v2456 = vor.u32 %v2452, %v2455
  %v2457 = vrot.slane %v2456, 4
  %v2459 = vshll.u32 %v2376, 16
  %v2461 = vrot.slane %v2459, 5
  %v2462 = vsel %vm173, %v2457, %v2461
  %v2464 = vshrl.u32 %v2369, 16
  %v2466 = vrot.slane %v2464, 4
  %v2467 = vshll.u32 %v2369, 16
  %v2469 = vrot.slane %v2467, 5
  %v2470 = vor.u32 %v2466, %v2469
  %v2471 = vrot.slane %v2470, 4
  %v2473 = vshll.u32 %v2377, 16
  %v2475 = vrot.slane %v2473, 5
  %v2476 = vsel %vm173, %v2471, %v2475
  %v2478 = vshrl.u32 %v2370, 16
  %v2480 = vrot.slane %v2478, 4
  %v2481 = vshll.u32 %v2370, 16
  %v2483 = vrot.slane %v2481, 5
  %v2484 = vor.u32 %v2480, %v2483
  %v2485 = vrot.slane %v2484, 4
  %v2487 = vshll.u32 %v2378, 16
  %v2489 = vrot.slane %v2487, 5
  %v2490 = vsel %vm173, %v2485, %v2489
  %v2491 = vld [vmem:[%s2146] sm:$0xf]
  %v2492 = vld [vmem:[%s2146 + $0x8] sm:$0xf]
  %v2493 = vld [vmem:[%s2146 + $0x10] sm:$0xf]
  %v2494 = vld [vmem:[%s2146 + $0x18] sm:$0xf]
  %v2495 = vld [vmem:[%s2146 + $0x20] sm:$0xf]
  %v2496 = vld [vmem:[%s2146 + $0x28] sm:$0xf]
  %v2497 = vld [vmem:[%s2146 + $0x30] sm:$0xf]
  %v2498 = vld [vmem:[%s2146 + $0x38] sm:$0xf]
  %v2499 = vld [vmem:[%s2146 + $0x4] sm:$0x1]
  %v2500 = vld [vmem:[%s2146 + $0xc] sm:$0x1]
  %v2501 = vld [vmem:[%s2146 + $0x14] sm:$0x1]
  %v2502 = vld [vmem:[%s2146 + $0x1c] sm:$0x1]
  %v2503 = vld [vmem:[%s2146 + $0x24] sm:$0x1]
  %v2504 = vld [vmem:[%s2146 + $0x2c] sm:$0x1]
  %v2505 = vld [vmem:[%s2146 + $0x34] sm:$0x1]
  %v2506 = vld [vmem:[%s2146 + $0x3c] sm:$0x1]
  %v2508 = vshrl.u32 %v2491, 16
  %v2510 = vrot.slane %v2508, 4
  %v2511 = vshll.u32 %v2491, 16
  %v2513 = vrot.slane %v2511, 5
  %v2514 = vor.u32 %v2510, %v2513
  %v2515 = vrot.slane %v2514, 4
  %v2517 = vshll.u32 %v2499, 16
  %v2519 = vrot.slane %v2517, 5
  %v2520 = vsel %vm173, %v2515, %v2519
  %v2522 = vshrl.u32 %v2492, 16
  %v2524 = vrot.slane %v2522, 4
  %v2525 = vshll.u32 %v2492, 16
  %v2527 = vrot.slane %v2525, 5
  %v2528 = vor.u32 %v2524, %v2527
  %v2529 = vrot.slane %v2528, 4
  %v2531 = vshll.u32 %v2500, 16
  %v2533 = vrot.slane %v2531, 5
  %v2534 = vsel %vm173, %v2529, %v2533
  %v2536 = vshrl.u32 %v2493, 16
  %v2538 = vrot.slane %v2536, 4
  %v2539 = vshll.u32 %v2493, 16
  %v2541 = vrot.slane %v2539, 5
  %v2542 = vor.u32 %v2538, %v2541
  %v2543 = vrot.slane %v2542, 4
  %v2545 = vshll.u32 %v2501, 16
  %v2547 = vrot.slane %v2545, 5
  %v2548 = vsel %vm173, %v2543, %v2547
  %v2550 = vshrl.u32 %v2494, 16
  %v2552 = vrot.slane %v2550, 4
  %v2553 = vshll.u32 %v2494, 16
  %v2555 = vrot.slane %v2553, 5
  %v2556 = vor.u32 %v2552, %v2555
  %v2557 = vrot.slane %v2556, 4
  %v2559 = vshll.u32 %v2502, 16
  %v2561 = vrot.slane %v2559, 5
  %v2562 = vsel %vm173, %v2557, %v2561
  %v2564 = vshrl.u32 %v2495, 16
  %v2566 = vrot.slane %v2564, 4
  %v2567 = vshll.u32 %v2495, 16
  %v2569 = vrot.slane %v2567, 5
  %v2570 = vor.u32 %v2566, %v2569
  %v2571 = vrot.slane %v2570, 4
  %v2573 = vshll.u32 %v2503, 16
  %v2575 = vrot.slane %v2573, 5
  %v2576 = vsel %vm173, %v2571, %v2575
  %v2578 = vshrl.u32 %v2496, 16
  %v2580 = vrot.slane %v2578, 4
  %v2581 = vshll.u32 %v2496, 16
  %v2583 = vrot.slane %v2581, 5
  %v2584 = vor.u32 %v2580, %v2583
  %v2585 = vrot.slane %v2584, 4
  %v2587 = vshll.u32 %v2504, 16
  %v2589 = vrot.slane %v2587, 5
  %v2590 = vsel %vm173, %v2585, %v2589
  %v2592 = vshrl.u32 %v2497, 16
  %v2594 = vrot.slane %v2592, 4
  %v2595 = vshll.u32 %v2497, 16
  %v2597 = vrot.slane %v2595, 5
  %v2598 = vor.u32 %v2594, %v2597
  %v2599 = vrot.slane %v2598, 4
  %v2601 = vshll.u32 %v2505, 16
  %v2603 = vrot.slane %v2601, 5
  %v2604 = vsel %vm173, %v2599, %v2603
  %v2606 = vshrl.u32 %v2498, 16
  %v2608 = vrot.slane %v2606, 4
  %v2609 = vshll.u32 %v2498, 16
  %v2611 = vrot.slane %v2609, 5
  %v2612 = vor.u32 %v2608, %v2611
  %v2613 = vrot.slane %v2612, 4
  %v2615 = vshll.u32 %v2506, 16
  %v2617 = vrot.slane %v2615, 5
  %v2618 = vsel %vm173, %v2613, %v2617
  %v2627 = vunpack.c.l.b16 %v2363
  %v2628 = vunpack.c.l.b16 %v2364
  %v2629 = vunpack.c.l.b16 %v2365
  %v2630 = vunpack.c.l.b16 %v2366
  %v2631 = vunpack.c.l.b16 %v2367
  %v2632 = vunpack.c.l.b16 %v2368
  %v2633 = vunpack.c.l.b16 %v2369
  %v2634 = vunpack.c.l.b16 %v2370
  %v2635 = vpack.c.b16 %v2628, %v2627
  %v2636 = vpack.c.b16 %v2630, %v2629
  %v2637 = vpack.c.b16 %v2632, %v2631
  %v2638 = vpack.c.b16 %v2634, %v2633
  %v2639 = vunpack.c.l.b16 %v2392
  %v2640 = vunpack.c.l.b16 %v2406
  %v2641 = vunpack.c.l.b16 %v2420
  %v2642 = vunpack.c.l.b16 %v2434
  %v2643 = vunpack.c.l.b16 %v2448
  %v2644 = vunpack.c.l.b16 %v2462
  %v2645 = vunpack.c.l.b16 %v2476
  %v2646 = vunpack.c.l.b16 %v2490
  %v2647 = vpack.c.b16 %v2640, %v2639
  %v2648 = vpack.c.b16 %v2642, %v2641
  %v2649 = vpack.c.b16 %v2644, %v2643
  %v2650 = vpack.c.b16 %v2646, %v2645
  %2651 = vrot.lane.b32.xlu0 %v2647, 8
  %v2652 = vpop.permute.xlu0 %2651
  %2653 = vrot.lane.b32.xlu0 %v2648, 8
  %v2654 = vpop.permute.xlu0 %2653
  %2655 = vrot.lane.b32.xlu0 %v2649, 8
  %v2656 = vpop.permute.xlu0 %2655
  %2657 = vrot.lane.b32.xlu0 %v2650, 8
  %v2658 = vpop.permute.xlu0 %2657
  %v2667 = vunpack.c.l.b16 %v2491
  %v2668 = vunpack.c.l.b16 %v2492
  %v2669 = vunpack.c.l.b16 %v2493
  %v2670 = vunpack.c.l.b16 %v2494
  %v2671 = vunpack.c.l.b16 %v2495
  %v2672 = vunpack.c.l.b16 %v2496
  %v2673 = vunpack.c.l.b16 %v2497
  %v2674 = vunpack.c.l.b16 %v2498
  %v2675 = vpack.c.b16 %v2668, %v2667
  %v2676 = vpack.c.b16 %v2670, %v2669
  %v2677 = vpack.c.b16 %v2672, %v2671
  %v2678 = vpack.c.b16 %v2674, %v2673
  %2679 = vrot.lane.b32.xlu0 %v2675, 16
  %v2680 = vpop.permute.xlu0 %2679
  %2681 = vrot.lane.b32.xlu0 %v2676, 16
  %v2682 = vpop.permute.xlu0 %2681
  %2683 = vrot.lane.b32.xlu0 %v2677, 16
  %v2684 = vpop.permute.xlu0 %2683
  %2685 = vrot.lane.b32.xlu0 %v2678, 16
  %v2686 = vpop.permute.xlu0 %2685
  %v2687 = vunpack.c.l.b16 %v2520
  %v2688 = vunpack.c.l.b16 %v2534
  %v2689 = vunpack.c.l.b16 %v2548
  %v2690 = vunpack.c.l.b16 %v2562
  %v2691 = vunpack.c.l.b16 %v2576
  %v2692 = vunpack.c.l.b16 %v2590
  %v2693 = vunpack.c.l.b16 %v2604
  %v2694 = vunpack.c.l.b16 %v2618
  %v2695 = vpack.c.b16 %v2688, %v2687
  %v2696 = vpack.c.b16 %v2690, %v2689
  %v2697 = vpack.c.b16 %v2692, %v2691
  %v2698 = vpack.c.b16 %v2694, %v2693
  %2699 = vrot.lane.b32.xlu0 %v2695, 24
  %v2700 = vpop.permute.xlu0 %2699
  %2701 = vrot.lane.b32.xlu0 %v2696, 24
  %v2702 = vpop.permute.xlu0 %2701
  %2703 = vrot.lane.b32.xlu0 %v2697, 24
  %v2704 = vpop.permute.xlu0 %2703
  %2705 = vrot.lane.b32.xlu0 %v2698, 24
  %v2706 = vpop.permute.xlu0 %2705
  %v2709 = vsel %vm1855, %v2635, %v2652
  %v2712 = vsel %vm1855, %v2636, %v2654
  %v2715 = vsel %vm1855, %v2637, %v2656
  %v2718 = vsel %vm1855, %v2638, %v2658
  %v2720 = vsel %vm1868, %v2709, %v2680
  %v2722 = vsel %vm1868, %v2712, %v2682
  %v2724 = vsel %vm1868, %v2715, %v2684
  %v2726 = vsel %vm1868, %v2718, %v2686
  %v2728 = vsel %vm1877, %v2720, %v2700
  %v2730 = vsel %vm1877, %v2722, %v2702
  %v2732 = vsel %vm1877, %v2724, %v2704
  %v2734 = vsel %vm1877, %v2726, %v2706
  %v2735 = vld [vmem:[%s2] sm:$0xf]
  %v2736 = vld [vmem:[%s2 + $0x4] sm:$0xf]
  %v2737 = vld [vmem:[%s2 + $0x8] sm:$0xf]
  %v2738 = vld [vmem:[%s2 + $0xc] sm:$0xf]
  %v2739 = vlaneseq
  %v2740 = vshrl.u32 %v2739, 7
  %v2741 = vsub.s32 0, %v2740
  %v2742 = vrot.slane %v2362, %v2741
  %v2747 = vunpack.c.l.b16 %v2735
  %v2748 = vunpack.c.l.b16 %v2736
  %v2749 = vunpack.c.l.b16 %v2737
  %v2750 = vunpack.c.l.b16 %v2738
  %v2751 = vpack.c.b16 %v2748, %v2747
  %v2752 = vpack.c.b16 %v2750, %v2749
  %v2755 = vsel %vm1886, %v2728, 0
  %v2757 = vsel %vm1886, %v2730, 0
  %v2759 = vsel %vm1886, %v2732, 0
  %v2761 = vsel %vm1886, %v2734, 0
  %2763 = vmatprep.subr.bf16.mxu0 0
  %2764 = vmatpush1.bf16.msra.mxu0 %v2751
  %2765 = vmatprep.subr.bf16.mxu0 0
  %2766 = vmatpush1.bf16.msra.mxu0 %v2752
  %2767 = vmatprep.subr.bf16.mxu0 0
  %2768 = vmatpush1.bf16.msra.mxu0 0
  %2769 = vmatprep.subr.bf16.mxu0 0
  %2770 = vmatpush1.bf16.msra.mxu0 0
  %2771 = vmatprep.subr.bf16.mxu0 0
  %2772 = vmatpush1.bf16.msra.mxu0 0
  %2773 = vmatprep.subr.bf16.mxu0 0
  %2774 = vmatpush1.bf16.msra.mxu0 0
  %2775 = vmatprep.subr.bf16.mxu0 0
  %2776 = vmatpush1.bf16.msra.mxu0 0
  %2777 = vmatprep.subr.bf16.mxu0 0
  %2778 = vmatpush1.bf16.msra.mxu0 0
  %2779 = vmatprep.subr.bf16.mxu0 0
  %2780 = vmatpush1.bf16.msra.mxu0 0
  %2781 = vmatprep.subr.bf16.mxu0 0
  %2782 = vmatpush1.bf16.msra.mxu0 0
  %2783 = vmatprep.subr.bf16.mxu0 0
  %2784 = vmatpush1.bf16.msra.mxu0 0
  %2785 = vmatprep.subr.bf16.mxu0 0
  %2786 = vmatpush1.bf16.msra.mxu0 0
  %2787 = vmatprep.subr.bf16.mxu0 0
  %2788 = vmatpush1.bf16.msra.mxu0 0
  %2789 = vmatprep.subr.bf16.mxu0 0
  %2790 = vmatpush1.bf16.msra.mxu0 0
  %2791 = vmatprep.subr.bf16.mxu0 0
  %2792 = vmatpush1.bf16.msra.mxu0 0
  %2793 = vmatprep.subr.bf16.mxu0 0
  %2794 = vmatpush1.bf16.msra.mxu0 0
  %2795 = vmatprep.mubr.bf16.mxu0 0
  %2796 = vmatmul.mubr.bf16.gmra.mrb[0].mxu0 %v2755
  %v2797 = vpop.f32.mrb[0].mxu0
  %v2798 = vadd.f32 %v2742, %v2797
  %v2799 = vpop.f32.mrb[0].mxu0
  %v2800 = vpop.f32.mrb[0].mxu0
  %v2801 = vadd.f32 %v2742, %v2800
  %v2802 = vpop.f32.mrb[0].mxu0
  %2803 = vmatprep.mubr.bf16.mxu0 0
  %2804 = vmatmul.mubr.bf16.gmra.mrb[0].mxu0 %v2757
  %v2805 = vpop.f32.mrb[0].mxu0
  %v2806 = vadd.f32 %v2742, %v2805
  %v2807 = vpop.f32.mrb[0].mxu0
  %v2808 = vpop.f32.mrb[0].mxu0
  %v2809 = vadd.f32 %v2742, %v2808
  %v2810 = vpop.f32.mrb[0].mxu0
  %2811 = vmatprep.mubr.bf16.mxu0 0
  %2812 = vmatmul.mubr.bf16.gmra.mrb[0].mxu0 %v2759
  %v2813 = vpop.f32.mrb[0].mxu0
  %v2814 = vadd.f32 %v2742, %v2813
  %v2815 = vpop.f32.mrb[0].mxu0
  %v2816 = vpop.f32.mrb[0].mxu0
  %v2817 = vadd.f32 %v2742, %v2816
  %v2818 = vpop.f32.mrb[0].mxu0
  %2819 = vmatprep.mubr.bf16.mxu0 0
  %2820 = vmatmul.mubr.bf16.gmra.mrb[0].mxu0 %v2761
  %v2821 = vpop.f32.mrb[0].mxu0
  %v2822 = vadd.f32 %v2742, %v2821
  %v2823 = vpop.f32.mrb[0].mxu0
  %v2824 = vpop.f32.mrb[0].mxu0
  %v2825 = vadd.f32 %v2742, %v2824
  %v2826 = vpop.f32.mrb[0].mxu0
  %2827 = vdwg.mxu0
  %2828 = vst.msk [vmem:[#allocation4] sm:$0xff] %vm1855, %v2798
  %2829 = vst.msk [vmem:[#allocation4 + $0x8] sm:$0xff] %vm1855, %v2801
  %2830 = vst.msk [vmem:[#allocation4 + $0x10] sm:$0xff] %vm1855, %v2806
  %2831 = vst.msk [vmem:[#allocation4 + $0x18] sm:$0xff] %vm1855, %v2809
  %2832 = vst.msk [vmem:[#allocation4 + $0x20] sm:$0xff] %vm1855, %v2814
  %2833 = vst.msk [vmem:[#allocation4 + $0x28] sm:$0xff] %vm1855, %v2817
  %2834 = vst.msk [vmem:[#allocation4 + $0x30] sm:$0xff] %vm1855, %v2822
  %2835 = vst.msk [vmem:[#allocation4 + $0x38] sm:$0xff] %vm1855, %v2825
  %v2836 = vsel %vm1855, %v2798, 0.0
  %v2837 = vsel %vm1855, %v2801, 0.0
  %v2838 = vadd.f32 %v2836, %v2837
  %v2839 = vsel %vm1855, %v2806, 0.0
  %v2840 = vadd.f32 %v2838, %v2839
  %v2841 = vsel %vm1855, %v2809, 0.0
  %v2842 = vadd.f32 %v2840, %v2841
  %v2843 = vsel %vm1855, %v2814, 0.0
  %v2844 = vadd.f32 %v2842, %v2843
  %v2845 = vsel %vm1855, %v2817, 0.0
  %v2846 = vadd.f32 %v2844, %v2845
  %v2847 = vsel %vm1855, %v2822, 0.0
  %v2848 = vadd.f32 %v2846, %v2847
  %v2849 = vsel %vm1855, %v2825, 0.0
  %v2850 = vadd.f32 %v2848, %v2849
  %v2851 = vrot.slane %v2850, 4
  %v2852 = vadd.f32 %v2850, %v2851
  %v2853 = vrot.slane %v2852, 2
  %v2854 = vadd.f32 %v2852, %v2853
  %v2855 = vrot.slane %v2854, 1
  %v2856 = vadd.f32 %v2854, %v2855
  %v2857 = vadd.f32 %v2856, 0.0
  %v2858 = vld [vmem:[#allocation3] sm:$0xf]
  %v2859 = vld [vmem:[#allocation3 + $0x4] sm:$0x1]
  %v2860 = vld [vmem:[#allocation3 + $0x8] sm:$0xf]
  %v2861 = vld [vmem:[#allocation3 + $0xc] sm:$0x1]
  %v2862 = vld [vmem:[#allocation3 + $0x10] sm:$0xf]
  %v2863 = vld [vmem:[#allocation3 + $0x14] sm:$0x1]
  %v2864 = vld [vmem:[#allocation3 + $0x18] sm:$0xf]
  %v2865 = vld [vmem:[#allocation3 + $0x1c] sm:$0x1]
  %v2866 = vld [vmem:[#allocation3 + $0x20] sm:$0xf]
  %v2867 = vld [vmem:[#allocation3 + $0x24] sm:$0x1]
  %v2868 = vld [vmem:[#allocation3 + $0x28] sm:$0xf]
  %v2869 = vld [vmem:[#allocation3 + $0x2c] sm:$0x1]
  %v2870 = vld [vmem:[#allocation3 + $0x30] sm:$0xf]
  %v2871 = vld [vmem:[#allocation3 + $0x34] sm:$0x1]
  %v2872 = vld [vmem:[#allocation3 + $0x38] sm:$0xf]
  %v2873 = vld [vmem:[#allocation3 + $0x3c] sm:$0x1]
  %v2875 = vshrl.u32 %v2858, 16
  %v2877 = vrot.slane %v2875, 4
  %v2878 = vshll.u32 %v2858, 16
  %v2880 = vrot.slane %v2878, 5
  %v2881 = vor.u32 %v2877, %v2880
  %v2882 = vrot.slane %v2881, 4
  %v2884 = vshll.u32 %v2859, 16
  %v2886 = vrot.slane %v2884, 5
  %v2887 = vsel %vm173, %v2882, %v2886
  %v2889 = vshrl.u32 %v2860, 16
  %v2891 = vrot.slane %v2889, 4
  %v2892 = vshll.u32 %v2860, 16
  %v2894 = vrot.slane %v2892, 5
  %v2895 = vor.u32 %v2891, %v2894
  %v2896 = vrot.slane %v2895, 4
  %v2898 = vshll.u32 %v2861, 16
  %v2900 = vrot.slane %v2898, 5
  %v2901 = vsel %vm173, %v2896, %v2900
  %v2903 = vshrl.u32 %v2862, 16
  %v2905 = vrot.slane %v2903, 4
  %v2906 = vshll.u32 %v2862, 16
  %v2908 = vrot.slane %v2906, 5
  %v2909 = vor.u32 %v2905, %v2908
  %v2910 = vrot.slane %v2909, 4
  %v2912 = vshll.u32 %v2863, 16
  %v2914 = vrot.slane %v2912, 5
  %v2915 = vsel %vm173, %v2910, %v2914
  %v2917 = vshrl.u32 %v2864, 16
  %v2919 = vrot.slane %v2917, 4
  %v2920 = vshll.u32 %v2864, 16
  %v2922 = vrot.slane %v2920, 5
  %v2923 = vor.u32 %v2919, %v2922
  %v2924 = vrot.slane %v2923, 4
  %v2926 = vshll.u32 %v2865, 16
  %v2928 = vrot.slane %v2926, 5
  %v2929 = vsel %vm173, %v2924, %v2928
  %v2931 = vshrl.u32 %v2866, 16
  %v2933 = vrot.slane %v2931, 4
  %v2934 = vshll.u32 %v2866, 16
  %v2936 = vrot.slane %v2934, 5
  %v2937 = vor.u32 %v2933, %v2936
  %v2938 = vrot.slane %v2937, 4
  %v2940 = vshll.u32 %v2867, 16
  %v2942 = vrot.slane %v2940, 5
  %v2943 = vsel %vm173, %v2938, %v2942
  %v2945 = vshrl.u32 %v2868, 16
  %v2947 = vrot.slane %v2945, 4
  %v2948 = vshll.u32 %v2868, 16
  %v2950 = vrot.slane %v2948, 5
  %v2951 = vor.u32 %v2947, %v2950
  %v2952 = vrot.slane %v2951, 4
  %v2954 = vshll.u32 %v2869, 16
  %v2956 = vrot.slane %v2954, 5
  %v2957 = vsel %vm173, %v2952, %v2956
  %v2959 = vshrl.u32 %v2870, 16
  %v2961 = vrot.slane %v2959, 4
  %v2962 = vshll.u32 %v2870, 16
  %v2964 = vrot.slane %v2962, 5
  %v2965 = vor.u32 %v2961, %v2964
  %v2966 = vrot.slane %v2965, 4
  %v2968 = vshll.u32 %v2871, 16
  %v2970 = vrot.slane %v2968, 5
  %v2971 = vsel %vm173, %v2966, %v2970
  %v2973 = vshrl.u32 %v2872, 16
  %v2975 = vrot.slane %v2973, 4
  %v2976 = vshll.u32 %v2872, 16
  %v2978 = vrot.slane %v2976, 5
  %v2979 = vor.u32 %v2975, %v2978
  %v2980 = vrot.slane %v2979, 4
  %v2982 = vshll.u32 %v2873, 16
  %v2984 = vrot.slane %v2982, 5
  %v2985 = vsel %vm173, %v2980, %v2984
  %v2986 = vld [vmem:[#allocation3] sm:$0xe]
  %v2987 = vld [vmem:[#allocation3 + $0x8] sm:$0xe]
  %v2988 = vld [vmem:[#allocation3 + $0x10] sm:$0xe]
  %v2989 = vld [vmem:[#allocation3 + $0x18] sm:$0xe]
  %v2990 = vld [vmem:[#allocation3 + $0x20] sm:$0xe]
  %v2991 = vld [vmem:[#allocation3 + $0x28] sm:$0xe]
  %v2992 = vld [vmem:[#allocation3 + $0x30] sm:$0xe]
  %v2993 = vld [vmem:[#allocation3 + $0x38] sm:$0xe]
  %v3010 = vrot.slane %v2986, 5
  %v3011 = vrot.slane %v3010, 4
  %v3012 = vrot.slane %v2859, 5
  %v3013 = vsel %vm312, %v3011, %v3012
  %v3014 = vrot.slane %v2987, 5
  %v3015 = vrot.slane %v3014, 4
  %v3016 = vrot.slane %v2861, 5
  %v3017 = vsel %vm312, %v3015, %v3016
  %v3018 = vrot.slane %v2988, 5
  %v3019 = vrot.slane %v3018, 4
  %v3020 = vrot.slane %v2863, 5
  %v3021 = vsel %vm312, %v3019, %v3020
  %v3022 = vrot.slane %v2989, 5
  %v3023 = vrot.slane %v3022, 4
  %v3024 = vrot.slane %v2865, 5
  %v3025 = vsel %vm312, %v3023, %v3024
  %v3026 = vrot.slane %v2990, 5
  %v3027 = vrot.slane %v3026, 4
  %v3028 = vrot.slane %v2867, 5
  %v3029 = vsel %vm312, %v3027, %v3028
  %v3030 = vrot.slane %v2991, 5
  %v3031 = vrot.slane %v3030, 4
  %v3032 = vrot.slane %v2869, 5
  %v3033 = vsel %vm312, %v3031, %v3032
  %v3034 = vrot.slane %v2992, 5
  %v3035 = vrot.slane %v3034, 4
  %v3036 = vrot.slane %v2871, 5
  %v3037 = vsel %vm312, %v3035, %v3036
  %v3038 = vrot.slane %v2993, 5
  %v3039 = vrot.slane %v3038, 4
  %v3040 = vrot.slane %v2873, 5
  %v3041 = vsel %vm312, %v3039, %v3040
  %v3042 = vld [vmem:[%s2146] sm:$0xf]
  %v3043 = vld [vmem:[%s2146 + $0x4] sm:$0x1]
  %v3044 = vld [vmem:[%s2146 + $0x8] sm:$0xf]
  %v3045 = vld [vmem:[%s2146 + $0xc] sm:$0x1]
  %v3046 = vld [vmem:[%s2146 + $0x10] sm:$0xf]
  %v3047 = vld [vmem:[%s2146 + $0x14] sm:$0x1]
  %v3048 = vld [vmem:[%s2146 + $0x18] sm:$0xf]
  %v3049 = vld [vmem:[%s2146 + $0x1c] sm:$0x1]
  %v3050 = vld [vmem:[%s2146 + $0x20] sm:$0xf]
  %v3051 = vld [vmem:[%s2146 + $0x24] sm:$0x1]
  %v3052 = vld [vmem:[%s2146 + $0x28] sm:$0xf]
  %v3053 = vld [vmem:[%s2146 + $0x2c] sm:$0x1]
  %v3054 = vld [vmem:[%s2146 + $0x30] sm:$0xf]
  %v3055 = vld [vmem:[%s2146 + $0x34] sm:$0x1]
  %v3056 = vld [vmem:[%s2146 + $0x38] sm:$0xf]
  %v3057 = vld [vmem:[%s2146 + $0x3c] sm:$0x1]
  %v3059 = vshrl.u32 %v3042, 16
  %v3061 = vrot.slane %v3059, 4
  %v3062 = vshll.u32 %v3042, 16
  %v3064 = vrot.slane %v3062, 5
  %v3065 = vor.u32 %v3061, %v3064
  %v3066 = vrot.slane %v3065, 4
  %v3068 = vshll.u32 %v3043, 16
  %v3070 = vrot.slane %v3068, 5
  %v3071 = vsel %vm173, %v3066, %v3070
  %v3073 = vshrl.u32 %v3044, 16
  %v3075 = vrot.slane %v3073, 4
  %v3076 = vshll.u32 %v3044, 16
  %v3078 = vrot.slane %v3076, 5
  %v3079 = vor.u32 %v3075, %v3078
  %v3080 = vrot.slane %v3079, 4
  %v3082 = vshll.u32 %v3045, 16
  %v3084 = vrot.slane %v3082, 5
  %v3085 = vsel %vm173, %v3080, %v3084
  %v3087 = vshrl.u32 %v3046, 16
  %v3089 = vrot.slane %v3087, 4
  %v3090 = vshll.u32 %v3046, 16
  %v3092 = vrot.slane %v3090, 5
  %v3093 = vor.u32 %v3089, %v3092
  %v3094 = vrot.slane %v3093, 4
  %v3096 = vshll.u32 %v3047, 16
  %v3098 = vrot.slane %v3096, 5
  %v3099 = vsel %vm173, %v3094, %v3098
  %v3101 = vshrl.u32 %v3048, 16
  %v3103 = vrot.slane %v3101, 4
  %v3104 = vshll.u32 %v3048, 16
  %v3106 = vrot.slane %v3104, 5
  %v3107 = vor.u32 %v3103, %v3106
  %v3108 = vrot.slane %v3107, 4
  %v3110 = vshll.u32 %v3049, 16
  %v3112 = vrot.slane %v3110, 5
  %v3113 = vsel %vm173, %v3108, %v3112
  %v3115 = vshrl.u32 %v3050, 16
  %v3117 = vrot.slane %v3115, 4
  %v3118 = vshll.u32 %v3050, 16
  %v3120 = vrot.slane %v3118, 5
  %v3121 = vor.u32 %v3117, %v3120
  %v3122 = vrot.slane %v3121, 4
  %v3124 = vshll.u32 %v3051, 16
  %v3126 = vrot.slane %v3124, 5
  %v3127 = vsel %vm173, %v3122, %v3126
  %v3129 = vshrl.u32 %v3052, 16
  %v3131 = vrot.slane %v3129, 4
  %v3132 = vshll.u32 %v3052, 16
  %v3134 = vrot.slane %v3132, 5
  %v3135 = vor.u32 %v3131, %v3134
  %v3136 = vrot.slane %v3135, 4
  %v3138 = vshll.u32 %v3053, 16
  %v3140 = vrot.slane %v3138, 5
  %v3141 = vsel %vm173, %v3136, %v3140
  %v3143 = vshrl.u32 %v3054, 16
  %v3145 = vrot.slane %v3143, 4
  %v3146 = vshll.u32 %v3054, 16
  %v3148 = vrot.slane %v3146, 5
  %v3149 = vor.u32 %v3145, %v3148
  %v3150 = vrot.slane %v3149, 4
  %v3152 = vshll.u32 %v3055, 16
  %v3154 = vrot.slane %v3152, 5
  %v3155 = vsel %vm173, %v3150, %v3154
  %v3157 = vshrl.u32 %v3056, 16
  %v3159 = vrot.slane %v3157, 4
  %v3160 = vshll.u32 %v3056, 16
  %v3162 = vrot.slane %v3160, 5
  %v3163 = vor.u32 %v3159, %v3162
  %v3164 = vrot.slane %v3163, 4
  %v3166 = vshll.u32 %v3057, 16
  %v3168 = vrot.slane %v3166, 5
  %v3169 = vsel %vm173, %v3164, %v3168
  %v3170 = vld [vmem:[%s2146] sm:$0xe]
  %v3171 = vld [vmem:[%s2146 + $0x8] sm:$0xe]
  %v3172 = vld [vmem:[%s2146 + $0x10] sm:$0xe]
  %v3173 = vld [vmem:[%s2146 + $0x18] sm:$0xe]
  %v3174 = vld [vmem:[%s2146 + $0x20] sm:$0xe]
  %v3175 = vld [vmem:[%s2146 + $0x28] sm:$0xe]
  %v3176 = vld [vmem:[%s2146 + $0x30] sm:$0xe]
  %v3177 = vld [vmem:[%s2146 + $0x38] sm:$0xe]
  %v3194 = vrot.slane %v3170, 5
  %v3195 = vrot.slane %v3194, 4
  %v3196 = vrot.slane %v3043, 5
  %v3197 = vsel %vm312, %v3195, %v3196
  %v3198 = vrot.slane %v3171, 5
  %v3199 = vrot.slane %v3198, 4
  %v3200 = vrot.slane %v3045, 5
  %v3201 = vsel %vm312, %v3199, %v3200
  %v3202 = vrot.slane %v3172, 5
  %v3203 = vrot.slane %v3202, 4
  %v3204 = vrot.slane %v3047, 5
  %v3205 = vsel %vm312, %v3203, %v3204
  %v3206 = vrot.slane %v3173, 5
  %v3207 = vrot.slane %v3206, 4
  %v3208 = vrot.slane %v3049, 5
  %v3209 = vsel %vm312, %v3207, %v3208
  %v3210 = vrot.slane %v3174, 5
  %v3211 = vrot.slane %v3210, 4
  %v3212 = vrot.slane %v3051, 5
  %v3213 = vsel %vm312, %v3211, %v3212
  %v3214 = vrot.slane %v3175, 5
  %v3215 = vrot.slane %v3214, 4
  %v3216 = vrot.slane %v3053, 5
  %v3217 = vsel %vm312, %v3215, %v3216
  %v3218 = vrot.slane %v3176, 5
  %v3219 = vrot.slane %v3218, 4
  %v3220 = vrot.slane %v3055, 5
  %v3221 = vsel %vm312, %v3219, %v3220
  %v3222 = vrot.slane %v3177, 5
  %v3223 = vrot.slane %v3222, 4
  %v3224 = vrot.slane %v3057, 5
  %v3225 = vsel %vm312, %v3223, %v3224
  %v3226 = vunpack.c.l.b16 %v2887
  %v3227 = vunpack.c.l.b16 %v2901
  %v3228 = vunpack.c.l.b16 %v2915
  %v3229 = vunpack.c.l.b16 %v2929
  %v3230 = vunpack.c.l.b16 %v2943
  %v3231 = vunpack.c.l.b16 %v2957
  %v3232 = vunpack.c.l.b16 %v2971
  %v3233 = vunpack.c.l.b16 %v2985
  %v3234 = vpack.c.b16 %v3227, %v3226
  %v3235 = vpack.c.b16 %v3229, %v3228
  %v3236 = vpack.c.b16 %v3231, %v3230
  %v3237 = vpack.c.b16 %v3233, %v3232
  %v3238 = vunpack.c.l.b16 %v3013
  %v3239 = vunpack.c.l.b16 %v3017
  %v3240 = vunpack.c.l.b16 %v3021
  %v3241 = vunpack.c.l.b16 %v3025
  %v3242 = vunpack.c.l.b16 %v3029
  %v3243 = vunpack.c.l.b16 %v3033
  %v3244 = vunpack.c.l.b16 %v3037
  %v3245 = vunpack.c.l.b16 %v3041
  %v3246 = vpack.c.b16 %v3239, %v3238
  %v3247 = vpack.c.b16 %v3241, %v3240
  %v3248 = vpack.c.b16 %v3243, %v3242
  %v3249 = vpack.c.b16 %v3245, %v3244
  %3250 = vrot.lane.b32.xlu0 %v3246, 8
  %v3251 = vpop.permute.xlu0 %3250
  %3252 = vrot.lane.b32.xlu0 %v3247, 8
  %v3253 = vpop.permute.xlu0 %3252
  %3254 = vrot.lane.b32.xlu0 %v3248, 8
  %v3255 = vpop.permute.xlu0 %3254
  %3256 = vrot.lane.b32.xlu0 %v3249, 8
  %v3257 = vpop.permute.xlu0 %3256
  %v3258 = vunpack.c.l.b16 %v3071
  %v3259 = vunpack.c.l.b16 %v3085
  %v3260 = vunpack.c.l.b16 %v3099
  %v3261 = vunpack.c.l.b16 %v3113
  %v3262 = vunpack.c.l.b16 %v3127
  %v3263 = vunpack.c.l.b16 %v3141
  %v3264 = vunpack.c.l.b16 %v3155
  %v3265 = vunpack.c.l.b16 %v3169
  %v3266 = vpack.c.b16 %v3259, %v3258
  %v3267 = vpack.c.b16 %v3261, %v3260
  %v3268 = vpack.c.b16 %v3263, %v3262
  %v3269 = vpack.c.b16 %v3265, %v3264
  %3270 = vrot.lane.b32.xlu0 %v3266, 16
  %v3271 = vpop.permute.xlu0 %3270
  %3272 = vrot.lane.b32.xlu0 %v3267, 16
  %v3273 = vpop.permute.xlu0 %3272
  %3274 = vrot.lane.b32.xlu0 %v3268, 16
  %v3275 = vpop.permute.xlu0 %3274
  %3276 = vrot.lane.b32.xlu0 %v3269, 16
  %v3277 = vpop.permute.xlu0 %3276
  %v3278 = vunpack.c.l.b16 %v3197
  %v3279 = vunpack.c.l.b16 %v3201
  %v3280 = vunpack.c.l.b16 %v3205
  %v3281 = vunpack.c.l.b16 %v3209
  %v3282 = vunpack.c.l.b16 %v3213
  %v3283 = vunpack.c.l.b16 %v3217
  %v3284 = vunpack.c.l.b16 %v3221
  %v3285 = vunpack.c.l.b16 %v3225
  %v3286 = vpack.c.b16 %v3279, %v3278
  %v3287 = vpack.c.b16 %v3281, %v3280
  %v3288 = vpack.c.b16 %v3283, %v3282
  %v3289 = vpack.c.b16 %v3285, %v3284
  %3290 = vrot.lane.b32.xlu0 %v3286, 24
  %v3291 = vpop.permute.xlu0 %3290
  %3292 = vrot.lane.b32.xlu0 %v3287, 24
  %v3293 = vpop.permute.xlu0 %3292
  %3294 = vrot.lane.b32.xlu0 %v3288, 24
  %v3295 = vpop.permute.xlu0 %3294
  %3296 = vrot.lane.b32.xlu0 %v3289, 24
  %v3297 = vpop.permute.xlu0 %3296
  %v3300 = vsel %vm1855, %v3234, %v3251
  %v3303 = vsel %vm1855, %v3235, %v3253
  %v3306 = vsel %vm1855, %v3236, %v3255
  %v3309 = vsel %vm1855, %v3237, %v3257
  %v3311 = vsel %vm1868, %v3300, %v3271
  %v3313 = vsel %vm1868, %v3303, %v3273
  %v3315 = vsel %vm1868, %v3306, %v3275
  %v3317 = vsel %vm1868, %v3309, %v3277
  %v3319 = vsel %vm1877, %v3311, %v3291
  %v3321 = vsel %vm1877, %v3313, %v3293
  %v3323 = vsel %vm1877, %v3315, %v3295
  %v3325 = vsel %vm1877, %v3317, %v3297
  %s3326 = scalar_lea.vmem %s2, 16
  %v3327 = vld [vmem:[%s3326] sm:$0xf]
  %v3328 = vld [vmem:[%s3326 + $0x4] sm:$0xf]
  %v3329 = vld [vmem:[%s3326 + $0x8] sm:$0xf]
  %v3330 = vld [vmem:[%s3326 + $0xc] sm:$0xf]
  %v3335 = vunpack.c.l.b16 %v3327
  %v3336 = vunpack.c.l.b16 %v3328
  %v3337 = vunpack.c.l.b16 %v3329
  %v3338 = vunpack.c.l.b16 %v3330
  %v3339 = vpack.c.b16 %v3336, %v3335
  %v3340 = vpack.c.b16 %v3338, %v3337
  %v3343 = vsel %vm1886, %v3319, 0
  %v3345 = vsel %vm1886, %v3321, 0
  %v3347 = vsel %vm1886, %v3323, 0
  %v3349 = vsel %vm1886, %v3325, 0
  %3351 = vmatprep.subr.bf16.mxu0 0
  %3352 = vmatpush1.bf16.msra.mxu0 %v3339
  %3353 = vmatprep.subr.bf16.mxu0 0
  %3354 = vmatpush1.bf16.msra.mxu0 %v3340
  %3355 = vmatprep.subr.bf16.mxu0 0
  %3356 = vmatpush1.bf16.msra.mxu0 0
  %3357 = vmatprep.subr.bf16.mxu0 0
  %3358 = vmatpush1.bf16.msra.mxu0 0
  %3359 = vmatprep.subr.bf16.mxu0 0
  %3360 = vmatpush1.bf16.msra.mxu0 0
  %3361 = vmatprep.subr.bf16.mxu0 0
  %3362 = vmatpush1.bf16.msra.mxu0 0
  %3363 = vmatprep.subr.bf16.mxu0 0
  %3364 = vmatpush1.bf16.msra.mxu0 0
  %3365 = vmatprep.subr.bf16.mxu0 0
  %3366 = vmatpush1.bf16.msra.mxu0 0
  %3367 = vmatprep.subr.bf16.mxu0 0
  %3368 = vmatpush1.bf16.msra.mxu0 0
  %3369 = vmatprep.subr.bf16.mxu0 0
  %3370 = vmatpush1.bf16.msra.mxu0 0
  %3371 = vmatprep.subr.bf16.mxu0 0
  %3372 = vmatpush1.bf16.msra.mxu0 0
  %3373 = vmatprep.subr.bf16.mxu0 0
  %3374 = vmatpush1.bf16.msra.mxu0 0
  %3375 = vmatprep.subr.bf16.mxu0 0
  %3376 = vmatpush1.bf16.msra.mxu0 0
  %3377 = vmatprep.subr.bf16.mxu0 0
  %3378 = vmatpush1.bf16.msra.mxu0 0
  %3379 = vmatprep.subr.bf16.mxu0 0
  %3380 = vmatpush1.bf16.msra.mxu0 0
  %3381 = vmatprep.subr.bf16.mxu0 0
  %3382 = vmatpush1.bf16.msra.mxu0 0
  %3383 = vmatprep.mubr.bf16.mxu0 0
  %3384 = vmatmul.mubr.bf16.gmra.mrb[0].mxu0 %v3343
  %v3385 = vpop.f32.mrb[0].mxu0
  %v3386 = vadd.f32 %v2742, %v3385
  %v3387 = vpop.f32.mrb[0].mxu0
  %v3388 = vpop.f32.mrb[0].mxu0
  %v3389 = vadd.f32 %v2742, %v3388
  %v3390 = vpop.f32.mrb[0].mxu0
  %3391 = vmatprep.mubr.bf16.mxu0 0
  %3392 = vmatmul.mubr.bf16.gmra.mrb[0].mxu0 %v3345
  %v3393 = vpop.f32.mrb[0].mxu0
  %v3394 = vadd.f32 %v2742, %v3393
  %v3395 = vpop.f32.mrb[0].mxu0
  %v3396 = vpop.f32.mrb[0].mxu0
  %v3397 = vadd.f32 %v2742, %v3396
  %v3398 = vpop.f32.mrb[0].mxu0
  %3399 = vmatprep.mubr.bf16.mxu0 0
  %3400 = vmatmul.mubr.bf16.gmra.mrb[0].mxu0 %v3347
  %v3401 = vpop.f32.mrb[0].mxu0
  %v3402 = vadd.f32 %v2742, %v3401
  %v3403 = vpop.f32.mrb[0].mxu0
  %v3404 = vpop.f32.mrb[0].mxu0
  %v3405 = vadd.f32 %v2742, %v3404
  %v3406 = vpop.f32.mrb[0].mxu0
  %3407 = vmatprep.mubr.bf16.mxu0 0
  %3408 = vmatmul.mubr.bf16.gmra.mrb[0].mxu0 %v3349
  %v3409 = vpop.f32.mrb[0].mxu0
  %v3410 = vadd.f32 %v2742, %v3409
  %v3411 = vpop.f32.mrb[0].mxu0
  %v3412 = vpop.f32.mrb[0].mxu0
  %v3413 = vadd.f32 %v2742, %v3412
  %v3414 = vpop.f32.mrb[0].mxu0
  %3415 = vdwg.mxu0
  %3416 = vst.msk [vmem:[#allocation4 + $0x40] sm:$0xff] %vm1855, %v3386
  %3417 = vst.msk [vmem:[#allocation4 + $0x48] sm:$0xff] %vm1855, %v3389
  %3418 = vst.msk [vmem:[#allocation4 + $0x50] sm:$0xff] %vm1855, %v3394
  %3419 = vst.msk [vmem:[#allocation4 + $0x58] sm:$0xff] %vm1855, %v3397
  %3420 = vst.msk [vmem:[#allocation4 + $0x60] sm:$0xff] %vm1855, %v3402
  %3421 = vst.msk [vmem:[#allocation4 + $0x68] sm:$0xff] %vm1855, %v3405
  %3422 = vst.msk [vmem:[#allocation4 + $0x70] sm:$0xff] %vm1855, %v3410
  %3423 = vst.msk [vmem:[#allocation4 + $0x78] sm:$0xff] %vm1855, %v3413
  %v3424 = vsel %vm1855, %v3386, 0.0
  %v3425 = vsel %vm1855, %v3389, 0.0
  %v3426 = vadd.f32 %v3424, %v3425
  %v3427 = vsel %vm1855, %v3394, 0.0
  %v3428 = vadd.f32 %v3426, %v3427
  %v3429 = vsel %vm1855, %v3397, 0.0
  %v3430 = vadd.f32 %v3428, %v3429
  %v3431 = vsel %vm1855, %v3402, 0.0
  %v3432 = vadd.f32 %v3430, %v3431
  %v3433 = vsel %vm1855, %v3405, 0.0
  %v3434 = vadd.f32 %v3432, %v3433
  %v3435 = vsel %vm1855, %v3410, 0.0
  %v3436 = vadd.f32 %v3434, %v3435
  %v3437 = vsel %vm1855, %v3413, 0.0
  %v3438 = vadd.f32 %v3436, %v3437
  %v3439 = vrot.slane %v3438, 4
  %v3440 = vadd.f32 %v3438, %v3439
  %v3441 = vrot.slane %v3440, 2
  %v3442 = vadd.f32 %v3440, %v3441
  %v3443 = vrot.slane %v3442, 1
  %v3444 = vadd.f32 %v3442, %v3443
  %v3445 = vadd.f32 %v2857, %v3444
  %v3446 = vld [vmem:[%s2146] sm:$0xf]
  %v3447 = vld [vmem:[%s2146 + $0x8] sm:$0xf]
  %v3448 = vld [vmem:[%s2146 + $0x10] sm:$0xf]
  %v3449 = vld [vmem:[%s2146 + $0x18] sm:$0xf]
  %v3450 = vld [vmem:[%s2146 + $0x20] sm:$0xf]
  %v3451 = vld [vmem:[%s2146 + $0x28] sm:$0xf]
  %v3452 = vld [vmem:[%s2146 + $0x30] sm:$0xf]
  %v3453 = vld [vmem:[%s2146 + $0x38] sm:$0xf]
  %v3454 = vld [vmem:[%s2146 + $0x4] sm:$0x1]
  %v3455 = vld [vmem:[%s2146 + $0xc] sm:$0x1]
  %v3456 = vld [vmem:[%s2146 + $0x14] sm:$0x1]
  %v3457 = vld [vmem:[%s2146 + $0x1c] sm:$0x1]
  %v3458 = vld [vmem:[%s2146 + $0x24] sm:$0x1]
  %v3459 = vld [vmem:[%s2146 + $0x2c] sm:$0x1]
  %v3460 = vld [vmem:[%s2146 + $0x34] sm:$0x1]
  %v3461 = vld [vmem:[%s2146 + $0x3c] sm:$0x1]
  %v3463 = vshrl.u32 %v3446, 16
  %v3465 = vrot.slane %v3463, 4
  %v3466 = vshll.u32 %v3446, 16
  %v3468 = vrot.slane %v3466, 5
  %v3469 = vor.u32 %v3465, %v3468
  %v3470 = vrot.slane %v3469, 4
  %v3472 = vshll.u32 %v3454, 16
  %v3474 = vrot.slane %v3472, 5
  %v3475 = vsel %vm173, %v3470, %v3474
  %v3477 = vshrl.u32 %v3447, 16
  %v3479 = vrot.slane %v3477, 4
  %v3480 = vshll.u32 %v3447, 16
  %v3482 = vrot.slane %v3480, 5
  %v3483 = vor.u32 %v3479, %v3482
  %v3484 = vrot.slane %v3483, 4
  %v3486 = vshll.u32 %v3455, 16
  %v3488 = vrot.slane %v3486, 5
  %v3489 = vsel %vm173, %v3484, %v3488
  %v3491 = vshrl.u32 %v3448, 16
  %v3493 = vrot.slane %v3491, 4
  %v3494 = vshll.u32 %v3448, 16
  %v3496 = vrot.slane %v3494, 5
  %v3497 = vor.u32 %v3493, %v3496
  %v3498 = vrot.slane %v3497, 4
  %v3500 = vshll.u32 %v3456, 16
  %v3502 = vrot.slane %v3500, 5
  %v3503 = vsel %vm173, %v3498, %v3502
  %v3505 = vshrl.u32 %v3449, 16
  %v3507 = vrot.slane %v3505, 4
  %v3508 = vshll.u32 %v3449, 16
  %v3510 = vrot.slane %v3508, 5
  %v3511 = vor.u32 %v3507, %v3510
  %v3512 = vrot.slane %v3511, 4
  %v3514 = vshll.u32 %v3457, 16
  %v3516 = vrot.slane %v3514, 5
  %v3517 = vsel %vm173, %v3512, %v3516
  %v3519 = vshrl.u32 %v3450, 16
  %v3521 = vrot.slane %v3519, 4
  %v3522 = vshll.u32 %v3450, 16
  %v3524 = vrot.slane %v3522, 5
  %v3525 = vor.u32 %v3521, %v3524
  %v3526 = vrot.slane %v3525, 4
  %v3528 = vshll.u32 %v3458, 16
  %v3530 = vrot.slane %v3528, 5
  %v3531 = vsel %vm173, %v3526, %v3530
  %v3533 = vshrl.u32 %v3451, 16
  %v3535 = vrot.slane %v3533, 4
  %v3536 = vshll.u32 %v3451, 16
  %v3538 = vrot.slane %v3536, 5
  %v3539 = vor.u32 %v3535, %v3538
  %v3540 = vrot.slane %v3539, 4
  %v3542 = vshll.u32 %v3459, 16
  %v3544 = vrot.slane %v3542, 5
  %v3545 = vsel %vm173, %v3540, %v3544
  %v3547 = vshrl.u32 %v3452, 16
  %v3549 = vrot.slane %v3547, 4
  %v3550 = vshll.u32 %v3452, 16
  %v3552 = vrot.slane %v3550, 5
  %v3553 = vor.u32 %v3549, %v3552
  %v3554 = vrot.slane %v3553, 4
  %v3556 = vshll.u32 %v3460, 16
  %v3558 = vrot.slane %v3556, 5
  %v3559 = vsel %vm173, %v3554, %v3558
  %v3561 = vshrl.u32 %v3453, 16
  %v3563 = vrot.slane %v3561, 4
  %v3564 = vshll.u32 %v3453, 16
  %v3566 = vrot.slane %v3564, 5
  %v3567 = vor.u32 %v3563, %v3566
  %v3568 = vrot.slane %v3567, 4
  %v3570 = vshll.u32 %v3461, 16
  %v3572 = vrot.slane %v3570, 5
  %v3573 = vsel %vm173, %v3568, %v3572
  %s3574 = scalar_lea.vmem [#allocation3], 16
  %v3575 = vld [vmem:[%s3574] sm:$0xf]
  %v3576 = vld [vmem:[%s3574 + $0x8] sm:$0xf]
  %v3577 = vld [vmem:[%s3574 + $0x10] sm:$0xf]
  %v3578 = vld [vmem:[%s3574 + $0x18] sm:$0xf]
  %v3579 = vld [vmem:[%s3574 + $0x20] sm:$0xf]
  %v3580 = vld [vmem:[%s3574 + $0x28] sm:$0xf]
  %v3581 = vld [vmem:[%s3574 + $0x30] sm:$0xf]
  %v3582 = vld [vmem:[%s3574 + $0x38] sm:$0xf]
  %v3583 = vld [vmem:[%s3574 + $0x4] sm:$0x1]
  %v3584 = vld [vmem:[%s3574 + $0xc] sm:$0x1]
  %v3585 = vld [vmem:[%s3574 + $0x14] sm:$0x1]
  %v3586 = vld [vmem:[%s3574 + $0x1c] sm:$0x1]
  %v3587 = vld [vmem:[%s3574 + $0x24] sm:$0x1]
  %v3588 = vld [vmem:[%s3574 + $0x2c] sm:$0x1]
  %v3589 = vld [vmem:[%s3574 + $0x34] sm:$0x1]
  %v3590 = vld [vmem:[%s3574 + $0x3c] sm:$0x1]
  %v3592 = vshrl.u32 %v3575, 16
  %v3594 = vrot.slane %v3592, 4
  %v3595 = vshll.u32 %v3575, 16
  %v3597 = vrot.slane %v3595, 5
  %v3598 = vor.u32 %v3594, %v3597
  %v3599 = vrot.slane %v3598, 4
  %v3601 = vshll.u32 %v3583, 16
  %v3603 = vrot.slane %v3601, 5
  %v3604 = vsel %vm173, %v3599, %v3603
  %v3606 = vshrl.u32 %v3576, 16
  %v3608 = vrot.slane %v3606, 4
  %v3609 = vshll.u32 %v3576, 16
  %v3611 = vrot.slane %v3609, 5
  %v3612 = vor.u32 %v3608, %v3611
  %v3613 = vrot.slane %v3612, 4
  %v3615 = vshll.u32 %v3584, 16
  %v3617 = vrot.slane %v3615, 5
  %v3618 = vsel %vm173, %v3613, %v3617
  %v3620 = vshrl.u32 %v3577, 16
  %v3622 = vrot.slane %v3620, 4
  %v3623 = vshll.u32 %v3577, 16
  %v3625 = vrot.slane %v3623, 5
  %v3626 = vor.u32 %v3622, %v3625
  %v3627 = vrot.slane %v3626, 4
  %v3629 = vshll.u32 %v3585, 16
  %v3631 = vrot.slane %v3629, 5
  %v3632 = vsel %vm173, %v3627, %v3631
  %v3634 = vshrl.u32 %v3578, 16
  %v3636 = vrot.slane %v3634, 4
  %v3637 = vshll.u32 %v3578, 16
  %v3639 = vrot.slane %v3637, 5
  %v3640 = vor.u32 %v3636, %v3639
  %v3641 = vrot.slane %v3640, 4
  %v3643 = vshll.u32 %v3586, 16
  %v3645 = vrot.slane %v3643, 5
  %v3646 = vsel %vm173, %v3641, %v3645
  %v3648 = vshrl.u32 %v3579, 16
  %v3650 = vrot.slane %v3648, 4
  %v3651 = vshll.u32 %v3579, 16
  %v3653 = vrot.slane %v3651, 5
  %v3654 = vor.u32 %v3650, %v3653
  %v3655 = vrot.slane %v3654, 4
  %v3657 = vshll.u32 %v3587, 16
  %v3659 = vrot.slane %v3657, 5
  %v3660 = vsel %vm173, %v3655, %v3659
  %v3662 = vshrl.u32 %v3580, 16
  %v3664 = vrot.slane %v3662, 4
  %v3665 = vshll.u32 %v3580, 16
  %v3667 = vrot.slane %v3665, 5
  %v3668 = vor.u32 %v3664, %v3667
  %v3669 = vrot.slane %v3668, 4
  %v3671 = vshll.u32 %v3588, 16
  %v3673 = vrot.slane %v3671, 5
  %v3674 = vsel %vm173, %v3669, %v3673
  %v3676 = vshrl.u32 %v3581, 16
  %v3678 = vrot.slane %v3676, 4
  %v3679 = vshll.u32 %v3581, 16
  %v3681 = vrot.slane %v3679, 5
  %v3682 = vor.u32 %v3678, %v3681
  %v3683 = vrot.slane %v3682, 4
  %v3685 = vshll.u32 %v3589, 16
  %v3687 = vrot.slane %v3685, 5
  %v3688 = vsel %vm173, %v3683, %v3687
  %v3690 = vshrl.u32 %v3582, 16
  %v3692 = vrot.slane %v3690, 4
  %v3693 = vshll.u32 %v3582, 16
  %v3695 = vrot.slane %v3693, 5
  %v3696 = vor.u32 %v3692, %v3695
  %v3697 = vrot.slane %v3696, 4
  %v3699 = vshll.u32 %v3590, 16
  %v3701 = vrot.slane %v3699, 5
  %v3702 = vsel %vm173, %v3697, %v3701
  %v3711 = vunpack.c.l.b16 %v3446
  %v3712 = vunpack.c.l.b16 %v3447
  %v3713 = vunpack.c.l.b16 %v3448
  %v3714 = vunpack.c.l.b16 %v3449
  %v3715 = vunpack.c.l.b16 %v3450
  %v3716 = vunpack.c.l.b16 %v3451
  %v3717 = vunpack.c.l.b16 %v3452
  %v3718 = vunpack.c.l.b16 %v3453
  %v3719 = vpack.c.b16 %v3712, %v3711
  %v3720 = vpack.c.b16 %v3714, %v3713
  %v3721 = vpack.c.b16 %v3716, %v3715
  %v3722 = vpack.c.b16 %v3718, %v3717
  %v3723 = vunpack.c.l.b16 %v3475
  %v3724 = vunpack.c.l.b16 %v3489
  %v3725 = vunpack.c.l.b16 %v3503
  %v3726 = vunpack.c.l.b16 %v3517
  %v3727 = vunpack.c.l.b16 %v3531
  %v3728 = vunpack.c.l.b16 %v3545
  %v3729 = vunpack.c.l.b16 %v3559
  %v3730 = vunpack.c.l.b16 %v3573
  %v3731 = vpack.c.b16 %v3724, %v3723
  %v3732 = vpack.c.b16 %v3726, %v3725
  %v3733 = vpack.c.b16 %v3728, %v3727
  %v3734 = vpack.c.b16 %v3730, %v3729
  %3735 = vrot.lane.b32.xlu0 %v3731, 8
  %v3736 = vpop.permute.xlu0 %3735
  %3737 = vrot.lane.b32.xlu0 %v3732, 8
  %v3738 = vpop.permute.xlu0 %3737
  %3739 = vrot.lane.b32.xlu0 %v3733, 8
  %v3740 = vpop.permute.xlu0 %3739
  %3741 = vrot.lane.b32.xlu0 %v3734, 8
  %v3742 = vpop.permute.xlu0 %3741
  %v3751 = vunpack.c.l.b16 %v3575
  %v3752 = vunpack.c.l.b16 %v3576
  %v3753 = vunpack.c.l.b16 %v3577
  %v3754 = vunpack.c.l.b16 %v3578
  %v3755 = vunpack.c.l.b16 %v3579
  %v3756 = vunpack.c.l.b16 %v3580
  %v3757 = vunpack.c.l.b16 %v3581
  %v3758 = vunpack.c.l.b16 %v3582
  %v3759 = vpack.c.b16 %v3752, %v3751
  %v3760 = vpack.c.b16 %v3754, %v3753
  %v3761 = vpack.c.b16 %v3756, %v3755
  %v3762 = vpack.c.b16 %v3758, %v3757
  %3763 = vrot.lane.b32.xlu0 %v3759, 16
  %v3764 = vpop.permute.xlu0 %3763
  %3765 = vrot.lane.b32.xlu0 %v3760, 16
  %v3766 = vpop.permute.xlu0 %3765
  %3767 = vrot.lane.b32.xlu0 %v3761, 16
  %v3768 = vpop.permute.xlu0 %3767
  %3769 = vrot.lane.b32.xlu0 %v3762, 16
  %v3770 = vpop.permute.xlu0 %3769
  %v3771 = vunpack.c.l.b16 %v3604
  %v3772 = vunpack.c.l.b16 %v3618
  %v3773 = vunpack.c.l.b16 %v3632
  %v3774 = vunpack.c.l.b16 %v3646
  %v3775 = vunpack.c.l.b16 %v3660
  %v3776 = vunpack.c.l.b16 %v3674
  %v3777 = vunpack.c.l.b16 %v3688
  %v3778 = vunpack.c.l.b16 %v3702
  %v3779 = vpack.c.b16 %v3772, %v3771
  %v3780 = vpack.c.b16 %v3774, %v3773
  %v3781 = vpack.c.b16 %v3776, %v3775
  %v3782 = vpack.c.b16 %v3778, %v3777
  %3783 = vrot.lane.b32.xlu0 %v3779, 24
  %v3784 = vpop.permute.xlu0 %3783
  %3785 = vrot.lane.b32.xlu0 %v3780, 24
  %v3786 = vpop.permute.xlu0 %3785
  %3787 = vrot.lane.b32.xlu0 %v3781, 24
  %v3788 = vpop.permute.xlu0 %3787
  %3789 = vrot.lane.b32.xlu0 %v3782, 24
  %v3790 = vpop.permute.xlu0 %3789
  %v3793 = vsel %vm1855, %v3719, %v3736
  %v3796 = vsel %vm1855, %v3720, %v3738
  %v3799 = vsel %vm1855, %v3721, %v3740
  %v3802 = vsel %vm1855, %v3722, %v3742
  %v3804 = vsel %vm1868, %v3793, %v3764
  %v3806 = vsel %vm1868, %v3796, %v3766
  %v3808 = vsel %vm1868, %v3799, %v3768
  %v3810 = vsel %vm1868, %v3802, %v3770
  %v3812 = vsel %vm1877, %v3804, %v3784
  %v3814 = vsel %vm1877, %v3806, %v3786
  %v3816 = vsel %vm1877, %v3808, %v3788
  %v3818 = vsel %vm1877, %v3810, %v3790
  %s3819 = scalar_lea.vmem %s2, 32
  %v3820 = vld [vmem:[%s3819] sm:$0xf]
  %v3821 = vld [vmem:[%s3819 + $0x4] sm:$0xf]
  %v3822 = vld [vmem:[%s3819 + $0x8] sm:$0xf]
  %v3823 = vld [vmem:[%s3819 + $0xc] sm:$0xf]
  %v3828 = vunpack.c.l.b16 %v3820
  %v3829 = vunpack.c.l.b16 %v3821
  %v3830 = vunpack.c.l.b16 %v3822
  %v3831 = vunpack.c.l.b16 %v3823
  %v3832 = vpack.c.b16 %v3829, %v3828
  %v3833 = vpack.c.b16 %v3831, %v3830
  %v3836 = vsel %vm1886, %v3812, 0
  %v3838 = vsel %vm1886, %v3814, 0
  %v3840 = vsel %vm1886, %v3816, 0
  %v3842 = vsel %vm1886, %v3818, 0
  %3844 = vmatprep.subr.bf16.mxu0 0
  %3845 = vmatpush1.bf16.msra.mxu0 %v3832
  %3846 = vmatprep.subr.bf16.mxu0 0
  %3847 = vmatpush1.bf16.msra.mxu0 %v3833
  %3848 = vmatprep.subr.bf16.mxu0 0
  %3849 = vmatpush1.bf16.msra.mxu0 0
  %3850 = vmatprep.subr.bf16.mxu0 0
  %3851 = vmatpush1.bf16.msra.mxu0 0
  %3852 = vmatprep.subr.bf16.mxu0 0
  %3853 = vmatpush1.bf16.msra.mxu0 0
  %3854 = vmatprep.subr.bf16.mxu0 0
  %3855 = vmatpush1.bf16.msra.mxu0 0
  %3856 = vmatprep.subr.bf16.mxu0 0
  %3857 = vmatpush1.bf16.msra.mxu0 0
  %3858 = vmatprep.subr.bf16.mxu0 0
  %3859 = vmatpush1.bf16.msra.mxu0 0
  %3860 = vmatprep.subr.bf16.mxu0 0
  %3861 = vmatpush1.bf16.msra.mxu0 0
  %3862 = vmatprep.subr.bf16.mxu0 0
  %3863 = vmatpush1.bf16.msra.mxu0 0
  %3864 = vmatprep.subr.bf16.mxu0 0
  %3865 = vmatpush1.bf16.msra.mxu0 0
  %3866 = vmatprep.subr.bf16.mxu0 0
  %3867 = vmatpush1.bf16.msra.mxu0 0
  %3868 = vmatprep.subr.bf16.mxu0 0
  %3869 = vmatpush1.bf16.msra.mxu0 0
  %3870 = vmatprep.subr.bf16.mxu0 0
  %3871 = vmatpush1.bf16.msra.mxu0 0
  %3872 = vmatprep.subr.bf16.mxu0 0
  %3873 = vmatpush1.bf16.msra.mxu0 0
  %3874 = vmatprep.subr.bf16.mxu0 0
  %3875 = vmatpush1.bf16.msra.mxu0 0
  %3876 = vmatprep.mubr.bf16.mxu0 0
  %3877 = vmatmul.mubr.bf16.gmra.mrb[0].mxu0 %v3836
  %v3878 = vpop.f32.mrb[0].mxu0
  %v3879 = vadd.f32 %v2742, %v3878
  %v3880 = vpop.f32.mrb[0].mxu0
  %v3881 = vpop.f32.mrb[0].mxu0
  %v3882 = vadd.f32 %v2742, %v3881
  %v3883 = vpop.f32.mrb[0].mxu0
  %3884 = vmatprep.mubr.bf16.mxu0 0
  %3885 = vmatmul.mubr.bf16.gmra.mrb[0].mxu0 %v3838
  %v3886 = vpop.f32.mrb[0].mxu0
  %v3887 = vadd.f32 %v2742, %v3886
  %v3888 = vpop.f32.mrb[0].mxu0
  %v3889 = vpop.f32.mrb[0].mxu0
  %v3890 = vadd.f32 %v2742, %v3889
  %v3891 = vpop.f32.mrb[0].mxu0
  %3892 = vmatprep.mubr.bf16.mxu0 0
  %3893 = vmatmul.mubr.bf16.gmra.mrb[0].mxu0 %v3840
  %v3894 = vpop.f32.mrb[0].mxu0
  %v3895 = vadd.f32 %v2742, %v3894
  %v3896 = vpop.f32.mrb[0].mxu0
  %v3897 = vpop.f32.mrb[0].mxu0
  %v3898 = vadd.f32 %v2742, %v3897
  %v3899 = vpop.f32.mrb[0].mxu0
  %3900 = vmatprep.mubr.bf16.mxu0 0
  %3901 = vmatmul.mubr.bf16.gmra.mrb[0].mxu0 %v3842
  %v3902 = vpop.f32.mrb[0].mxu0
  %v3903 = vadd.f32 %v2742, %v3902
  %v3904 = vpop.f32.mrb[0].mxu0
  %v3905 = vpop.f32.mrb[0].mxu0
  %v3906 = vadd.f32 %v2742, %v3905
  %v3907 = vpop.f32.mrb[0].mxu0
  %3908 = vdwg.mxu0
  %3909 = vst.msk [vmem:[#allocation4 + $0x80] sm:$0xff] %vm1855, %v3879
  %3910 = vst.msk [vmem:[#allocation4 + $0x88] sm:$0xff] %vm1855, %v3882
  %3911 = vst.msk [vmem:[#allocation4 + $0x90] sm:$0xff] %vm1855, %v3887
  %3912 = vst.msk [vmem:[#allocation4 + $0x98] sm:$0xff] %vm1855, %v3890
  %3913 = vst.msk [vmem:[#allocation4 + $0xa0] sm:$0xff] %vm1855, %v3895
  %3914 = vst.msk [vmem:[#allocation4 + $0xa8] sm:$0xff] %vm1855, %v3898
  %3915 = vst.msk [vmem:[#allocation4 + $0xb0] sm:$0xff] %vm1855, %v3903
  %3916 = vst.msk [vmem:[#allocation4 + $0xb8] sm:$0xff] %vm1855, %v3906
  %v3917 = vsel %vm1855, %v3879, 0.0
  %v3918 = vsel %vm1855, %v3882, 0.0
  %v3919 = vadd.f32 %v3917, %v3918
  %v3920 = vsel %vm1855, %v3887, 0.0
  %v3921 = vadd.f32 %v3919, %v3920
  %v3922 = vsel %vm1855, %v3890, 0.0
  %v3923 = vadd.f32 %v3921, %v3922
  %v3924 = vsel %vm1855, %v3895, 0.0
  %v3925 = vadd.f32 %v3923, %v3924
  %v3926 = vsel %vm1855, %v3898, 0.0
  %v3927 = vadd.f32 %v3925, %v3926
  %v3928 = vsel %vm1855, %v3903, 0.0
  %v3929 = vadd.f32 %v3927, %v3928
  %v3930 = vsel %vm1855, %v3906, 0.0
  %v3931 = vadd.f32 %v3929, %v3930
  %v3932 = vrot.slane %v3931, 4
  %v3933 = vadd.f32 %v3931, %v3932
  %v3934 = vrot.slane %v3933, 2
  %v3935 = vadd.f32 %v3933, %v3934
  %v3936 = vrot.slane %v3935, 1
  %v3937 = vadd.f32 %v3935, %v3936
  %v3938 = vadd.f32 %v3445, %v3937
  %v3939 = vld [vmem:[%s2146] sm:$0xf]
  %v3940 = vld [vmem:[%s2146 + $0x4] sm:$0x1]
  %v3941 = vld [vmem:[%s2146 + $0x8] sm:$0xf]
  %v3942 = vld [vmem:[%s2146 + $0xc] sm:$0x1]
  %v3943 = vld [vmem:[%s2146 + $0x10] sm:$0xf]
  %v3944 = vld [vmem:[%s2146 + $0x14] sm:$0x1]
  %v3945 = vld [vmem:[%s2146 + $0x18] sm:$0xf]
  %v3946 = vld [vmem:[%s2146 + $0x1c] sm:$0x1]
  %v3947 = vld [vmem:[%s2146 + $0x20] sm:$0xf]
  %v3948 = vld [vmem:[%s2146 + $0x24] sm:$0x1]
  %v3949 = vld [vmem:[%s2146 + $0x28] sm:$0xf]
  %v3950 = vld [vmem:[%s2146 + $0x2c] sm:$0x1]
  %v3951 = vld [vmem:[%s2146 + $0x30] sm:$0xf]
  %v3952 = vld [vmem:[%s2146 + $0x34] sm:$0x1]
  %v3953 = vld [vmem:[%s2146 + $0x38] sm:$0xf]
  %v3954 = vld [vmem:[%s2146 + $0x3c] sm:$0x1]
  %v3956 = vshrl.u32 %v3939, 16
  %v3958 = vrot.slane %v3956, 4
  %v3959 = vshll.u32 %v3939, 16
  %v3961 = vrot.slane %v3959, 5
  %v3962 = vor.u32 %v3958, %v3961
  %v3963 = vrot.slane %v3962, 4
  %v3965 = vshll.u32 %v3940, 16
  %v3967 = vrot.slane %v3965, 5
  %v3968 = vsel %vm173, %v3963, %v3967
  %v3970 = vshrl.u32 %v3941, 16
  %v3972 = vrot.slane %v3970, 4
  %v3973 = vshll.u32 %v3941, 16
  %v3975 = vrot.slane %v3973, 5
  %v3976 = vor.u32 %v3972, %v3975
  %v3977 = vrot.slane %v3976, 4
  %v3979 = vshll.u32 %v3942, 16
  %v3981 = vrot.slane %v3979, 5
  %v3982 = vsel %vm173, %v3977, %v3981
  %v3984 = vshrl.u32 %v3943, 16
  %v3986 = vrot.slane %v3984, 4
  %v3987 = vshll.u32 %v3943, 16
  %v3989 = vrot.slane %v3987, 5
  %v3990 = vor.u32 %v3986, %v3989
  %v3991 = vrot.slane %v3990, 4
  %v3993 = vshll.u32 %v3944, 16
  %v3995 = vrot.slane %v3993, 5
  %v3996 = vsel %vm173, %v3991, %v3995
  %v3998 = vshrl.u32 %v3945, 16
  %v4000 = vrot.slane %v3998, 4
  %v4001 = vshll.u32 %v3945, 16
  %v4003 = vrot.slane %v4001, 5
  %v4004 = vor.u32 %v4000, %v4003
  %v4005 = vrot.slane %v4004, 4
  %v4007 = vshll.u32 %v3946, 16
  %v4009 = vrot.slane %v4007, 5
  %v4010 = vsel %vm173, %v4005, %v4009
  %v4012 = vshrl.u32 %v3947, 16
  %v4014 = vrot.slane %v4012, 4
  %v4015 = vshll.u32 %v3947, 16
  %v4017 = vrot.slane %v4015, 5
  %v4018 = vor.u32 %v4014, %v4017
  %v4019 = vrot.slane %v4018, 4
  %v4021 = vshll.u32 %v3948, 16
  %v4023 = vrot.slane %v4021, 5
  %v4024 = vsel %vm173, %v4019, %v4023
  %v4026 = vshrl.u32 %v3949, 16
  %v4028 = vrot.slane %v4026, 4
  %v4029 = vshll.u32 %v3949, 16
  %v4031 = vrot.slane %v4029, 5
  %v4032 = vor.u32 %v4028, %v4031
  %v4033 = vrot.slane %v4032, 4
  %v4035 = vshll.u32 %v3950, 16
  %v4037 = vrot.slane %v4035, 5
  %v4038 = vsel %vm173, %v4033, %v4037
  %v4040 = vshrl.u32 %v3951, 16
  %v4042 = vrot.slane %v4040, 4
  %v4043 = vshll.u32 %v3951, 16
  %v4045 = vrot.slane %v4043, 5
  %v4046 = vor.u32 %v4042, %v4045
  %v4047 = vrot.slane %v4046, 4
  %v4049 = vshll.u32 %v3952, 16
  %v4051 = vrot.slane %v4049, 5
  %v4052 = vsel %vm173, %v4047, %v4051
  %v4054 = vshrl.u32 %v3953, 16
  %v4056 = vrot.slane %v4054, 4
  %v4057 = vshll.u32 %v3953, 16
  %v4059 = vrot.slane %v4057, 5
  %v4060 = vor.u32 %v4056, %v4059
  %v4061 = vrot.slane %v4060, 4
  %v4063 = vshll.u32 %v3954, 16
  %v4065 = vrot.slane %v4063, 5
  %v4066 = vsel %vm173, %v4061, %v4065
  %v4067 = vld [vmem:[%s2146] sm:$0xe]
  %v4068 = vld [vmem:[%s2146 + $0x8] sm:$0xe]
  %v4069 = vld [vmem:[%s2146 + $0x10] sm:$0xe]
  %v4070 = vld [vmem:[%s2146 + $0x18] sm:$0xe]
  %v4071 = vld [vmem:[%s2146 + $0x20] sm:$0xe]
  %v4072 = vld [vmem:[%s2146 + $0x28] sm:$0xe]
  %v4073 = vld [vmem:[%s2146 + $0x30] sm:$0xe]
  %v4074 = vld [vmem:[%s2146 + $0x38] sm:$0xe]
  %v4091 = vrot.slane %v4067, 5
  %v4092 = vrot.slane %v4091, 4
  %v4093 = vrot.slane %v3940, 5
  %v4094 = vsel %vm312, %v4092, %v4093
  %v4095 = vrot.slane %v4068, 5
  %v4096 = vrot.slane %v4095, 4
  %v4097 = vrot.slane %v3942, 5
  %v4098 = vsel %vm312, %v4096, %v4097
  %v4099 = vrot.slane %v4069, 5
  %v4100 = vrot.slane %v4099, 4
  %v4101 = vrot.slane %v3944, 5
  %v4102 = vsel %vm312, %v4100, %v4101
  %v4103 = vrot.slane %v4070, 5
  %v4104 = vrot.slane %v4103, 4
  %v4105 = vrot.slane %v3946, 5
  %v4106 = vsel %vm312, %v4104, %v4105
  %v4107 = vrot.slane %v4071, 5
  %v4108 = vrot.slane %v4107, 4
  %v4109 = vrot.slane %v3948, 5
  %v4110 = vsel %vm312, %v4108, %v4109
  %v4111 = vrot.slane %v4072, 5
  %v4112 = vrot.slane %v4111, 4
  %v4113 = vrot.slane %v3950, 5
  %v4114 = vsel %vm312, %v4112, %v4113
  %v4115 = vrot.slane %v4073, 5
  %v4116 = vrot.slane %v4115, 4
  %v4117 = vrot.slane %v3952, 5
  %v4118 = vsel %vm312, %v4116, %v4117
  %v4119 = vrot.slane %v4074, 5
  %v4120 = vrot.slane %v4119, 4
  %v4121 = vrot.slane %v3954, 5
  %v4122 = vsel %vm312, %v4120, %v4121
  %v4123 = vld [vmem:[%s3574] sm:$0xf]
  %v4124 = vld [vmem:[%s3574 + $0x4] sm:$0x1]
  %v4125 = vld [vmem:[%s3574 + $0x8] sm:$0xf]
  %v4126 = vld [vmem:[%s3574 + $0xc] sm:$0x1]
  %v4127 = vld [vmem:[%s3574 + $0x10] sm:$0xf]
  %v4128 = vld [vmem:[%s3574 + $0x14] sm:$0x1]
  %v4129 = vld [vmem:[%s3574 + $0x18] sm:$0xf]
  %v4130 = vld [vmem:[%s3574 + $0x1c] sm:$0x1]
  %v4131 = vld [vmem:[%s3574 + $0x20] sm:$0xf]
  %v4132 = vld [vmem:[%s3574 + $0x24] sm:$0x1]
  %v4133 = vld [vmem:[%s3574 + $0x28] sm:$0xf]
  %v4134 = vld [vmem:[%s3574 + $0x2c] sm:$0x1]
  %v4135 = vld [vmem:[%s3574 + $0x30] sm:$0xf]
  %v4136 = vld [vmem:[%s3574 + $0x34] sm:$0x1]
  %v4137 = vld [vmem:[%s3574 + $0x38] sm:$0xf]
  %v4138 = vld [vmem:[%s3574 + $0x3c] sm:$0x1]
  %v4140 = vshrl.u32 %v4123, 16
  %v4142 = vrot.slane %v4140, 4
  %v4143 = vshll.u32 %v4123, 16
  %v4145 = vrot.slane %v4143, 5
  %v4146 = vor.u32 %v4142, %v4145
  %v4147 = vrot.slane %v4146, 4
  %v4149 = vshll.u32 %v4124, 16
  %v4151 = vrot.slane %v4149, 5
  %v4152 = vsel %vm173, %v4147, %v4151
  %v4154 = vshrl.u32 %v4125, 16
  %v4156 = vrot.slane %v4154, 4
  %v4157 = vshll.u32 %v4125, 16
  %v4159 = vrot.slane %v4157, 5
  %v4160 = vor.u32 %v4156, %v4159
  %v4161 = vrot.slane %v4160, 4
  %v4163 = vshll.u32 %v4126, 16
  %v4165 = vrot.slane %v4163, 5
  %v4166 = vsel %vm173, %v4161, %v4165
  %v4168 = vshrl.u32 %v4127, 16
  %v4170 = vrot.slane %v4168, 4
  %v4171 = vshll.u32 %v4127, 16
  %v4173 = vrot.slane %v4171, 5
  %v4174 = vor.u32 %v4170, %v4173
  %v4175 = vrot.slane %v4174, 4
  %v4177 = vshll.u32 %v4128, 16
  %v4179 = vrot.slane %v4177, 5
  %v4180 = vsel %vm173, %v4175, %v4179
  %v4182 = vshrl.u32 %v4129, 16
  %v4184 = vrot.slane %v4182, 4
  %v4185 = vshll.u32 %v4129, 16
  %v4187 = vrot.slane %v4185, 5
  %v4188 = vor.u32 %v4184, %v4187
  %v4189 = vrot.slane %v4188, 4
  %v4191 = vshll.u32 %v4130, 16
  %v4193 = vrot.slane %v4191, 5
  %v4194 = vsel %vm173, %v4189, %v4193
  %v4196 = vshrl.u32 %v4131, 16
  %v4198 = vrot.slane %v4196, 4
  %v4199 = vshll.u32 %v4131, 16
  %v4201 = vrot.slane %v4199, 5
  %v4202 = vor.u32 %v4198, %v4201
  %v4203 = vrot.slane %v4202, 4
  %v4205 = vshll.u32 %v4132, 16
  %v4207 = vrot.slane %v4205, 5
  %v4208 = vsel %vm173, %v4203, %v4207
  %v4210 = vshrl.u32 %v4133, 16
  %v4212 = vrot.slane %v4210, 4
  %v4213 = vshll.u32 %v4133, 16
  %v4215 = vrot.slane %v4213, 5
  %v4216 = vor.u32 %v4212, %v4215
  %v4217 = vrot.slane %v4216, 4
  %v4219 = vshll.u32 %v4134, 16
  %v4221 = vrot.slane %v4219, 5
  %v4222 = vsel %vm173, %v4217, %v4221
  %v4224 = vshrl.u32 %v4135, 16
  %v4226 = vrot.slane %v4224, 4
  %v4227 = vshll.u32 %v4135, 16
  %v4229 = vrot.slane %v4227, 5
  %v4230 = vor.u32 %v4226, %v4229
  %v4231 = vrot.slane %v4230, 4
  %v4233 = vshll.u32 %v4136, 16
  %v4235 = vrot.slane %v4233, 5
  %v4236 = vsel %vm173, %v4231, %v4235
  %v4238 = vshrl.u32 %v4137, 16
  %v4240 = vrot.slane %v4238, 4
  %v4241 = vshll.u32 %v4137, 16
  %v4243 = vrot.slane %v4241, 5
  %v4244 = vor.u32 %v4240, %v4243
  %v4245 = vrot.slane %v4244, 4
  %v4247 = vshll.u32 %v4138, 16
  %v4249 = vrot.slane %v4247, 5
  %v4250 = vsel %vm173, %v4245, %v4249
  %v4251 = vld [vmem:[%s3574] sm:$0xe]
  %v4252 = vld [vmem:[%s3574 + $0x8] sm:$0xe]
  %v4253 = vld [vmem:[%s3574 + $0x10] sm:$0xe]
  %v4254 = vld [vmem:[%s3574 + $0x18] sm:$0xe]
  %v4255 = vld [vmem:[%s3574 + $0x20] sm:$0xe]
  %v4256 = vld [vmem:[%s3574 + $0x28] sm:$0xe]
  %v4257 = vld [vmem:[%s3574 + $0x30] sm:$0xe]
  %v4258 = vld [vmem:[%s3574 + $0x38] sm:$0xe]
  %v4275 = vrot.slane %v4251, 5
  %v4276 = vrot.slane %v4275, 4
  %v4277 = vrot.slane %v4124, 5
  %v4278 = vsel %vm312, %v4276, %v4277
  %v4279 = vrot.slane %v4252, 5
  %v4280 = vrot.slane %v4279, 4
  %v4281 = vrot.slane %v4126, 5
  %v4282 = vsel %vm312, %v4280, %v4281
  %v4283 = vrot.slane %v4253, 5
  %v4284 = vrot.slane %v4283, 4
  %v4285 = vrot.slane %v4128, 5
  %v4286 = vsel %vm312, %v4284, %v4285
  %v4287 = vrot.slane %v4254, 5
  %v4288 = vrot.slane %v4287, 4
  %v4289 = vrot.slane %v4130, 5
  %v4290 = vsel %vm312, %v4288, %v4289
  %v4291 = vrot.slane %v4255, 5
  %v4292 = vrot.slane %v4291, 4
  %v4293 = vrot.slane %v4132, 5
  %v4294 = vsel %vm312, %v4292, %v4293
  %v4295 = vrot.slane %v4256, 5
  %v4296 = vrot.slane %v4295, 4
  %v4297 = vrot.slane %v4134, 5
  %v4298 = vsel %vm312, %v4296, %v4297
  %v4299 = vrot.slane %v4257, 5
  %v4300 = vrot.slane %v4299, 4
  %v4301 = vrot.slane %v4136, 5
  %v4302 = vsel %vm312, %v4300, %v4301
  %v4303 = vrot.slane %v4258, 5
  %v4304 = vrot.slane %v4303, 4
  %v4305 = vrot.slane %v4138, 5
  %v4306 = vsel %vm312, %v4304, %v4305
  %v4307 = vunpack.c.l.b16 %v3968
  %v4308 = vunpack.c.l.b16 %v3982
  %v4309 = vunpack.c.l.b16 %v3996
  %v4310 = vunpack.c.l.b16 %v4010
  %v4311 = vunpack.c.l.b16 %v4024
  %v4312 = vunpack.c.l.b16 %v4038
  %v4313 = vunpack.c.l.b16 %v4052
  %v4314 = vunpack.c.l.b16 %v4066
  %v4315 = vpack.c.b16 %v4308, %v4307
  %v4316 = vpack.c.b16 %v4310, %v4309
  %v4317 = vpack.c.b16 %v4312, %v4311
  %v4318 = vpack.c.b16 %v4314, %v4313
  %v4319 = vunpack.c.l.b16 %v4094
  %v4320 = vunpack.c.l.b16 %v4098
  %v4321 = vunpack.c.l.b16 %v4102
  %v4322 = vunpack.c.l.b16 %v4106
  %v4323 = vunpack.c.l.b16 %v4110
  %v4324 = vunpack.c.l.b16 %v4114
  %v4325 = vunpack.c.l.b16 %v4118
  %v4326 = vunpack.c.l.b16 %v4122
  %v4327 = vpack.c.b16 %v4320, %v4319
  %v4328 = vpack.c.b16 %v4322, %v4321
  %v4329 = vpack.c.b16 %v4324, %v4323
  %v4330 = vpack.c.b16 %v4326, %v4325
  %4331 = vrot.lane.b32.xlu0 %v4327, 8
  %v4332 = vpop.permute.xlu0 %4331
  %4333 = vrot.lane.b32.xlu0 %v4328, 8
  %v4334 = vpop.permute.xlu0 %4333
  %4335 = vrot.lane.b32.xlu0 %v4329, 8
  %v4336 = vpop.permute.xlu0 %4335
  %4337 = vrot.lane.b32.xlu0 %v4330, 8
  %v4338 = vpop.permute.xlu0 %4337
  %v4339 = vunpack.c.l.b16 %v4152
  %v4340 = vunpack.c.l.b16 %v4166
  %v4341 = vunpack.c.l.b16 %v4180
  %v4342 = vunpack.c.l.b16 %v4194
  %v4343 = vunpack.c.l.b16 %v4208
  %v4344 = vunpack.c.l.b16 %v4222
  %v4345 = vunpack.c.l.b16 %v4236
  %v4346 = vunpack.c.l.b16 %v4250
  %v4347 = vpack.c.b16 %v4340, %v4339
  %v4348 = vpack.c.b16 %v4342, %v4341
  %v4349 = vpack.c.b16 %v4344, %v4343
  %v4350 = vpack.c.b16 %v4346, %v4345
  %4351 = vrot.lane.b32.xlu0 %v4347, 16
  %v4352 = vpop.permute.xlu0 %4351
  %4353 = vrot.lane.b32.xlu0 %v4348, 16
  %v4354 = vpop.permute.xlu0 %4353
  %4355 = vrot.lane.b32.xlu0 %v4349, 16
  %v4356 = vpop.permute.xlu0 %4355
  %4357 = vrot.lane.b32.xlu0 %v4350, 16
  %v4358 = vpop.permute.xlu0 %4357
  %v4359 = vunpack.c.l.b16 %v4278
  %v4360 = vunpack.c.l.b16 %v4282
  %v4361 = vunpack.c.l.b16 %v4286
  %v4362 = vunpack.c.l.b16 %v4290
  %v4363 = vunpack.c.l.b16 %v4294
  %v4364 = vunpack.c.l.b16 %v4298
  %v4365 = vunpack.c.l.b16 %v4302
  %v4366 = vunpack.c.l.b16 %v4306
  %v4367 = vpack.c.b16 %v4360, %v4359
  %v4368 = vpack.c.b16 %v4362, %v4361
  %v4369 = vpack.c.b16 %v4364, %v4363
  %v4370 = vpack.c.b16 %v4366, %v4365
  %4371 = vrot.lane.b32.xlu0 %v4367, 24
  %v4372 = vpop.permute.xlu0 %4371
  %4373 = vrot.lane.b32.xlu0 %v4368, 24
  %v4374 = vpop.permute.xlu0 %4373
  %4375 = vrot.lane.b32.xlu0 %v4369, 24
  %v4376 = vpop.permute.xlu0 %4375
  %4377 = vrot.lane.b32.xlu0 %v4370, 24
  %v4378 = vpop.permute.xlu0 %4377
  %v4381 = vsel %vm1855, %v4315, %v4332
  %v4384 = vsel %vm1855, %v4316, %v4334
  %v4387 = vsel %vm1855, %v4317, %v4336
  %v4390 = vsel %vm1855, %v4318, %v4338
  %v4392 = vsel %vm1868, %v4381, %v4352
  %v4394 = vsel %vm1868, %v4384, %v4354
  %v4396 = vsel %vm1868, %v4387, %v4356
  %v4398 = vsel %vm1868, %v4390, %v4358
  %v4400 = vsel %vm1877, %v4392, %v4372
  %v4402 = vsel %vm1877, %v4394, %v4374
  %v4404 = vsel %vm1877, %v4396, %v4376
  %v4406 = vsel %vm1877, %v4398, %v4378
  %s4407 = scalar_lea.vmem %s2, 48
  %v4408 = vld [vmem:[%s4407] sm:$0xf]
  %v4409 = vld [vmem:[%s4407 + $0x4] sm:$0xf]
  %v4410 = vld [vmem:[%s4407 + $0x8] sm:$0xf]
  %v4411 = vld [vmem:[%s4407 + $0xc] sm:$0xf]
  %v4416 = vunpack.c.l.b16 %v4408
  %v4417 = vunpack.c.l.b16 %v4409
  %v4418 = vunpack.c.l.b16 %v4410
  %v4419 = vunpack.c.l.b16 %v4411
  %v4420 = vpack.c.b16 %v4417, %v4416
  %v4421 = vpack.c.b16 %v4419, %v4418
  %v4424 = vsel %vm1886, %v4400, 0
  %v4426 = vsel %vm1886, %v4402, 0
  %v4428 = vsel %vm1886, %v4404, 0
  %v4430 = vsel %vm1886, %v4406, 0
  %4432 = vmatprep.subr.bf16.mxu0 0
  %4433 = vmatpush1.bf16.msra.mxu0 %v4420
  %4434 = vmatprep.subr.bf16.mxu0 0
  %4435 = vmatpush1.bf16.msra.mxu0 %v4421
  %4436 = vmatprep.subr.bf16.mxu0 0
  %4437 = vmatpush1.bf16.msra.mxu0 0
  %4438 = vmatprep.subr.bf16.mxu0 0
  %4439 = vmatpush1.bf16.msra.mxu0 0
  %4440 = vmatprep.subr.bf16.mxu0 0
  %4441 = vmatpush1.bf16.msra.mxu0 0
  %4442 = vmatprep.subr.bf16.mxu0 0
  %4443 = vmatpush1.bf16.msra.mxu0 0
  %4444 = vmatprep.subr.bf16.mxu0 0
  %4445 = vmatpush1.bf16.msra.mxu0 0
  %4446 = vmatprep.subr.bf16.mxu0 0
  %4447 = vmatpush1.bf16.msra.mxu0 0
  %4448 = vmatprep.subr.bf16.mxu0 0
  %4449 = vmatpush1.bf16.msra.mxu0 0
  %4450 = vmatprep.subr.bf16.mxu0 0
  %4451 = vmatpush1.bf16.msra.mxu0 0
  %4452 = vmatprep.subr.bf16.mxu0 0
  %4453 = vmatpush1.bf16.msra.mxu0 0
  %4454 = vmatprep.subr.bf16.mxu0 0
  %4455 = vmatpush1.bf16.msra.mxu0 0
  %4456 = vmatprep.subr.bf16.mxu0 0
  %4457 = vmatpush1.bf16.msra.mxu0 0
  %4458 = vmatprep.subr.bf16.mxu0 0
  %4459 = vmatpush1.bf16.msra.mxu0 0
  %4460 = vmatprep.subr.bf16.mxu0 0
  %4461 = vmatpush1.bf16.msra.mxu0 0
  %4462 = vmatprep.subr.bf16.mxu0 0
  %4463 = vmatpush1.bf16.msra.mxu0 0
  %4464 = vmatprep.mubr.bf16.mxu0 0
  %4465 = vmatmul.mubr.bf16.gmra.mrb[0].mxu0 %v4424
  %v4466 = vpop.f32.mrb[0].mxu0
  %v4467 = vadd.f32 %v2742, %v4466
  %v4468 = vpop.f32.mrb[0].mxu0
  %v4469 = vpop.f32.mrb[0].mxu0
  %v4470 = vadd.f32 %v2742, %v4469
  %v4471 = vpop.f32.mrb[0].mxu0
  %4472 = vmatprep.mubr.bf16.mxu0 0
  %4473 = vmatmul.mubr.bf16.gmra.mrb[0].mxu0 %v4426
  %v4474 = vpop.f32.mrb[0].mxu0
  %v4475 = vadd.f32 %v2742, %v4474
  %v4476 = vpop.f32.mrb[0].mxu0
  %v4477 = vpop.f32.mrb[0].mxu0
  %v4478 = vadd.f32 %v2742, %v4477
  %v4479 = vpop.f32.mrb[0].mxu0
  %4480 = vmatprep.mubr.bf16.mxu0 0
  %4481 = vmatmul.mubr.bf16.gmra.mrb[0].mxu0 %v4428
  %v4482 = vpop.f32.mrb[0].mxu0
  %v4483 = vadd.f32 %v2742, %v4482
  %v4484 = vpop.f32.mrb[0].mxu0
  %v4485 = vpop.f32.mrb[0].mxu0
  %v4486 = vadd.f32 %v2742, %v4485
  %v4487 = vpop.f32.mrb[0].mxu0
  %4488 = vmatprep.mubr.bf16.mxu0 0
  %4489 = vmatmul.mubr.bf16.gmra.mrb[0].mxu0 %v4430
  %v4490 = vpop.f32.mrb[0].mxu0
  %v4491 = vadd.f32 %v2742, %v4490
  %v4492 = vpop.f32.mrb[0].mxu0
  %v4493 = vpop.f32.mrb[0].mxu0
  %v4494 = vadd.f32 %v2742, %v4493
  %v4495 = vpop.f32.mrb[0].mxu0
  %4496 = vdwg.mxu0
  %4497 = vst.msk [vmem:[#allocation4 + $0xc0] sm:$0xff] %vm1855, %v4467
  %4498 = vst.msk [vmem:[#allocation4 + $0xc8] sm:$0xff] %vm1855, %v4470
  %4499 = vst.msk [vmem:[#allocation4 + $0xd0] sm:$0xff] %vm1855, %v4475
  %4500 = vst.msk [vmem:[#allocation4 + $0xd8] sm:$0xff] %vm1855, %v4478
  %4501 = vst.msk [vmem:[#allocation4 + $0xe0] sm:$0xff] %vm1855, %v4483
  %4502 = vst.msk [vmem:[#allocation4 + $0xe8] sm:$0xff] %vm1855, %v4486
  %4503 = vst.msk [vmem:[#allocation4 + $0xf0] sm:$0xff] %vm1855, %v4491
  %4504 = vst.msk [vmem:[#allocation4 + $0xf8] sm:$0xff] %vm1855, %v4494
  %v4505 = vsel %vm1855, %v4467, 0.0
  %v4506 = vsel %vm1855, %v4470, 0.0
  %v4507 = vadd.f32 %v4505, %v4506
  %v4508 = vsel %vm1855, %v4475, 0.0
  %v4509 = vadd.f32 %v4507, %v4508
  %v4510 = vsel %vm1855, %v4478, 0.0
  %v4511 = vadd.f32 %v4509, %v4510
  %v4512 = vsel %vm1855, %v4483, 0.0
  %v4513 = vadd.f32 %v4511, %v4512
  %v4514 = vsel %vm1855, %v4486, 0.0
  %v4515 = vadd.f32 %v4513, %v4514
  %v4516 = vsel %vm1855, %v4491, 0.0
  %v4517 = vadd.f32 %v4515, %v4516
  %v4518 = vsel %vm1855, %v4494, 0.0
  %v4519 = vadd.f32 %v4517, %v4518
  %v4520 = vrot.slane %v4519, 4
  %v4521 = vadd.f32 %v4519, %v4520
  %v4522 = vrot.slane %v4521, 2
  %v4523 = vadd.f32 %v4521, %v4522
  %v4524 = vrot.slane %v4523, 1
  %v4525 = vadd.f32 %v4523, %v4524
  %v4526 = vadd.f32 %v3938, %v4525
  %v4527 = vmul.f32 %v4526, 0.00390625
  %v4528 = vld [vmem:[#allocation4] sm:$0xff]
  %v4529 = vld [vmem:[#allocation4 + $0x8] sm:$0xff]
  %v4530 = vld [vmem:[#allocation4 + $0x10] sm:$0xff]
  %v4531 = vld [vmem:[#allocation4 + $0x18] sm:$0xff]
  %v4532 = vld [vmem:[#allocation4 + $0x20] sm:$0xff]
  %v4533 = vld [vmem:[#allocation4 + $0x28] sm:$0xff]
  %v4534 = vld [vmem:[#allocation4 + $0x30] sm:$0xff]
  %v4535 = vld [vmem:[#allocation4 + $0x38] sm:$0xff]
  %v4536 = vld [vmem:[#allocation4 + $0x40] sm:$0xff]
  %v4537 = vld [vmem:[#allocation4 + $0x48] sm:$0xff]
  %v4538 = vld [vmem:[#allocation4 + $0x50] sm:$0xff]
  %v4539 = vld [vmem:[#allocation4 + $0x58] sm:$0xff]
  %v4540 = vld [vmem:[#allocation4 + $0x60] sm:$0xff]
  %v4541 = vld [vmem:[#allocation4 + $0x68] sm:$0xff]
  %v4542 = vld [vmem:[#allocation4 + $0x70] sm:$0xff]
  %v4543 = vld [vmem:[#allocation4 + $0x78] sm:$0xff]
  %v4544 = vld [vmem:[#allocation4 + $0x80] sm:$0xff]
  %v4545 = vld [vmem:[#allocation4 + $0x88] sm:$0xff]
  %v4546 = vld [vmem:[#allocation4 + $0x90] sm:$0xff]
  %v4547 = vld [vmem:[#allocation4 + $0x98] sm:$0xff]
  %v4548 = vld [vmem:[#allocation4 + $0xa0] sm:$0xff]
  %v4549 = vld [vmem:[#allocation4 + $0xa8] sm:$0xff]
  %v4550 = vld [vmem:[#allocation4 + $0xb0] sm:$0xff]
  %v4551 = vld [vmem:[#allocation4 + $0xb8] sm:$0xff]
  %v4552 = vld [vmem:[#allocation4 + $0xc0] sm:$0xff]
  %v4553 = vld [vmem:[#allocation4 + $0xc8] sm:$0xff]
  %v4554 = vld [vmem:[#allocation4 + $0xd0] sm:$0xff]
  %v4555 = vld [vmem:[#allocation4 + $0xd8] sm:$0xff]
  %v4556 = vld [vmem:[#allocation4 + $0xe0] sm:$0xff]
  %v4557 = vld [vmem:[#allocation4 + $0xe8] sm:$0xff]
  %v4558 = vld [vmem:[#allocation4 + $0xf0] sm:$0xff]
  %v4559 = vld [vmem:[#allocation4 + $0xf8] sm:$0xff]
  %v4560 = vsub.f32 %v4528, %v4527
  %v4561 = vsub.f32 %v4529, %v4527
  %v4562 = vsub.f32 %v4530, %v4527
  %v4563 = vsub.f32 %v4531, %v4527
  %v4564 = vsub.f32 %v4532, %v4527
  %v4565 = vsub.f32 %v4533, %v4527
  %v4566 = vsub.f32 %v4534, %v4527
  %v4567 = vsub.f32 %v4535, %v4527
  %v4568 = vsub.f32 %v4536, %v4527
  %v4569 = vsub.f32 %v4537, %v4527
  %v4570 = vsub.f32 %v4538, %v4527
  %v4571 = vsub.f32 %v4539, %v4527
  %v4572 = vsub.f32 %v4540, %v4527
  %v4573 = vsub.f32 %v4541, %v4527
  %v4574 = vsub.f32 %v4542, %v4527
  %v4575 = vsub.f32 %v4543, %v4527
  %v4576 = vsub.f32 %v4544, %v4527
  %v4577 = vsub.f32 %v4545, %v4527
  %v4578 = vsub.f32 %v4546, %v4527
  %v4579 = vsub.f32 %v4547, %v4527
  %v4580 = vsub.f32 %v4548, %v4527
  %v4581 = vsub.f32 %v4549, %v4527
  %v4582 = vsub.f32 %v4550, %v4527
  %v4583 = vsub.f32 %v4551, %v4527
  %v4584 = vsub.f32 %v4552, %v4527
  %v4585 = vsub.f32 %v4553, %v4527
  %v4586 = vsub.f32 %v4554, %v4527
  %v4587 = vsub.f32 %v4555, %v4527
  %v4588 = vsub.f32 %v4556, %v4527
  %v4589 = vsub.f32 %v4557, %v4527
  %v4590 = vsub.f32 %v4558, %v4527
  %v4591 = vsub.f32 %v4559, %v4527
  %v4592 = vmul.f32 %v4560, %v4560
  %v4593 = vmul.f32 %v4561, %v4561
  %v4594 = vmul.f32 %v4562, %v4562
  %v4595 = vmul.f32 %v4563, %v4563
  %v4596 = vmul.f32 %v4564, %v4564
  %v4597 = vmul.f32 %v4565, %v4565
  %v4598 = vmul.f32 %v4566, %v4566
  %v4599 = vmul.f32 %v4567, %v4567
  %v4600 = vmul.f32 %v4568, %v4568
  %v4601 = vmul.f32 %v4569, %v4569
  %v4602 = vmul.f32 %v4570, %v4570
  %v4603 = vmul.f32 %v4571, %v4571
  %v4604 = vmul.f32 %v4572, %v4572
  %v4605 = vmul.f32 %v4573, %v4573
  %v4606 = vmul.f32 %v4574, %v4574
  %v4607 = vmul.f32 %v4575, %v4575
  %v4608 = vmul.f32 %v4576, %v4576
  %v4609 = vmul.f32 %v4577, %v4577
  %v4610 = vmul.f32 %v4578, %v4578
  %v4611 = vmul.f32 %v4579, %v4579
  %v4612 = vmul.f32 %v4580, %v4580
  %v4613 = vmul.f32 %v4581, %v4581
  %v4614 = vmul.f32 %v4582, %v4582
  %v4615 = vmul.f32 %v4583, %v4583
  %v4616 = vmul.f32 %v4584, %v4584
  %v4617 = vmul.f32 %v4585, %v4585
  %v4618 = vmul.f32 %v4586, %v4586
  %v4619 = vmul.f32 %v4587, %v4587
  %v4620 = vmul.f32 %v4588, %v4588
  %v4621 = vmul.f32 %v4589, %v4589
  %v4622 = vmul.f32 %v4590, %v4590
  %v4623 = vmul.f32 %v4591, %v4591
  %v4624 = vsel %vm1855, %v4592, 0.0
  %v4625 = vsel %vm1855, %v4593, 0.0
  %v4626 = vadd.f32 %v4624, %v4625
  %v4627 = vsel %vm1855, %v4594, 0.0
  %v4628 = vadd.f32 %v4626, %v4627
  %v4629 = vsel %vm1855, %v4595, 0.0
  %v4630 = vadd.f32 %v4628, %v4629
  %v4631 = vsel %vm1855, %v4596, 0.0
  %v4632 = vadd.f32 %v4630, %v4631
  %v4633 = vsel %vm1855, %v4597, 0.0
  %v4634 = vadd.f32 %v4632, %v4633
  %v4635 = vsel %vm1855, %v4598, 0.0
  %v4636 = vadd.f32 %v4634, %v4635
  %v4637 = vsel %vm1855, %v4599, 0.0
  %v4638 = vadd.f32 %v4636, %v4637
  %v4639 = vsel %vm1855, %v4600, 0.0
  %v4640 = vadd.f32 %v4638, %v4639
  %v4641 = vsel %vm1855, %v4601, 0.0
  %v4642 = vadd.f32 %v4640, %v4641
  %v4643 = vsel %vm1855, %v4602, 0.0
  %v4644 = vadd.f32 %v4642, %v4643
  %v4645 = vsel %vm1855, %v4603, 0.0
  %v4646 = vadd.f32 %v4644, %v4645
  %v4647 = vsel %vm1855, %v4604, 0.0
  %v4648 = vadd.f32 %v4646, %v4647
  %v4649 = vsel %vm1855, %v4605, 0.0
  %v4650 = vadd.f32 %v4648, %v4649
  %v4651 = vsel %vm1855, %v4606, 0.0
  %v4652 = vadd.f32 %v4650, %v4651
  %v4653 = vsel %vm1855, %v4607, 0.0
  %v4654 = vadd.f32 %v4652, %v4653
  %v4655 = vsel %vm1855, %v4608, 0.0
  %v4656 = vadd.f32 %v4654, %v4655
  %v4657 = vsel %vm1855, %v4609, 0.0
  %v4658 = vadd.f32 %v4656, %v4657
  %v4659 = vsel %vm1855, %v4610, 0.0
  %v4660 = vadd.f32 %v4658, %v4659
  %v4661 = vsel %vm1855, %v4611, 0.0
  %v4662 = vadd.f32 %v4660, %v4661
  %v4663 = vsel %vm1855, %v4612, 0.0
  %v4664 = vadd.f32 %v4662, %v4663
  %v4665 = vsel %vm1855, %v4613, 0.0
  %v4666 = vadd.f32 %v4664, %v4665
  %v4667 = vsel %vm1855, %v4614, 0.0
  %v4668 = vadd.f32 %v4666, %v4667
  %v4669 = vsel %vm1855, %v4615, 0.0
  %v4670 = vadd.f32 %v4668, %v4669
  %v4671 = vsel %vm1855, %v4616, 0.0
  %v4672 = vadd.f32 %v4670, %v4671
  %v4673 = vsel %vm1855, %v4617, 0.0
  %v4674 = vadd.f32 %v4672, %v4673
  %v4675 = vsel %vm1855, %v4618, 0.0
  %v4676 = vadd.f32 %v4674, %v4675
  %v4677 = vsel %vm1855, %v4619, 0.0
  %v4678 = vadd.f32 %v4676, %v4677
  %v4679 = vsel %vm1855, %v4620, 0.0
  %v4680 = vadd.f32 %v4678, %v4679
  %v4681 = vsel %vm1855, %v4621, 0.0
  %v4682 = vadd.f32 %v4680, %v4681
  %v4683 = vsel %vm1855, %v4622, 0.0
  %v4684 = vadd.f32 %v4682, %v4683
  %v4685 = vsel %vm1855, %v4623, 0.0
  %v4686 = vadd.f32 %v4684, %v4685
  %v4687 = vrot.slane %v4686, 4
  %v4688 = vadd.f32 %v4686, %v4687
  %v4689 = vrot.slane %v4688, 2
  %v4690 = vadd.f32 %v4688, %v4689
  %v4691 = vrot.slane %v4690, 1
  %v4692 = vadd.f32 %v4690, %v4691
  %v4693 = vmul.f32 %v4692, 0.00390625
  %v4694 = vld [vmem:[%s3 + $0x2] sm:$0x1]
  %v4695 = vadd.f32 %v4693, 1e-05
  %v4696 = vrsqrt.pop %v4695
  %v4697 = vmul.f32 %v4694, %v4696
  %v4698 = vlaneseq
  %v4699 = vshrl.u32 %v4698, 7
  %v4700 = vsub.s32 0, %v4699
  %v4701 = vrot.slane %v4697, %v4700
  %v4702 = vmul.f32 %v4560, %v4701
  %v4703 = vmul.f32 %v4561, %v4701
  %v4704 = vmul.f32 %v4562, %v4701
  %v4705 = vmul.f32 %v4563, %v4701
  %v4706 = vmul.f32 %v4564, %v4701
  %v4707 = vmul.f32 %v4565, %v4701
  %v4708 = vmul.f32 %v4566, %v4701
  %v4709 = vmul.f32 %v4567, %v4701
  %v4710 = vmul.f32 %v4568, %v4701
  %v4711 = vmul.f32 %v4569, %v4701
  %v4712 = vmul.f32 %v4570, %v4701
  %v4713 = vmul.f32 %v4571, %v4701
  %v4714 = vmul.f32 %v4572, %v4701
  %v4715 = vmul.f32 %v4573, %v4701
  %v4716 = vmul.f32 %v4574, %v4701
  %v4717 = vmul.f32 %v4575, %v4701
  %v4718 = vmul.f32 %v4576, %v4701
  %v4719 = vmul.f32 %v4577, %v4701
  %v4720 = vmul.f32 %v4578, %v4701
  %v4721 = vmul.f32 %v4579, %v4701
  %v4722 = vmul.f32 %v4580, %v4701
  %v4723 = vmul.f32 %v4581, %v4701
  %v4724 = vmul.f32 %v4582, %v4701
  %v4725 = vmul.f32 %v4583, %v4701
  %v4726 = vmul.f32 %v4584, %v4701
  %v4727 = vmul.f32 %v4585, %v4701
  %v4728 = vmul.f32 %v4586, %v4701
  %v4729 = vmul.f32 %v4587, %v4701
  %v4730 = vmul.f32 %v4588, %v4701
  %v4731 = vmul.f32 %v4589, %v4701
  %v4732 = vmul.f32 %v4590, %v4701
  %v4733 = vmul.f32 %v4591, %v4701
  %v4734 = vld [vmem:[%s3 + $0x3] sm:$0x1]
  %v4735 = vlaneseq
  %v4736 = vshrl.u32 %v4735, 7
  %v4737 = vsub.s32 0, %v4736
  %v4738 = vrot.slane %v4734, %v4737
  %v4739 = vadd.f32 %v4702, %v4738
  %v4740 = vadd.f32 %v4703, %v4738
  %v4741 = vadd.f32 %v4704, %v4738
  %v4742 = vadd.f32 %v4705, %v4738
  %v4743 = vadd.f32 %v4706, %v4738
  %v4744 = vadd.f32 %v4707, %v4738
  %v4745 = vadd.f32 %v4708, %v4738
  %v4746 = vadd.f32 %v4709, %v4738
  %v4747 = vadd.f32 %v4710, %v4738
  %v4748 = vadd.f32 %v4711, %v4738
  %v4749 = vadd.f32 %v4712, %v4738
  %v4750 = vadd.f32 %v4713, %v4738
  %v4751 = vadd.f32 %v4714, %v4738
  %v4752 = vadd.f32 %v4715, %v4738
  %v4753 = vadd.f32 %v4716, %v4738
  %v4754 = vadd.f32 %v4717, %v4738
  %v4755 = vadd.f32 %v4718, %v4738
  %v4756 = vadd.f32 %v4719, %v4738
  %v4757 = vadd.f32 %v4720, %v4738
  %v4758 = vadd.f32 %v4721, %v4738
  %v4759 = vadd.f32 %v4722, %v4738
  %v4760 = vadd.f32 %v4723, %v4738
  %v4761 = vadd.f32 %v4724, %v4738
  %v4762 = vadd.f32 %v4725, %v4738
  %v4763 = vadd.f32 %v4726, %v4738
  %v4764 = vadd.f32 %v4727, %v4738
  %v4765 = vadd.f32 %v4728, %v4738
  %v4766 = vadd.f32 %v4729, %v4738
  %v4767 = vadd.f32 %v4730, %v4738
  %v4768 = vadd.f32 %v4731, %v4738
  %v4769 = vadd.f32 %v4732, %v4738
  %v4770 = vadd.f32 %v4733, %v4738
  %4771 = vxpose.xlu0.b32.start [1/16] %v4739, 128
  %4772 = vxpose.xlu0.b32.cont [2/16] %v4740, 128
  %4773 = vxpose.xlu0.b32.cont [3/16] %v4741, 128
  %4774 = vxpose.xlu0.b32.cont [4/16] %v4742, 128
  %4775 = vxpose.xlu0.b32.cont [5/16] %v4743, 128
  %4776 = vxpose.xlu0.b32.cont [6/16] %v4744, 128
  %4777 = vxpose.xlu0.b32.cont [7/16] %v4745, 128
  %4778 = vxpose.xlu0.b32.cont [8/16] %v4746, 128
  %4779 = vxpose.xlu0.b32.cont [9/16] %v4747, 128
  %4780 = vxpose.xlu0.b32.cont [10/16] %v4748, 128
  %4781 = vxpose.xlu0.b32.cont [11/16] %v4749, 128
  %4782 = vxpose.xlu0.b32.cont [12/16] %v4750, 128
  %4783 = vxpose.xlu0.b32.cont [13/16] %v4751, 128
  %4784 = vxpose.xlu0.b32.cont [14/16] %v4752, 128
  %4785 = vxpose.xlu0.b32.cont [15/16] %v4753, 128
  %4786 = vxpose.xlu0.b32.end [16/16] %v4754, 128
  %v4787 = vpop.trf.xlu0
  %v4788 = vpop.trf.xlu0
  %v4789 = vpop.trf.xlu0
  %v4790 = vpop.trf.xlu0
  %v4791 = vpop.trf.xlu0
  %v4792 = vpop.trf.xlu0
  %v4793 = vpop.trf.xlu0
  %v4794 = vpop.trf.xlu0
  %v4795 = vpop.trf.xlu0
  %v4796 = vpop.trf.xlu0
  %v4797 = vpop.trf.xlu0
  %v4798 = vpop.trf.xlu0
  %v4799 = vpop.trf.xlu0
  %v4800 = vpop.trf.xlu0
  %v4801 = vpop.trf.xlu0
  %v4802 = vpop.trf.xlu0
  %4803 = vxpose.xlu0.b32.start [1/16] %v4755, 128
  %4804 = vxpose.xlu0.b32.cont [2/16] %v4756, 128
  %4805 = vxpose.xlu0.b32.cont [3/16] %v4757, 128
  %4806 = vxpose.xlu0.b32.cont [4/16] %v4758, 128
  %4807 = vxpose.xlu0.b32.cont [5/16] %v4759, 128
  %4808 = vxpose.xlu0.b32.cont [6/16] %v4760, 128
  %4809 = vxpose.xlu0.b32.cont [7/16] %v4761, 128
  %4810 = vxpose.xlu0.b32.cont [8/16] %v4762, 128
  %4811 = vxpose.xlu0.b32.cont [9/16] %v4763, 128
  %4812 = vxpose.xlu0.b32.cont [10/16] %v4764, 128
  %4813 = vxpose.xlu0.b32.cont [11/16] %v4765, 128
  %4814 = vxpose.xlu0.b32.cont [12/16] %v4766, 128
  %4815 = vxpose.xlu0.b32.cont [13/16] %v4767, 128
  %4816 = vxpose.xlu0.b32.cont [14/16] %v4768, 128
  %4817 = vxpose.xlu0.b32.cont [15/16] %v4769, 128
  %4818 = vxpose.xlu0.b32.end [16/16] %v4770, 128
  %v4819 = vpop.trf.xlu0
  %v4820 = vpop.trf.xlu0
  %v4821 = vpop.trf.xlu0
  %v4822 = vpop.trf.xlu0
  %v4823 = vpop.trf.xlu0
  %v4824 = vpop.trf.xlu0
  %v4825 = vpop.trf.xlu0
  %v4826 = vpop.trf.xlu0
  %v4827 = vpop.trf.xlu0
  %v4828 = vpop.trf.xlu0
  %v4829 = vpop.trf.xlu0
  %v4830 = vpop.trf.xlu0
  %v4831 = vpop.trf.xlu0
  %v4832 = vpop.trf.xlu0
  %v4833 = vpop.trf.xlu0
  %v4834 = vpop.trf.xlu0
  %4835 = vst [vmem:[%s4] sm:$0xff] %v4787
  %4836 = vst [vmem:[%s4 + $0x8] sm:$0xff] %v4819
  // Predicated region
  $region18: #{unet_block_forward.1} parent=0 // pred_check
    _
  $region19: #{unet_block_forward.1} parent=0 // pred_check_branch
    %4838 = sbr.rel (0) target = $region21
  $region20: #{unet_block_forward.1} parent=0 // pred_region
    _
  $region21: #{unet_block_forward.1} parent=0 // pred_fallthru
    _
  // Predicated region
  $region22: #{unet_block_forward.1} parent=0 // pred_check
    _
  $region23: #{unet_block_forward.1} parent=0 // pred_check_branch
    %4840 = sbr.rel (0) target = $region25
  $region24: #{unet_block_forward.1} parent=0 // pred_region
    _
  $region25: #{unet_block_forward.1} parent=0 // pred_fallthru
    _

</llo_original>
